<compile_context>
chip_gen: v6e
topology: v6e:2x2x1
jax: 0.10.0
libtpu: 0.0.40
codegen_flags: <defaults>
</compile_context>

<pallas_src>
import functools

import jax
import jax.numpy as jnp
import numpy as np
from jax.experimental import pallas as pl
from jax.experimental.pallas import tpu as pltpu


# -----------------------------------------------------------------------------
# Pallas kernel: HAM forward for Bt batch elements (one grid step).
# -----------------------------------------------------------------------------
def _ham_kernel(x_ref,
                wqkv_ref, bqkv_ref, wo_ref, bo_ref,
                g1_ref, be1_ref,
                wc1_ref, bc1_ref, wc2_ref, bc2_ref,
                w1_ref, b1_ref, w2_ref, b2_ref,
                wcca_ref, wccb_ref, bcc_ref,
                g2_ref, be2_ref,
                out_ref,
                *, num_heads, eps):
    f32 = jnp.float32
    bf16 = jnp.bfloat16

    Bt, S, D = x_ref.shape
    H = num_heads
    Dh = D // H
    R = Bt * S                                    # flattened rows (M of all matmuls)

    # (Bt, S, D) -> (Bt*S, D): last dim unchanged, S multiple of 8 -> layout no-op.
    x = x_ref[...].reshape(R, D)

    # -- hoisted broadcasts (loaded once, reused everywhere) --------------------
    bqkv = bqkv_ref[...]
    bo = bo_ref[...]
    g1, be1 = g1_ref[...], be1_ref[...]
    bc1, bc2 = bc1_ref[...], bc2_ref[...]
    b1, b2 = b1_ref[...], b2_ref[...]
    bcc = bcc_ref[...]
    g2, be2 = g2_ref[...], be2_ref[...]

    # Sequence-boundary masks for the flattened conv shift (rows at a batch
    # element's first/last position must receive zero-padded taps). Hoisted once.
    row = jax.lax.broadcasted_iota(jnp.int32, (R, D), 0)
    pos = row % S
    not_first = pos != 0
    not_last = pos != (S - 1)

    def layer_norm(z, g, b):
        mu = jnp.mean(z, axis=-1, keepdims=True)
        zc = z - mu
        var = jnp.mean(zc * zc, axis=-1, keepdims=True)
        return zc * jax.lax.rsqrt(var + eps) * g + b

    def conv3(a_bf, w3_ref):
        # Conv1d(kernel=3, padding=1) along the sequence axis on the flattened
        # (Bt*S, Cin) slab, as shift-AFTER-matmul:
        #   out[s] = P0[s-1] + P1[s] + P2[s+1]   with zero rows at seq boundaries.
        # a_bf: (R, Cin) bf16 (caller casts once); w3_ref: (3, Cin, D) bf16.
        p0 = jnp.dot(a_bf, w3_ref[0], preferred_element_type=f32)
        p1 = jnp.dot(a_bf, w3_ref[1], preferred_element_type=f32)
        p2 = jnp.dot(a_bf, w3_ref[2], preferred_element_type=f32)
        left = jnp.where(not_first, pltpu.roll(p0, shift=1, axis=0), 0.0)
        right = jnp.where(not_last, pltpu.roll(p2, shift=R - 1, axis=0), 0.0)
        return left + p1 + right

    # --- multi-head self attention --------------------------------------------
    # One packed QKV matmul (N = 3D) for all heads; the 1/sqrt(Dh) scale is
    # pre-folded into the Q columns/bias.  Per-head q/k/v are static lane slices.
    x_bf = x.astype(bf16)
    qkv = jnp.dot(x_bf, wqkv_ref[...], preferred_element_type=f32) + bqkv  # (R, 3D)

    attn = None
    for h in range(H):                           # static loop, tiny H
        # TODO(synk): convert to lax.fori_loop if H grows (bounds vreg live ranges).
        q_h = qkv[:, h * Dh:(h + 1) * Dh].astype(bf16)
        k_h = qkv[:, D + h * Dh:D + (h + 1) * Dh].astype(bf16)
        v_h = qkv[:, 2 * D + h * Dh:2 * D + (h + 1) * Dh].astype(bf16)
        ctx_rows = []
        for b in range(Bt):                      # attention is per batch element
            q_b = q_h[b * S:(b + 1) * S]
            k_b = k_h[b * S:(b + 1) * S]
            v_b = v_h[b * S:(b + 1) * S]
            s = jnp.einsum("qe,ke->qk", q_b, k_b,
                           preferred_element_type=f32)            # (S, S) f32
            s = s - jnp.max(s, axis=-1, keepdims=True)
            p = jnp.exp(s)
            denom = jnp.sum(p, axis=-1, keepdims=True)
            p = p * pl.reciprocal(denom, approx=True)              # EUP, not VALU div
            ctx_rows.append(jnp.dot(p.astype(bf16), v_b,
                                    preferred_element_type=f32))   # (S, Dh)
        ctx_h = jnp.concatenate(ctx_rows, axis=0).astype(bf16)     # (R, Dh)
        proj = jnp.dot(ctx_h, wo_ref[h], preferred_element_type=f32)  # (R, D)
        attn = proj if attn is None else attn + proj               # accumulate heads
    attn = attn + bo

    # --- residual + LayerNorm 1 ------------------------------------------------
    y = layer_norm(x + attn, g1, be1)                              # (R, D) f32
    y_bf = y.astype(bf16)                                          # cast once

    # --- conv branch: conv1 -> gelu -> conv2, residual on y ---------------------
    c1 = jax.nn.gelu(conv3(y_bf, wc1_ref) + bc1, approximate=True)
    c2 = conv3(c1.astype(bf16), wc2_ref) + bc2
    src_cnn = y + c2

    # --- feed-forward branch: linear1 -> gelu -> linear2 ------------------------
    h1 = jax.nn.gelu(jnp.dot(y_bf, w1_ref[...],
                             preferred_element_type=f32) + b1, approximate=True)
    ffn = jnp.dot(h1.astype(bf16), w2_ref[...], preferred_element_type=f32) + b2

    # --- conv_combined over channel-concat([src_cnn, ffn]) ----------------------
    # Two half-weight convolutions summed (no lane concatenation).
    comb = conv3(src_cnn.astype(bf16), wcca_ref) + conv3(ffn.astype(bf16), wccb_ref) + bcc

    # --- residual (on y) + LayerNorm 2 ------------------------------------------
    out = layer_norm(y + comb, g2, be2)
    out_ref[...] = out.reshape(Bt, S, D).astype(out_ref.dtype)


# -----------------------------------------------------------------------------
# Wrapper
# -----------------------------------------------------------------------------
def ham_forward_pallas(src, kparams, num_heads, *, block_batch=2, eps=1e-5):
    """src: (B, S, D) float32.  kparams: packed tuple of 19 arrays (_pack_params)."""
    (wqkv, bqkv, wo, bo, g1, be1, wc1, bc1, wc2, bc2,
     w1, b1, w2, b2, wcca, wccb, bcc, g2, be2) = kparams
    B, S, D = src.shape
    dff = w1.shape[1]
    Bt = min(block_batch, B)
    assert B % Bt == 0, "batch must be divisible by the batch block"

    kernel = functools.partial(_ham_kernel, num_heads=num_heads, eps=eps)

    in_specs = [pl.BlockSpec((Bt, S, D), lambda b: (b, 0, 0))]
    for p in kparams:
        # Grid-invariant full-array weight blocks (index_map never changes -> no
        # re-DMA across grid steps).
        # TODO(synk): pipeline_mode=pl.Buffered(1) + 64 MiB VMEM re-budget for v7x
        #             once weights are large enough to matter (moot at demo sizes).
        in_specs.append(pl.BlockSpec(p.shape, lambda b, n=p.ndim: (0,) * n))

    flops = B * (32 * S * D * D + 4 * S * S * D + 4 * S * D * dff)
    transcendentals = B * (num_heads * S * S + S * (D + dff) + num_heads * S + 2 * S)
    bytes_accessed = int(src.nbytes + src.nbytes + sum(int(p.nbytes) for p in kparams))

    return pl.pallas_call(
        kernel,
        out_shape=jax.ShapeDtypeStruct((B, S, D), src.dtype),
        grid=(B // Bt,),
        in_specs=in_specs,
        out_specs=pl.BlockSpec((Bt, S, D), lambda b: (b, 0, 0)),
        compiler_params=pltpu.CompilerParams(
            dimension_semantics=("parallel",),
            # 48 MiB is safe on every generation at these sizes; raise toward
            # ~96 MiB on v5e/v6e (128 MiB physical) when scaling S/D, keep lower
            # on v7x (64 MiB physical).
            vmem_limit_bytes=48 * 1024 * 1024),
        cost_estimate=pl.CostEstimate(flops=int(flops),
                                      transcendentals=int(transcendentals),
                                      bytes_accessed=bytes_accessed),
    )(src, *kparams)


# -----------------------------------------------------------------------------
# Pure-JAX reference (mirrors the kernel's mixed precision: bf16 MXU in, f32 acc;
# scale applied to the scores as in PyTorch).
# -----------------------------------------------------------------------------
def _ham_ref(x, params, num_heads, eps=1e-5):
    (wq, wk, wv, bq, bk, bv, wo, bo, g1, be1, wc1, bc1, wc2, bc2,
     w1, b1, w2, b2, wcca, wccb, bcc, g2, be2) = params
    bf, f32 = jnp.bfloat16, jnp.float32
    B, S, D = x.shape
    Dh = D // num_heads
    scale = 1.0 / (Dh ** 0.5)

    def ln(z, g, b):
        mu = jnp.mean(z, -1, keepdims=True)
        zc = z - mu
        var = jnp.mean(zc * zc, -1, keepdims=True)
        return zc * jax.lax.rsqrt(var + eps) * g + b

    def conv3(a, w3):
        ap = jnp.pad(a, ((0, 0), (1, 1), (0, 0)))
        out = 0.0
        for t in range(3):
            out = out + jnp.einsum("bsd,de->bse", ap[:, t:t + S].astype(bf), w3[t],
                                   preferred_element_type=f32)
        return out

    xb = x.astype(bf)
    qh = jnp.einsum("bsd,hde->bhse", xb, wq, preferred_element_type=f32) + bq[None]
    kh = jnp.einsum("bsd,hde->bhse", xb, wk, preferred_element_type=f32) + bk[None]
    vh = jnp.einsum("bsd,hde->bhse", xb, wv, preferred_element_type=f32) + bv[None]
    s = jnp.einsum("bhqe,bhke->bhqk", qh.astype(bf), kh.astype(bf),
                   preferred_element_type=f32) * scale
    p = jax.nn.softmax(s, axis=-1)
    ctx = jnp.einsum("bhqk,bhke->bhqe", p.astype(bf), vh.astype(bf),
                     preferred_element_type=f32)
    attn = jnp.einsum("bhse,hed->bsd", ctx.astype(bf), wo,
                      preferred_element_type=f32) + bo

    y = ln(x + attn, g1, be1)

    c1 = jax.nn.gelu(conv3(y, wc1) + bc1, approximate=True)
    c2 = conv3(c1, wc2) + bc2
    src_cnn = y + c2

    h1 = jax.nn.gelu(jnp.einsum("bsd,de->bse", y.astype(bf), w1,
                                preferred_element_type=f32) + b1, approximate=True)
    ffn = jnp.einsum("bse,ed->bsd", h1.astype(bf), w2,
                     preferred_element_type=f32) + b2

    comb = conv3(src_cnn, wcca) + conv3(ffn, wccb) + bcc
    return ln(y + comb, g2, be2)


# -----------------------------------------------------------------------------
# Deterministic synthetic parameters (math layout: activations @ W + b).
# Attention weights are per head on a leading axis; conv weights are stored per
# tap as (3, Cin, Cout); conv_combined is stored as its two input halves.
# Weights are bf16 (MXU inputs), biases / LN affine are f32.
# -----------------------------------------------------------------------------
def _init_params(key, d_model, num_heads, dim_ff):
    H = num_heads
    Dh = d_model // H
    keys = iter(jax.random.split(key, 24))
    std = 0.05

    def w(shape):
        return (std * jax.random.normal(next(keys), shape, jnp.float32)).astype(jnp.bfloat16)

    def b(shape):
        return std * jax.random.normal(next(keys), shape, jnp.float32)

    wq, wk, wv = w((H, d_model, Dh)), w((H, d_model, Dh)), w((H, d_model, Dh))
    bq, bk, bv = b((H, 1, Dh)), b((H, 1, Dh)), b((H, 1, Dh))
    wo, bo = w((H, Dh, d_model)), b((1, d_model))
    g1 = jnp.ones((1, d_model), jnp.float32)
    be1 = jnp.zeros((1, d_model), jnp.float32)
    wc1, bc1 = w((3, d_model, d_model)), b((1, d_model))
    wc2, bc2 = w((3, d_model, d_model)), b((1, d_model))
    w1, b1 = w((d_model, dim_ff)), b((1, dim_ff))
    w2, b2 = w((dim_ff, d_model)), b((1, d_model))
    wcca, wccb, bcc = w((3, d_model, d_model)), w((3, d_model, d_model)), b((1, d_model))
    g2 = jnp.ones((1, d_model), jnp.float32)
    be2 = jnp.zeros((1, d_model), jnp.float32)
    return (wq, wk, wv, bq, bk, bv, wo, bo, g1, be1, wc1, bc1, wc2, bc2,
            w1, b1, w2, b2, wcca, wccb, bcc, g2, be2)


# -----------------------------------------------------------------------------
# One-time host-side packing for the kernel:
#   * Q/K/V per-head weights -> one (D, 3*H*Dh) bf16 matrix, heads along lanes,
#     with the 1/sqrt(Dh) softmax scale folded into the Q columns and Q bias.
# -----------------------------------------------------------------------------
def _pack_params(params, num_heads):
    (wq, wk, wv, bq, bk, bv, wo, bo, g1, be1, wc1, bc1, wc2, bc2,
     w1, b1, w2, b2, wcca, wccb, bcc, g2, be2) = params
    H = num_heads
    D, Dh = wq.shape[1], wq.shape[2]
    scale = 1.0 / (Dh ** 0.5)

    def flat_w(w, s=1.0):
        # (H, D, Dh) -> (D, H*Dh), optional scale folded in (f32 math, bf16 out).
        return (jnp.transpose(w.astype(jnp.float32) * s, (1, 0, 2))
                .reshape(D, H * Dh).astype(jnp.bfloat16))

    def flat_b(b, s=1.0):
        # (H, 1, Dh) -> (1, H*Dh)
        return (b.astype(jnp.float32) * s).reshape(1, H * Dh)

    wqkv = jnp.concatenate([flat_w(wq, scale), flat_w(wk), flat_w(wv)], axis=1)
    bqkv = jnp.concatenate([flat_b(bq, scale), flat_b(bk), flat_b(bv)], axis=1)
    return (wqkv, bqkv, wo, bo, g1, be1, wc1, bc1, wc2, bc2,
            w1, b1, w2, b2, wcca, wccb, bcc, g2, be2)


if __name__ == "__main__":
    # Small but lane-friendly sizes: D and DFF multiples of 128, S multiple of 8.
    # B=4 with Bt=2 gives two "parallel" grid steps (both v7x TCs usable) while
    # each step runs M = Bt*S = 32-row matmuls.
    B, S, D = 4, 16, 128          # batch, seq, d_model
    H, DFF = 4, 256               # heads (head_dim=32), feed-forward dim
    Bt = 2                        # batch elements per grid step

    key = jax.random.PRNGKey(0)
    k_src, k_par = jax.random.split(key)
    src = jax.random.normal(k_src, (B, S, D), jnp.float32)
    params = _init_params(k_par, D, H, DFF)
    kparams = _pack_params(params, H)          # done once, outside jit

    fwd = jax.jit(functools.partial(ham_forward_pallas, num_heads=H, block_batch=Bt))
    out = jax.block_until_ready(fwd(src, kparams))

    ref = _ham_ref(src, params, num_heads=H)
    # Tolerance covers the hardware approximate reciprocal in the softmax and the
    # bf16 re-rounding of the scale-folded Q weights (mathematically equivalent to
    # scaling the scores); all other mixed-precision casts are mirrored exactly.
    np.testing.assert_allclose(np.asarray(out), np.asarray(ref), rtol=2e-2, atol=2e-2)
    print("KERNEL_OK")
</pallas_src>

<mosaic_0001>
module attributes {stable_mosaic.version = 11 : i64} {
  func.func @_ham_kernel(%arg0: i32, %arg1: memref<2x16x128xf32, #tpu.memory_space<vmem>>, %arg2: memref<128x384xbf16, #tpu.memory_space<vmem>>, %arg3: memref<1x384xf32, #tpu.memory_space<vmem>>, %arg4: memref<4x32x128xbf16, #tpu.memory_space<vmem>>, %arg5: memref<1x128xf32, #tpu.memory_space<vmem>>, %arg6: memref<1x128xf32, #tpu.memory_space<vmem>>, %arg7: memref<1x128xf32, #tpu.memory_space<vmem>>, %arg8: memref<3x128x128xbf16, #tpu.memory_space<vmem>>, %arg9: memref<1x128xf32, #tpu.memory_space<vmem>>, %arg10: memref<3x128x128xbf16, #tpu.memory_space<vmem>>, %arg11: memref<1x128xf32, #tpu.memory_space<vmem>>, %arg12: memref<128x256xbf16, #tpu.memory_space<vmem>>, %arg13: memref<1x256xf32, #tpu.memory_space<vmem>>, %arg14: memref<256x128xbf16, #tpu.memory_space<vmem>>, %arg15: memref<1x128xf32, #tpu.memory_space<vmem>>, %arg16: memref<3x128x128xbf16, #tpu.memory_space<vmem>>, %arg17: memref<3x128x128xbf16, #tpu.memory_space<vmem>>, %arg18: memref<1x128xf32, #tpu.memory_space<vmem>>, %arg19: memref<1x128xf32, #tpu.memory_space<vmem>>, %arg20: memref<1x128xf32, #tpu.memory_space<vmem>>, %arg21: memref<2x16x128xf32, #tpu.memory_space<vmem>>) attributes {dimension_semantics = [#tpu.dimension_semantics<parallel>], iteration_bounds = array<i64: 2>, scalar_prefetch = 0 : i64, scratch_operands = 0 : i64, tpu.core_type = #tpu.core_type<tc>, window_params = [{transform_indices = @transform_0, window_bounds = array<i64: 2, 16, 128>}, {pipeline_mode = #tpu.pipeline_mode<synchronous>, transform_indices = @transform_1, window_bounds = array<i64: 128, 384>}, {pipeline_mode = #tpu.pipeline_mode<synchronous>, transform_indices = @transform_2, window_bounds = array<i64: 1, 384>}, {pipeline_mode = #tpu.pipeline_mode<synchronous>, transform_indices = @transform_3, window_bounds = array<i64: 4, 32, 128>}, {pipeline_mode = #tpu.pipeline_mode<synchronous>, transform_indices = @transform_4, window_bounds = array<i64: 1, 128>}, {pipeline_mode = #tpu.pipeline_mode<synchronous>, transform_indices = @transform_5, window_bounds = array<i64: 1, 128>}, {pipeline_mode = #tpu.pipeline_mode<synchronous>, transform_indices = @transform_6, window_bounds = array<i64: 1, 128>}, {pipeline_mode = #tpu.pipeline_mode<synchronous>, transform_indices = @transform_7, window_bounds = array<i64: 3, 128, 128>}, {pipeline_mode = #tpu.pipeline_mode<synchronous>, transform_indices = @transform_8, window_bounds = array<i64: 1, 128>}, {pipeline_mode = #tpu.pipeline_mode<synchronous>, transform_indices = @transform_9, window_bounds = array<i64: 3, 128, 128>}, {pipeline_mode = #tpu.pipeline_mode<synchronous>, transform_indices = @transform_10, window_bounds = array<i64: 1, 128>}, {pipeline_mode = #tpu.pipeline_mode<synchronous>, transform_indices = @transform_11, window_bounds = array<i64: 128, 256>}, {pipeline_mode = #tpu.pipeline_mode<synchronous>, transform_indices = @transform_12, window_bounds = array<i64: 1, 256>}, {pipeline_mode = #tpu.pipeline_mode<synchronous>, transform_indices = @transform_13, window_bounds = array<i64: 256, 128>}, {pipeline_mode = #tpu.pipeline_mode<synchronous>, transform_indices = @transform_14, window_bounds = array<i64: 1, 128>}, {pipeline_mode = #tpu.pipeline_mode<synchronous>, transform_indices = @transform_15, window_bounds = array<i64: 3, 128, 128>}, {pipeline_mode = #tpu.pipeline_mode<synchronous>, transform_indices = @transform_16, window_bounds = array<i64: 3, 128, 128>}, {pipeline_mode = #tpu.pipeline_mode<synchronous>, transform_indices = @transform_17, window_bounds = array<i64: 1, 128>}, {pipeline_mode = #tpu.pipeline_mode<synchronous>, transform_indices = @transform_18, window_bounds = array<i64: 1, 128>}, {pipeline_mode = #tpu.pipeline_mode<synchronous>, transform_indices = @transform_19, window_bounds = array<i64: 1, 128>}, {transform_indices = @transform_20, window_bounds = array<i64: 2, 16, 128>}]} {
    %c0 = arith.constant 0 : index
    %c0_0 = arith.constant 0 : index
    %c0_1 = arith.constant 0 : index
    %0 = vector.load %arg1[%c0, %c0_0, %c0_1] : memref<2x16x128xf32, #tpu.memory_space<vmem>>, vector<2x16x128xf32>
    %1 = vector.shape_cast %0 : vector<2x16x128xf32> to vector<32x128xf32>
    %c0_2 = arith.constant 0 : index
    %c0_3 = arith.constant 0 : index
    %2 = vector.load %arg3[%c0_2, %c0_3] : memref<1x384xf32, #tpu.memory_space<vmem>>, vector<1x384xf32>
    %c0_4 = arith.constant 0 : index
    %c0_5 = arith.constant 0 : index
    %3 = vector.load %arg5[%c0_4, %c0_5] : memref<1x128xf32, #tpu.memory_space<vmem>>, vector<1x128xf32>
    %c0_6 = arith.constant 0 : index
    %c0_7 = arith.constant 0 : index
    %4 = vector.load %arg6[%c0_6, %c0_7] : memref<1x128xf32, #tpu.memory_space<vmem>>, vector<1x128xf32>
    %c0_8 = arith.constant 0 : index
    %c0_9 = arith.constant 0 : index
    %5 = vector.load %arg7[%c0_8, %c0_9] : memref<1x128xf32, #tpu.memory_space<vmem>>, vector<1x128xf32>
    %c0_10 = arith.constant 0 : index
    %c0_11 = arith.constant 0 : index
    %6 = vector.load %arg9[%c0_10, %c0_11] : memref<1x128xf32, #tpu.memory_space<vmem>>, vector<1x128xf32>
    %c0_12 = arith.constant 0 : index
    %c0_13 = arith.constant 0 : index
    %7 = vector.load %arg11[%c0_12, %c0_13] : memref<1x128xf32, #tpu.memory_space<vmem>>, vector<1x128xf32>
    %c0_14 = arith.constant 0 : index
    %c0_15 = arith.constant 0 : index
    %8 = vector.load %arg13[%c0_14, %c0_15] : memref<1x256xf32, #tpu.memory_space<vmem>>, vector<1x256xf32>
    %c0_16 = arith.constant 0 : index
    %c0_17 = arith.constant 0 : index
    %9 = vector.load %arg15[%c0_16, %c0_17] : memref<1x128xf32, #tpu.memory_space<vmem>>, vector<1x128xf32>
    %c0_18 = arith.constant 0 : index
    %c0_19 = arith.constant 0 : index
    %10 = vector.load %arg18[%c0_18, %c0_19] : memref<1x128xf32, #tpu.memory_space<vmem>>, vector<1x128xf32>
    %c0_20 = arith.constant 0 : index
    %c0_21 = arith.constant 0 : index
    %11 = vector.load %arg19[%c0_20, %c0_21] : memref<1x128xf32, #tpu.memory_space<vmem>>, vector<1x128xf32>
    %c0_22 = arith.constant 0 : index
    %c0_23 = arith.constant 0 : index
    %12 = vector.load %arg20[%c0_22, %c0_23] : memref<1x128xf32, #tpu.memory_space<vmem>>, vector<1x128xf32>
    %13 = tpu.iota {dimensions = array<i32: 0>} : vector<32x128xi32>
    %c16_i32 = arith.constant 16 : i32
    %c0_i32 = arith.constant 0 : i32
    %14 = arith.cmpi eq, %c16_i32, %c0_i32 : i32
    %c1_i32 = arith.constant 1 : i32
    %15 = arith.select %14, %c1_i32, %c16_i32 : i32
    %16 = vector.broadcast %15 : i32 to vector<32x128xi32>
    %17 = arith.remsi %13, %16 : vector<32x128xi32>
    %c0_i32_24 = arith.constant 0 : i32
    %18 = vector.broadcast %c0_i32_24 : i32 to vector<32x128xi32>
    %19 = arith.cmpi ne, %17, %18 : vector<32x128xi32>
    %c0_i32_25 = arith.constant 0 : i32
    %20 = vector.broadcast %c0_i32_25 : i32 to vector<32x128xi32>
    %21 = arith.cmpi slt, %17, %20 : vector<32x128xi32>
    %c0_i32_26 = arith.constant 0 : i32
    %22 = arith.cmpi slt, %15, %c0_i32_26 : i32
    %23 = vector.broadcast %22 : i1 to vector<32x128xi1>
    %24 = vector.broadcast %23 : vector<32x128xi1> to vector<32x128xi1>
    %25 = arith.xori %21, %24 : vector<32x128xi1>
    %26 = arith.andi %25, %19 : vector<32x128xi1>
    %27 = vector.broadcast %15 : i32 to vector<32x128xi32>
    %28 = arith.addi %17, %27 : vector<32x128xi32>
    %29 = arith.select %26, %28, %17 : vector<32x128xi1>, vector<32x128xi32>
    %c0_i32_27 = arith.constant 0 : i32
    %30 = vector.broadcast %c0_i32_27 : i32 to vector<32x128xi32>
    %31 = arith.cmpi ne, %29, %30 : vector<32x128xi32>
    %c15_i32 = arith.constant 15 : i32
    %32 = vector.broadcast %c15_i32 : i32 to vector<32x128xi32>
    %33 = arith.cmpi ne, %29, %32 : vector<32x128xi32>
    %34 = arith.truncf %1 : vector<32x128xf32> to vector<32x128xbf16>
    %c0_28 = arith.constant 0 : index
    %c0_29 = arith.constant 0 : index
    %35 = vector.load %arg2[%c0_28, %c0_29] : memref<128x384xbf16, #tpu.memory_space<vmem>>, vector<128x384xbf16>
    %cst = arith.constant dense<0.000000e+00> : vector<32x384xf32>
    %36 = tpu.matmul %34, %35, %cst {dimension_numbers = #tpu.dot_dimension_numbers<[1], [0], [0], [1], [0, 0, 1, 1], [], []>} : vector<32x128xbf16>, vector<128x384xbf16>, vector<32x384xf32> -> vector<32x384xf32>
    %37 = vector.broadcast %2 : vector<1x384xf32> to vector<32x384xf32>
    %38 = arith.addf %36, %37 : vector<32x384xf32>
    %39 = vector.extract_strided_slice %38 {offsets = [0, 0], sizes = [32, 32], strides = [1, 1]} : vector<32x384xf32> to vector<32x32xf32>
    %40 = arith.truncf %39 : vector<32x32xf32> to vector<32x32xbf16>
    %41 = vector.extract_strided_slice %38 {offsets = [0, 128], sizes = [32, 32], strides = [1, 1]} : vector<32x384xf32> to vector<32x32xf32>
    %42 = arith.truncf %41 : vector<32x32xf32> to vector<32x32xbf16>
    %43 = vector.extract_strided_slice %38 {offsets = [0, 256], sizes = [32, 32], strides = [1, 1]} : vector<32x384xf32> to vector<32x32xf32>
    %44 = arith.truncf %43 : vector<32x32xf32> to vector<32x32xbf16>
    %45 = vector.extract_strided_slice %40 {offsets = [0, 0], sizes = [16, 32], strides = [1, 1]} : vector<32x32xbf16> to vector<16x32xbf16>
    %46 = vector.extract_strided_slice %42 {offsets = [0, 0], sizes = [16, 32], strides = [1, 1]} : vector<32x32xbf16> to vector<16x32xbf16>
    %47 = vector.extract_strided_slice %44 {offsets = [0, 0], sizes = [16, 32], strides = [1, 1]} : vector<32x32xbf16> to vector<16x32xbf16>
    "tpu.trace_start"() <{level = 10 : i32, message = "qe,ke->qk"}> : () -> ()
    %cst_30 = arith.constant dense<0.000000e+00> : vector<16x16xf32>
    %48 = tpu.matmul %45, %46, %cst_30 {dimension_numbers = #tpu.dot_dimension_numbers<[1], [1], [0], [0], [0, 0, 1, 0], [], []>} : vector<16x32xbf16>, vector<16x32xbf16>, vector<16x16xf32> -> vector<16x16xf32>
    "tpu.trace_stop"() : () -> ()
    %cst_31 = arith.constant dense<0xFF800000> : vector<16xf32>
    %49 = vector.multi_reduction <maximumf>, %48, %cst_31 [1] : vector<16x16xf32> to vector<16xf32>
    %50 = vector.shape_cast %49 : vector<16xf32> to vector<16x1xf32>
    %51 = vector.broadcast %50 : vector<16x1xf32> to vector<16x16xf32>
    %52 = arith.subf %48, %51 : vector<16x16xf32>
    %53 = math.exp %52 : vector<16x16xf32>
    %cst_32 = arith.constant dense<0.000000e+00> : vector<16xf32>
    %54 = vector.multi_reduction <add>, %53, %cst_32 [1] : vector<16x16xf32> to vector<16xf32>
    %55 = vector.shape_cast %54 : vector<16xf32> to vector<16x1xf32>
    %56 = tpu.reciprocal %55 {approx = true} : vector<16x1xf32> -> vector<16x1xf32>
    %57 = vector.broadcast %56 : vector<16x1xf32> to vector<16x16xf32>
    %58 = arith.mulf %53, %57 : vector<16x16xf32>
    %59 = arith.truncf %58 : vector<16x16xf32> to vector<16x16xbf16>
    %cst_33 = arith.constant dense<0.000000e+00> : vector<16x32xf32>
    %60 = tpu.matmul %59, %47, %cst_33 {dimension_numbers = #tpu.dot_dimension_numbers<[1], [0], [0], [1], [0, 0, 1, 1], [], []>} : vector<16x16xbf16>, vector<16x32xbf16>, vector<16x32xf32> -> vector<16x32xf32>
    %61 = vector.extract_strided_slice %40 {offsets = [16, 0], sizes = [16, 32], strides = [1, 1]} : vector<32x32xbf16> to vector<16x32xbf16>
    %62 = vector.extract_strided_slice %42 {offsets = [16, 0], sizes = [16, 32], strides = [1, 1]} : vector<32x32xbf16> to vector<16x32xbf16>
    %63 = vector.extract_strided_slice %44 {offsets = [16, 0], sizes = [16, 32], strides = [1, 1]} : vector<32x32xbf16> to vector<16x32xbf16>
    "tpu.trace_start"() <{level = 10 : i32, message = "qe,ke->qk"}> : () -> ()
    %cst_34 = arith.constant dense<0.000000e+00> : vector<16x16xf32>
    %64 = tpu.matmul %61, %62, %cst_34 {dimension_numbers = #tpu.dot_dimension_numbers<[1], [1], [0], [0], [0, 0, 1, 0], [], []>} : vector<16x32xbf16>, vector<16x32xbf16>, vector<16x16xf32> -> vector<16x16xf32>
    "tpu.trace_stop"() : () -> ()
    %cst_35 = arith.constant dense<0xFF800000> : vector<16xf32>
    %65 = vector.multi_reduction <maximumf>, %64, %cst_35 [1] : vector<16x16xf32> to vector<16xf32>
    %66 = vector.shape_cast %65 : vector<16xf32> to vector<16x1xf32>
    %67 = vector.broadcast %66 : vector<16x1xf32> to vector<16x16xf32>
    %68 = arith.subf %64, %67 : vector<16x16xf32>
    %69 = math.exp %68 : vector<16x16xf32>
    %cst_36 = arith.constant dense<0.000000e+00> : vector<16xf32>
    %70 = vector.multi_reduction <add>, %69, %cst_36 [1] : vector<16x16xf32> to vector<16xf32>
    %71 = vector.shape_cast %70 : vector<16xf32> to vector<16x1xf32>
    %72 = tpu.reciprocal %71 {approx = true} : vector<16x1xf32> -> vector<16x1xf32>
    %73 = vector.broadcast %72 : vector<16x1xf32> to vector<16x16xf32>
    %74 = arith.mulf %69, %73 : vector<16x16xf32>
    %75 = arith.truncf %74 : vector<16x16xf32> to vector<16x16xbf16>
    %cst_37 = arith.constant dense<0.000000e+00> : vector<16x32xf32>
    %76 = tpu.matmul %75, %63, %cst_37 {dimension_numbers = #tpu.dot_dimension_numbers<[1], [0], [0], [1], [0, 0, 1, 1], [], []>} : vector<16x16xbf16>, vector<16x32xbf16>, vector<16x32xf32> -> vector<16x32xf32>
    %77 = tpu.concatenate %60, %76 in 0 : vector<16x32xf32>, vector<16x32xf32> -> vector<32x32xf32>
    %78 = arith.truncf %77 : vector<32x32xf32> to vector<32x32xbf16>
    %c0_38 = arith.constant 0 : index
    %c0_39 = arith.constant 0 : index
    %c0_40 = arith.constant 0 : index
    %79 = vector.load %arg4[%c0_38, %c0_39, %c0_40] : memref<4x32x128xbf16, #tpu.memory_space<vmem>>, vector<1x32x128xbf16>
    %80 = vector.shape_cast %79 : vector<1x32x128xbf16> to vector<32x128xbf16>
    %cst_41 = arith.constant dense<0.000000e+00> : vector<32x128xf32>
    %81 = tpu.matmul %78, %80, %cst_41 {dimension_numbers = #tpu.dot_dimension_numbers<[1], [0], [0], [1], [0, 0, 1, 1], [], []>} : vector<32x32xbf16>, vector<32x128xbf16>, vector<32x128xf32> -> vector<32x128xf32>
    %82 = vector.extract_strided_slice %38 {offsets = [0, 32], sizes = [32, 32], strides = [1, 1]} : vector<32x384xf32> to vector<32x32xf32>
    %83 = arith.truncf %82 : vector<32x32xf32> to vector<32x32xbf16>
    %84 = vector.extract_strided_slice %38 {offsets = [0, 160], sizes = [32, 32], strides = [1, 1]} : vector<32x384xf32> to vector<32x32xf32>
    %85 = arith.truncf %84 : vector<32x32xf32> to vector<32x32xbf16>
    %86 = vector.extract_strided_slice %38 {offsets = [0, 288], sizes = [32, 32], strides = [1, 1]} : vector<32x384xf32> to vector<32x32xf32>
    %87 = arith.truncf %86 : vector<32x32xf32> to vector<32x32xbf16>
    %88 = vector.extract_strided_slice %83 {offsets = [0, 0], sizes = [16, 32], strides = [1, 1]} : vector<32x32xbf16> to vector<16x32xbf16>
    %89 = vector.extract_strided_slice %85 {offsets = [0, 0], sizes = [16, 32], strides = [1, 1]} : vector<32x32xbf16> to vector<16x32xbf16>
    %90 = vector.extract_strided_slice %87 {offsets = [0, 0], sizes = [16, 32], strides = [1, 1]} : vector<32x32xbf16> to vector<16x32xbf16>
    "tpu.trace_start"() <{level = 10 : i32, message = "qe,ke->qk"}> : () -> ()
    %cst_42 = arith.constant dense<0.000000e+00> : vector<16x16xf32>
    %91 = tpu.matmul %88, %89, %cst_42 {dimension_numbers = #tpu.dot_dimension_numbers<[1], [1], [0], [0], [0, 0, 1, 0], [], []>} : vector<16x32xbf16>, vector<16x32xbf16>, vector<16x16xf32> -> vector<16x16xf32>
    "tpu.trace_stop"() : () -> ()
    %cst_43 = arith.constant dense<0xFF800000> : vector<16xf32>
    %92 = vector.multi_reduction <maximumf>, %91, %cst_43 [1] : vector<16x16xf32> to vector<16xf32>
    %93 = vector.shape_cast %92 : vector<16xf32> to vector<16x1xf32>
    %94 = vector.broadcast %93 : vector<16x1xf32> to vector<16x16xf32>
    %95 = arith.subf %91, %94 : vector<16x16xf32>
    %96 = math.exp %95 : vector<16x16xf32>
    %cst_44 = arith.constant dense<0.000000e+00> : vector<16xf32>
    %97 = vector.multi_reduction <add>, %96, %cst_44 [1] : vector<16x16xf32> to vector<16xf32>
    %98 = vector.shape_cast %97 : vector<16xf32> to vector<16x1xf32>
    %99 = tpu.reciprocal %98 {approx = true} : vector<16x1xf32> -> vector<16x1xf32>
    %100 = vector.broadcast %99 : vector<16x1xf32> to vector<16x16xf32>
    %101 = arith.mulf %96, %100 : vector<16x16xf32>
    %102 = arith.truncf %101 : vector<16x16xf32> to vector<16x16xbf16>
    %cst_45 = arith.constant dense<0.000000e+00> : vector<16x32xf32>
    %103 = tpu.matmul %102, %90, %cst_45 {dimension_numbers = #tpu.dot_dimension_numbers<[1], [0], [0], [1], [0, 0, 1, 1], [], []>} : vector<16x16xbf16>, vector<16x32xbf16>, vector<16x32xf32> -> vector<16x32xf32>
    %104 = vector.extract_strided_slice %83 {offsets = [16, 0], sizes = [16, 32], strides = [1, 1]} : vector<32x32xbf16> to vector<16x32xbf16>
    %105 = vector.extract_strided_slice %85 {offsets = [16, 0], sizes = [16, 32], strides = [1, 1]} : vector<32x32xbf16> to vector<16x32xbf16>
    %106 = vector.extract_strided_slice %87 {offsets = [16, 0], sizes = [16, 32], strides = [1, 1]} : vector<32x32xbf16> to vector<16x32xbf16>
    "tpu.trace_start"() <{level = 10 : i32, message = "qe,ke->qk"}> : () -> ()
    %cst_46 = arith.constant dense<0.000000e+00> : vector<16x16xf32>
    %107 = tpu.matmul %104, %105, %cst_46 {dimension_numbers = #tpu.dot_dimension_numbers<[1], [1], [0], [0], [0, 0, 1, 0], [], []>} : vector<16x32xbf16>, vector<16x32xbf16>, vector<16x16xf32> -> vector<16x16xf32>
    "tpu.trace_stop"() : () -> ()
    %cst_47 = arith.constant dense<0xFF800000> : vector<16xf32>
    %108 = vector.multi_reduction <maximumf>, %107, %cst_47 [1] : vector<16x16xf32> to vector<16xf32>
    %109 = vector.shape_cast %108 : vector<16xf32> to vector<16x1xf32>
    %110 = vector.broadcast %109 : vector<16x1xf32> to vector<16x16xf32>
    %111 = arith.subf %107, %110 : vector<16x16xf32>
    %112 = math.exp %111 : vector<16x16xf32>
    %cst_48 = arith.constant dense<0.000000e+00> : vector<16xf32>
    %113 = vector.multi_reduction <add>, %112, %cst_48 [1] : vector<16x16xf32> to vector<16xf32>
    %114 = vector.shape_cast %113 : vector<16xf32> to vector<16x1xf32>
    %115 = tpu.reciprocal %114 {approx = true} : vector<16x1xf32> -> vector<16x1xf32>
    %116 = vector.broadcast %115 : vector<16x1xf32> to vector<16x16xf32>
    %117 = arith.mulf %112, %116 : vector<16x16xf32>
    %118 = arith.truncf %117 : vector<16x16xf32> to vector<16x16xbf16>
    %cst_49 = arith.constant dense<0.000000e+00> : vector<16x32xf32>
    %119 = tpu.matmul %118, %106, %cst_49 {dimension_numbers = #tpu.dot_dimension_numbers<[1], [0], [0], [1], [0, 0, 1, 1], [], []>} : vector<16x16xbf16>, vector<16x32xbf16>, vector<16x32xf32> -> vector<16x32xf32>
    %120 = tpu.concatenate %103, %119 in 0 : vector<16x32xf32>, vector<16x32xf32> -> vector<32x32xf32>
    %121 = arith.truncf %120 : vector<32x32xf32> to vector<32x32xbf16>
    %c1 = arith.constant 1 : index
    %c0_50 = arith.constant 0 : index
    %c0_51 = arith.constant 0 : index
    %122 = vector.load %arg4[%c1, %c0_50, %c0_51] : memref<4x32x128xbf16, #tpu.memory_space<vmem>>, vector<1x32x128xbf16>
    %123 = vector.shape_cast %122 : vector<1x32x128xbf16> to vector<32x128xbf16>
    %cst_52 = arith.constant dense<0.000000e+00> : vector<32x128xf32>
    %124 = tpu.matmul %121, %123, %cst_52 {dimension_numbers = #tpu.dot_dimension_numbers<[1], [0], [0], [1], [0, 0, 1, 1], [], []>} : vector<32x32xbf16>, vector<32x128xbf16>, vector<32x128xf32> -> vector<32x128xf32>
    %125 = arith.addf %81, %124 : vector<32x128xf32>
    %126 = vector.extract_strided_slice %38 {offsets = [0, 64], sizes = [32, 32], strides = [1, 1]} : vector<32x384xf32> to vector<32x32xf32>
    %127 = arith.truncf %126 : vector<32x32xf32> to vector<32x32xbf16>
    %128 = vector.extract_strided_slice %38 {offsets = [0, 192], sizes = [32, 32], strides = [1, 1]} : vector<32x384xf32> to vector<32x32xf32>
    %129 = arith.truncf %128 : vector<32x32xf32> to vector<32x32xbf16>
    %130 = vector.extract_strided_slice %38 {offsets = [0, 320], sizes = [32, 32], strides = [1, 1]} : vector<32x384xf32> to vector<32x32xf32>
    %131 = arith.truncf %130 : vector<32x32xf32> to vector<32x32xbf16>
    %132 = vector.extract_strided_slice %127 {offsets = [0, 0], sizes = [16, 32], strides = [1, 1]} : vector<32x32xbf16> to vector<16x32xbf16>
    %133 = vector.extract_strided_slice %129 {offsets = [0, 0], sizes = [16, 32], strides = [1, 1]} : vector<32x32xbf16> to vector<16x32xbf16>
    %134 = vector.extract_strided_slice %131 {offsets = [0, 0], sizes = [16, 32], strides = [1, 1]} : vector<32x32xbf16> to vector<16x32xbf16>
    "tpu.trace_start"() <{level = 10 : i32, message = "qe,ke->qk"}> : () -> ()
    %cst_53 = arith.constant dense<0.000000e+00> : vector<16x16xf32>
    %135 = tpu.matmul %132, %133, %cst_53 {dimension_numbers = #tpu.dot_dimension_numbers<[1], [1], [0], [0], [0, 0, 1, 0], [], []>} : vector<16x32xbf16>, vector<16x32xbf16>, vector<16x16xf32> -> vector<16x16xf32>
    "tpu.trace_stop"() : () -> ()
    %cst_54 = arith.constant dense<0xFF800000> : vector<16xf32>
    %136 = vector.multi_reduction <maximumf>, %135, %cst_54 [1] : vector<16x16xf32> to vector<16xf32>
    %137 = vector.shape_cast %136 : vector<16xf32> to vector<16x1xf32>
    %138 = vector.broadcast %137 : vector<16x1xf32> to vector<16x16xf32>
    %139 = arith.subf %135, %138 : vector<16x16xf32>
    %140 = math.exp %139 : vector<16x16xf32>
    %cst_55 = arith.constant dense<0.000000e+00> : vector<16xf32>
    %141 = vector.multi_reduction <add>, %140, %cst_55 [1] : vector<16x16xf32> to vector<16xf32>
    %142 = vector.shape_cast %141 : vector<16xf32> to vector<16x1xf32>
    %143 = tpu.reciprocal %142 {approx = true} : vector<16x1xf32> -> vector<16x1xf32>
    %144 = vector.broadcast %143 : vector<16x1xf32> to vector<16x16xf32>
    %145 = arith.mulf %140, %144 : vector<16x16xf32>
    %146 = arith.truncf %145 : vector<16x16xf32> to vector<16x16xbf16>
    %cst_56 = arith.constant dense<0.000000e+00> : vector<16x32xf32>
    %147 = tpu.matmul %146, %134, %cst_56 {dimension_numbers = #tpu.dot_dimension_numbers<[1], [0], [0], [1], [0, 0, 1, 1], [], []>} : vector<16x16xbf16>, vector<16x32xbf16>, vector<16x32xf32> -> vector<16x32xf32>
    %148 = vector.extract_strided_slice %127 {offsets = [16, 0], sizes = [16, 32], strides = [1, 1]} : vector<32x32xbf16> to vector<16x32xbf16>
    %149 = vector.extract_strided_slice %129 {offsets = [16, 0], sizes = [16, 32], strides = [1, 1]} : vector<32x32xbf16> to vector<16x32xbf16>
    %150 = vector.extract_strided_slice %131 {offsets = [16, 0], sizes = [16, 32], strides = [1, 1]} : vector<32x32xbf16> to vector<16x32xbf16>
    "tpu.trace_start"() <{level = 10 : i32, message = "qe,ke->qk"}> : () -> ()
    %cst_57 = arith.constant dense<0.000000e+00> : vector<16x16xf32>
    %151 = tpu.matmul %148, %149, %cst_57 {dimension_numbers = #tpu.dot_dimension_numbers<[1], [1], [0], [0], [0, 0, 1, 0], [], []>} : vector<16x32xbf16>, vector<16x32xbf16>, vector<16x16xf32> -> vector<16x16xf32>
    "tpu.trace_stop"() : () -> ()
    %cst_58 = arith.constant dense<0xFF800000> : vector<16xf32>
    %152 = vector.multi_reduction <maximumf>, %151, %cst_58 [1] : vector<16x16xf32> to vector<16xf32>
    %153 = vector.shape_cast %152 : vector<16xf32> to vector<16x1xf32>
    %154 = vector.broadcast %153 : vector<16x1xf32> to vector<16x16xf32>
    %155 = arith.subf %151, %154 : vector<16x16xf32>
    %156 = math.exp %155 : vector<16x16xf32>
    %cst_59 = arith.constant dense<0.000000e+00> : vector<16xf32>
    %157 = vector.multi_reduction <add>, %156, %cst_59 [1] : vector<16x16xf32> to vector<16xf32>
    %158 = vector.shape_cast %157 : vector<16xf32> to vector<16x1xf32>
    %159 = tpu.reciprocal %158 {approx = true} : vector<16x1xf32> -> vector<16x1xf32>
    %160 = vector.broadcast %159 : vector<16x1xf32> to vector<16x16xf32>
    %161 = arith.mulf %156, %160 : vector<16x16xf32>
    %162 = arith.truncf %161 : vector<16x16xf32> to vector<16x16xbf16>
    %cst_60 = arith.constant dense<0.000000e+00> : vector<16x32xf32>
    %163 = tpu.matmul %162, %150, %cst_60 {dimension_numbers = #tpu.dot_dimension_numbers<[1], [0], [0], [1], [0, 0, 1, 1], [], []>} : vector<16x16xbf16>, vector<16x32xbf16>, vector<16x32xf32> -> vector<16x32xf32>
    %164 = tpu.concatenate %147, %163 in 0 : vector<16x32xf32>, vector<16x32xf32> -> vector<32x32xf32>
    %165 = arith.truncf %164 : vector<32x32xf32> to vector<32x32xbf16>
    %c2 = arith.constant 2 : index
    %c0_61 = arith.constant 0 : index
    %c0_62 = arith.constant 0 : index
    %166 = vector.load %arg4[%c2, %c0_61, %c0_62] : memref<4x32x128xbf16, #tpu.memory_space<vmem>>, vector<1x32x128xbf16>
    %167 = vector.shape_cast %166 : vector<1x32x128xbf16> to vector<32x128xbf16>
    %cst_63 = arith.constant dense<0.000000e+00> : vector<32x128xf32>
    %168 = tpu.matmul %165, %167, %cst_63 {dimension_numbers = #tpu.dot_dimension_numbers<[1], [0], [0], [1], [0, 0, 1, 1], [], []>} : vector<32x32xbf16>, vector<32x128xbf16>, vector<32x128xf32> -> vector<32x128xf32>
    %169 = arith.addf %125, %168 : vector<32x128xf32>
    %170 = vector.extract_strided_slice %38 {offsets = [0, 96], sizes = [32, 32], strides = [1, 1]} : vector<32x384xf32> to vector<32x32xf32>
    %171 = arith.truncf %170 : vector<32x32xf32> to vector<32x32xbf16>
    %172 = vector.extract_strided_slice %38 {offsets = [0, 224], sizes = [32, 32], strides = [1, 1]} : vector<32x384xf32> to vector<32x32xf32>
    %173 = arith.truncf %172 : vector<32x32xf32> to vector<32x32xbf16>
    %174 = vector.extract_strided_slice %38 {offsets = [0, 352], sizes = [32, 32], strides = [1, 1]} : vector<32x384xf32> to vector<32x32xf32>
    %175 = arith.truncf %174 : vector<32x32xf32> to vector<32x32xbf16>
    %176 = vector.extract_strided_slice %171 {offsets = [0, 0], sizes = [16, 32], strides = [1, 1]} : vector<32x32xbf16> to vector<16x32xbf16>
    %177 = vector.extract_strided_slice %173 {offsets = [0, 0], sizes = [16, 32], strides = [1, 1]} : vector<32x32xbf16> to vector<16x32xbf16>
    %178 = vector.extract_strided_slice %175 {offsets = [0, 0], sizes = [16, 32], strides = [1, 1]} : vector<32x32xbf16> to vector<16x32xbf16>
    "tpu.trace_start"() <{level = 10 : i32, message = "qe,ke->qk"}> : () -> ()
    %cst_64 = arith.constant dense<0.000000e+00> : vector<16x16xf32>
    %179 = tpu.matmul %176, %177, %cst_64 {dimension_numbers = #tpu.dot_dimension_numbers<[1], [1], [0], [0], [0, 0, 1, 0], [], []>} : vector<16x32xbf16>, vector<16x32xbf16>, vector<16x16xf32> -> vector<16x16xf32>
    "tpu.trace_stop"() : () -> ()
    %cst_65 = arith.constant dense<0xFF800000> : vector<16xf32>
    %180 = vector.multi_reduction <maximumf>, %179, %cst_65 [1] : vector<16x16xf32> to vector<16xf32>
    %181 = vector.shape_cast %180 : vector<16xf32> to vector<16x1xf32>
    %182 = vector.broadcast %181 : vector<16x1xf32> to vector<16x16xf32>
    %183 = arith.subf %179, %182 : vector<16x16xf32>
    %184 = math.exp %183 : vector<16x16xf32>
    %cst_66 = arith.constant dense<0.000000e+00> : vector<16xf32>
    %185 = vector.multi_reduction <add>, %184, %cst_66 [1] : vector<16x16xf32> to vector<16xf32>
    %186 = vector.shape_cast %185 : vector<16xf32> to vector<16x1xf32>
    %187 = tpu.reciprocal %186 {approx = true} : vector<16x1xf32> -> vector<16x1xf32>
    %188 = vector.broadcast %187 : vector<16x1xf32> to vector<16x16xf32>
    %189 = arith.mulf %184, %188 : vector<16x16xf32>
    %190 = arith.truncf %189 : vector<16x16xf32> to vector<16x16xbf16>
    %cst_67 = arith.constant dense<0.000000e+00> : vector<16x32xf32>
    %191 = tpu.matmul %190, %178, %cst_67 {dimension_numbers = #tpu.dot_dimension_numbers<[1], [0], [0], [1], [0, 0, 1, 1], [], []>} : vector<16x16xbf16>, vector<16x32xbf16>, vector<16x32xf32> -> vector<16x32xf32>
    %192 = vector.extract_strided_slice %171 {offsets = [16, 0], sizes = [16, 32], strides = [1, 1]} : vector<32x32xbf16> to vector<16x32xbf16>
    %193 = vector.extract_strided_slice %173 {offsets = [16, 0], sizes = [16, 32], strides = [1, 1]} : vector<32x32xbf16> to vector<16x32xbf16>
    %194 = vector.extract_strided_slice %175 {offsets = [16, 0], sizes = [16, 32], strides = [1, 1]} : vector<32x32xbf16> to vector<16x32xbf16>
    "tpu.trace_start"() <{level = 10 : i32, message = "qe,ke->qk"}> : () -> ()
    %cst_68 = arith.constant dense<0.000000e+00> : vector<16x16xf32>
    %195 = tpu.matmul %192, %193, %cst_68 {dimension_numbers = #tpu.dot_dimension_numbers<[1], [1], [0], [0], [0, 0, 1, 0], [], []>} : vector<16x32xbf16>, vector<16x32xbf16>, vector<16x16xf32> -> vector<16x16xf32>
    "tpu.trace_stop"() : () -> ()
    %cst_69 = arith.constant dense<0xFF800000> : vector<16xf32>
    %196 = vector.multi_reduction <maximumf>, %195, %cst_69 [1] : vector<16x16xf32> to vector<16xf32>
    %197 = vector.shape_cast %196 : vector<16xf32> to vector<16x1xf32>
    %198 = vector.broadcast %197 : vector<16x1xf32> to vector<16x16xf32>
    %199 = arith.subf %195, %198 : vector<16x16xf32>
    %200 = math.exp %199 : vector<16x16xf32>
    %cst_70 = arith.constant dense<0.000000e+00> : vector<16xf32>
    %201 = vector.multi_reduction <add>, %200, %cst_70 [1] : vector<16x16xf32> to vector<16xf32>
    %202 = vector.shape_cast %201 : vector<16xf32> to vector<16x1xf32>
    %203 = tpu.reciprocal %202 {approx = true} : vector<16x1xf32> -> vector<16x1xf32>
    %204 = vector.broadcast %203 : vector<16x1xf32> to vector<16x16xf32>
    %205 = arith.mulf %200, %204 : vector<16x16xf32>
    %206 = arith.truncf %205 : vector<16x16xf32> to vector<16x16xbf16>
    %cst_71 = arith.constant dense<0.000000e+00> : vector<16x32xf32>
    %207 = tpu.matmul %206, %194, %cst_71 {dimension_numbers = #tpu.dot_dimension_numbers<[1], [0], [0], [1], [0, 0, 1, 1], [], []>} : vector<16x16xbf16>, vector<16x32xbf16>, vector<16x32xf32> -> vector<16x32xf32>
    %208 = tpu.concatenate %191, %207 in 0 : vector<16x32xf32>, vector<16x32xf32> -> vector<32x32xf32>
    %209 = arith.truncf %208 : vector<32x32xf32> to vector<32x32xbf16>
    %c3 = arith.constant 3 : index
    %c0_72 = arith.constant 0 : index
    %c0_73 = arith.constant 0 : index
    %210 = vector.load %arg4[%c3, %c0_72, %c0_73] : memref<4x32x128xbf16, #tpu.memory_space<vmem>>, vector<1x32x128xbf16>
    %211 = vector.shape_cast %210 : vector<1x32x128xbf16> to vector<32x128xbf16>
    %cst_74 = arith.constant dense<0.000000e+00> : vector<32x128xf32>
    %212 = tpu.matmul %209, %211, %cst_74 {dimension_numbers = #tpu.dot_dimension_numbers<[1], [0], [0], [1], [0, 0, 1, 1], [], []>} : vector<32x32xbf16>, vector<32x128xbf16>, vector<32x128xf32> -> vector<32x128xf32>
    %213 = arith.addf %169, %212 : vector<32x128xf32>
    %214 = vector.broadcast %3 : vector<1x128xf32> to vector<32x128xf32>
    %215 = arith.addf %213, %214 : vector<32x128xf32>
    %216 = arith.addf %1, %215 : vector<32x128xf32>
    %cst_75 = arith.constant dense<0.000000e+00> : vector<32xf32>
    %217 = vector.multi_reduction <add>, %216, %cst_75 [1] : vector<32x128xf32> to vector<32xf32>
    %218 = vector.shape_cast %217 : vector<32xf32> to vector<32x1xf32>
    %cst_76 = arith.constant 1.280000e+02 : f32
    %219 = vector.broadcast %cst_76 : f32 to vector<32x1xf32>
    %220 = arith.divf %218, %219 : vector<32x1xf32>
    %221 = vector.broadcast %220 : vector<32x1xf32> to vector<32x128xf32>
    %222 = arith.subf %216, %221 : vector<32x128xf32>
    %223 = arith.mulf %222, %222 : vector<32x128xf32>
    %cst_77 = arith.constant dense<0.000000e+00> : vector<32xf32>
    %224 = vector.multi_reduction <add>, %223, %cst_77 [1] : vector<32x128xf32> to vector<32xf32>
    %225 = vector.shape_cast %224 : vector<32xf32> to vector<32x1xf32>
    %cst_78 = arith.constant 1.280000e+02 : f32
    %226 = vector.broadcast %cst_78 : f32 to vector<32x1xf32>
    %227 = arith.divf %225, %226 : vector<32x1xf32>
    %cst_79 = arith.constant 9.99999974E-6 : f32
    %228 = vector.broadcast %cst_79 : f32 to vector<32x1xf32>
    %229 = arith.addf %227, %228 : vector<32x1xf32>
    %230 = math.rsqrt %229 : vector<32x1xf32>
    %231 = vector.broadcast %230 : vector<32x1xf32> to vector<32x128xf32>
    %232 = arith.mulf %222, %231 : vector<32x128xf32>
    %233 = vector.broadcast %4 : vector<1x128xf32> to vector<32x128xf32>
    %234 = arith.mulf %232, %233 : vector<32x128xf32>
    %235 = vector.broadcast %5 : vector<1x128xf32> to vector<32x128xf32>
    %236 = arith.addf %234, %235 : vector<32x128xf32>
    %237 = arith.truncf %236 : vector<32x128xf32> to vector<32x128xbf16>
    %c0_80 = arith.constant 0 : index
    %c0_81 = arith.constant 0 : index
    %c0_82 = arith.constant 0 : index
    %238 = vector.load %arg8[%c0_80, %c0_81, %c0_82] : memref<3x128x128xbf16, #tpu.memory_space<vmem>>, vector<1x128x128xbf16>
    %239 = vector.shape_cast %238 : vector<1x128x128xbf16> to vector<128x128xbf16>
    %cst_83 = arith.constant dense<0.000000e+00> : vector<32x128xf32>
    %240 = tpu.matmul %237, %239, %cst_83 {dimension_numbers = #tpu.dot_dimension_numbers<[1], [0], [0], [1], [0, 0, 1, 1], [], []>} : vector<32x128xbf16>, vector<128x128xbf16>, vector<32x128xf32> -> vector<32x128xf32>
    %c1_84 = arith.constant 1 : index
    %c0_85 = arith.constant 0 : index
    %c0_86 = arith.constant 0 : index
    %241 = vector.load %arg8[%c1_84, %c0_85, %c0_86] : memref<3x128x128xbf16, #tpu.memory_space<vmem>>, vector<1x128x128xbf16>
    %242 = vector.shape_cast %241 : vector<1x128x128xbf16> to vector<128x128xbf16>
    %cst_87 = arith.constant dense<0.000000e+00> : vector<32x128xf32>
    %243 = tpu.matmul %237, %242, %cst_87 {dimension_numbers = #tpu.dot_dimension_numbers<[1], [0], [0], [1], [0, 0, 1, 1], [], []>} : vector<32x128xbf16>, vector<128x128xbf16>, vector<32x128xf32> -> vector<32x128xf32>
    %c2_88 = arith.constant 2 : index
    %c0_89 = arith.constant 0 : index
    %c0_90 = arith.constant 0 : index
    %244 = vector.load %arg8[%c2_88, %c0_89, %c0_90] : memref<3x128x128xbf16, #tpu.memory_space<vmem>>, vector<1x128x128xbf16>
    %245 = vector.shape_cast %244 : vector<1x128x128xbf16> to vector<128x128xbf16>
    %cst_91 = arith.constant dense<0.000000e+00> : vector<32x128xf32>
    %246 = tpu.matmul %237, %245, %cst_91 {dimension_numbers = #tpu.dot_dimension_numbers<[1], [0], [0], [1], [0, 0, 1, 1], [], []>} : vector<32x128xbf16>, vector<128x128xbf16>, vector<32x128xf32> -> vector<32x128xf32>
    %c1_i32_92 = arith.constant 1 : i32
    %247 = tpu.dynamic_rotate %240 by %c1_i32_92 dim 0 : vector<32x128xf32>, i32 -> vector<32x128xf32>
    %cst_93 = arith.constant 0.000000e+00 : f32
    %248 = vector.broadcast %cst_93 : f32 to vector<32x128xf32>
    %249 = arith.select %31, %247, %248 : vector<32x128xi1>, vector<32x128xf32>
    %c31_i32 = arith.constant 31 : i32
    %250 = tpu.dynamic_rotate %246 by %c31_i32 dim 0 : vector<32x128xf32>, i32 -> vector<32x128xf32>
    %cst_94 = arith.constant 0.000000e+00 : f32
    %251 = vector.broadcast %cst_94 : f32 to vector<32x128xf32>
    %252 = arith.select %33, %250, %251 : vector<32x128xi1>, vector<32x128xf32>
    %253 = arith.addf %249, %243 : vector<32x128xf32>
    %254 = arith.addf %253, %252 : vector<32x128xf32>
    %255 = vector.broadcast %6 : vector<1x128xf32> to vector<32x128xf32>
    %256 = arith.addf %254, %255 : vector<32x128xf32>
    %257 = arith.mulf %256, %256 : vector<32x128xf32>
    %258 = arith.mulf %256, %257 : vector<32x128xf32>
    %cst_95 = arith.constant 4.471500e-02 : f32
    %259 = vector.broadcast %cst_95 : f32 to vector<32x128xf32>
    %260 = arith.mulf %259, %258 : vector<32x128xf32>
    %261 = arith.addf %256, %260 : vector<32x128xf32>
    %cst_96 = arith.constant 0.797884583 : f32
    %262 = vector.broadcast %cst_96 : f32 to vector<32x128xf32>
    %263 = arith.mulf %262, %261 : vector<32x128xf32>
    %264 = math.tanh %263 : vector<32x128xf32>
    %cst_97 = arith.constant 1.000000e+00 : f32
    %265 = vector.broadcast %cst_97 : f32 to vector<32x128xf32>
    %266 = arith.addf %265, %264 : vector<32x128xf32>
    %cst_98 = arith.constant 5.000000e-01 : f32
    %267 = vector.broadcast %cst_98 : f32 to vector<32x128xf32>
    %268 = arith.mulf %267, %266 : vector<32x128xf32>
    %269 = arith.mulf %256, %268 : vector<32x128xf32>
    %270 = arith.truncf %269 : vector<32x128xf32> to vector<32x128xbf16>
    %c0_99 = arith.constant 0 : index
    %c0_100 = arith.constant 0 : index
    %c0_101 = arith.constant 0 : index
    %271 = vector.load %arg10[%c0_99, %c0_100, %c0_101] : memref<3x128x128xbf16, #tpu.memory_space<vmem>>, vector<1x128x128xbf16>
    %272 = vector.shape_cast %271 : vector<1x128x128xbf16> to vector<128x128xbf16>
    %cst_102 = arith.constant dense<0.000000e+00> : vector<32x128xf32>
    %273 = tpu.matmul %270, %272, %cst_102 {dimension_numbers = #tpu.dot_dimension_numbers<[1], [0], [0], [1], [0, 0, 1, 1], [], []>} : vector<32x128xbf16>, vector<128x128xbf16>, vector<32x128xf32> -> vector<32x128xf32>
    %c1_103 = arith.constant 1 : index
    %c0_104 = arith.constant 0 : index
    %c0_105 = arith.constant 0 : index
    %274 = vector.load %arg10[%c1_103, %c0_104, %c0_105] : memref<3x128x128xbf16, #tpu.memory_space<vmem>>, vector<1x128x128xbf16>
    %275 = vector.shape_cast %274 : vector<1x128x128xbf16> to vector<128x128xbf16>
    %cst_106 = arith.constant dense<0.000000e+00> : vector<32x128xf32>
    %276 = tpu.matmul %270, %275, %cst_106 {dimension_numbers = #tpu.dot_dimension_numbers<[1], [0], [0], [1], [0, 0, 1, 1], [], []>} : vector<32x128xbf16>, vector<128x128xbf16>, vector<32x128xf32> -> vector<32x128xf32>
    %c2_107 = arith.constant 2 : index
    %c0_108 = arith.constant 0 : index
    %c0_109 = arith.constant 0 : index
    %277 = vector.load %arg10[%c2_107, %c0_108, %c0_109] : memref<3x128x128xbf16, #tpu.memory_space<vmem>>, vector<1x128x128xbf16>
    %278 = vector.shape_cast %277 : vector<1x128x128xbf16> to vector<128x128xbf16>
    %cst_110 = arith.constant dense<0.000000e+00> : vector<32x128xf32>
    %279 = tpu.matmul %270, %278, %cst_110 {dimension_numbers = #tpu.dot_dimension_numbers<[1], [0], [0], [1], [0, 0, 1, 1], [], []>} : vector<32x128xbf16>, vector<128x128xbf16>, vector<32x128xf32> -> vector<32x128xf32>
    %c1_i32_111 = arith.constant 1 : i32
    %280 = tpu.dynamic_rotate %273 by %c1_i32_111 dim 0 : vector<32x128xf32>, i32 -> vector<32x128xf32>
    %cst_112 = arith.constant 0.000000e+00 : f32
    %281 = vector.broadcast %cst_112 : f32 to vector<32x128xf32>
    %282 = arith.select %31, %280, %281 : vector<32x128xi1>, vector<32x128xf32>
    %c31_i32_113 = arith.constant 31 : i32
    %283 = tpu.dynamic_rotate %279 by %c31_i32_113 dim 0 : vector<32x128xf32>, i32 -> vector<32x128xf32>
    %cst_114 = arith.constant 0.000000e+00 : f32
    %284 = vector.broadcast %cst_114 : f32 to vector<32x128xf32>
    %285 = arith.select %33, %283, %284 : vector<32x128xi1>, vector<32x128xf32>
    %286 = arith.addf %282, %276 : vector<32x128xf32>
    %287 = arith.addf %286, %285 : vector<32x128xf32>
    %288 = vector.broadcast %7 : vector<1x128xf32> to vector<32x128xf32>
    %289 = arith.addf %287, %288 : vector<32x128xf32>
    %290 = arith.addf %236, %289 : vector<32x128xf32>
    %c0_115 = arith.constant 0 : index
    %c0_116 = arith.constant 0 : index
    %291 = vector.load %arg12[%c0_115, %c0_116] : memref<128x256xbf16, #tpu.memory_space<vmem>>, vector<128x256xbf16>
    %cst_117 = arith.constant dense<0.000000e+00> : vector<32x256xf32>
    %292 = tpu.matmul %237, %291, %cst_117 {dimension_numbers = #tpu.dot_dimension_numbers<[1], [0], [0], [1], [0, 0, 1, 1], [], []>} : vector<32x128xbf16>, vector<128x256xbf16>, vector<32x256xf32> -> vector<32x256xf32>
    %293 = vector.broadcast %8 : vector<1x256xf32> to vector<32x256xf32>
    %294 = arith.addf %292, %293 : vector<32x256xf32>
    %295 = arith.mulf %294, %294 : vector<32x256xf32>
    %296 = arith.mulf %294, %295 : vector<32x256xf32>
    %cst_118 = arith.constant 4.471500e-02 : f32
    %297 = vector.broadcast %cst_118 : f32 to vector<32x256xf32>
    %298 = arith.mulf %297, %296 : vector<32x256xf32>
    %299 = arith.addf %294, %298 : vector<32x256xf32>
    %cst_119 = arith.constant 0.797884583 : f32
    %300 = vector.broadcast %cst_119 : f32 to vector<32x256xf32>
    %301 = arith.mulf %300, %299 : vector<32x256xf32>
    %302 = math.tanh %301 : vector<32x256xf32>
    %cst_120 = arith.constant 1.000000e+00 : f32
    %303 = vector.broadcast %cst_120 : f32 to vector<32x256xf32>
    %304 = arith.addf %303, %302 : vector<32x256xf32>
    %cst_121 = arith.constant 5.000000e-01 : f32
    %305 = vector.broadcast %cst_121 : f32 to vector<32x256xf32>
    %306 = arith.mulf %305, %304 : vector<32x256xf32>
    %307 = arith.mulf %294, %306 : vector<32x256xf32>
    %308 = arith.truncf %307 : vector<32x256xf32> to vector<32x256xbf16>
    %c0_122 = arith.constant 0 : index
    %c0_123 = arith.constant 0 : index
    %309 = vector.load %arg14[%c0_122, %c0_123] : memref<256x128xbf16, #tpu.memory_space<vmem>>, vector<256x128xbf16>
    %cst_124 = arith.constant dense<0.000000e+00> : vector<32x128xf32>
    %310 = tpu.matmul %308, %309, %cst_124 {dimension_numbers = #tpu.dot_dimension_numbers<[1], [0], [0], [1], [0, 0, 1, 1], [], []>} : vector<32x256xbf16>, vector<256x128xbf16>, vector<32x128xf32> -> vector<32x128xf32>
    %311 = vector.broadcast %9 : vector<1x128xf32> to vector<32x128xf32>
    %312 = arith.addf %310, %311 : vector<32x128xf32>
    %313 = arith.truncf %290 : vector<32x128xf32> to vector<32x128xbf16>
    %c0_125 = arith.constant 0 : index
    %c0_126 = arith.constant 0 : index
    %c0_127 = arith.constant 0 : index
    %314 = vector.load %arg16[%c0_125, %c0_126, %c0_127] : memref<3x128x128xbf16, #tpu.memory_space<vmem>>, vector<1x128x128xbf16>
    %315 = vector.shape_cast %314 : vector<1x128x128xbf16> to vector<128x128xbf16>
    %cst_128 = arith.constant dense<0.000000e+00> : vector<32x128xf32>
    %316 = tpu.matmul %313, %315, %cst_128 {dimension_numbers = #tpu.dot_dimension_numbers<[1], [0], [0], [1], [0, 0, 1, 1], [], []>} : vector<32x128xbf16>, vector<128x128xbf16>, vector<32x128xf32> -> vector<32x128xf32>
    %c1_129 = arith.constant 1 : index
    %c0_130 = arith.constant 0 : index
    %c0_131 = arith.constant 0 : index
    %317 = vector.load %arg16[%c1_129, %c0_130, %c0_131] : memref<3x128x128xbf16, #tpu.memory_space<vmem>>, vector<1x128x128xbf16>
    %318 = vector.shape_cast %317 : vector<1x128x128xbf16> to vector<128x128xbf16>
    %cst_132 = arith.constant dense<0.000000e+00> : vector<32x128xf32>
    %319 = tpu.matmul %313, %318, %cst_132 {dimension_numbers = #tpu.dot_dimension_numbers<[1], [0], [0], [1], [0, 0, 1, 1], [], []>} : vector<32x128xbf16>, vector<128x128xbf16>, vector<32x128xf32> -> vector<32x128xf32>
    %c2_133 = arith.constant 2 : index
    %c0_134 = arith.constant 0 : index
    %c0_135 = arith.constant 0 : index
    %320 = vector.load %arg16[%c2_133, %c0_134, %c0_135] : memref<3x128x128xbf16, #tpu.memory_space<vmem>>, vector<1x128x128xbf16>
    %321 = vector.shape_cast %320 : vector<1x128x128xbf16> to vector<128x128xbf16>
    %cst_136 = arith.constant dense<0.000000e+00> : vector<32x128xf32>
    %322 = tpu.matmul %313, %321, %cst_136 {dimension_numbers = #tpu.dot_dimension_numbers<[1], [0], [0], [1], [0, 0, 1, 1], [], []>} : vector<32x128xbf16>, vector<128x128xbf16>, vector<32x128xf32> -> vector<32x128xf32>
    %c1_i32_137 = arith.constant 1 : i32
    %323 = tpu.dynamic_rotate %316 by %c1_i32_137 dim 0 : vector<32x128xf32>, i32 -> vector<32x128xf32>
    %cst_138 = arith.constant 0.000000e+00 : f32
    %324 = vector.broadcast %cst_138 : f32 to vector<32x128xf32>
    %325 = arith.select %31, %323, %324 : vector<32x128xi1>, vector<32x128xf32>
    %c31_i32_139 = arith.constant 31 : i32
    %326 = tpu.dynamic_rotate %322 by %c31_i32_139 dim 0 : vector<32x128xf32>, i32 -> vector<32x128xf32>
    %cst_140 = arith.constant 0.000000e+00 : f32
    %327 = vector.broadcast %cst_140 : f32 to vector<32x128xf32>
    %328 = arith.select %33, %326, %327 : vector<32x128xi1>, vector<32x128xf32>
    %329 = arith.addf %325, %319 : vector<32x128xf32>
    %330 = arith.addf %329, %328 : vector<32x128xf32>
    %331 = arith.truncf %312 : vector<32x128xf32> to vector<32x128xbf16>
    %c0_141 = arith.constant 0 : index
    %c0_142 = arith.constant 0 : index
    %c0_143 = arith.constant 0 : index
    %332 = vector.load %arg17[%c0_141, %c0_142, %c0_143] : memref<3x128x128xbf16, #tpu.memory_space<vmem>>, vector<1x128x128xbf16>
    %333 = vector.shape_cast %332 : vector<1x128x128xbf16> to vector<128x128xbf16>
    %cst_144 = arith.constant dense<0.000000e+00> : vector<32x128xf32>
    %334 = tpu.matmul %331, %333, %cst_144 {dimension_numbers = #tpu.dot_dimension_numbers<[1], [0], [0], [1], [0, 0, 1, 1], [], []>} : vector<32x128xbf16>, vector<128x128xbf16>, vector<32x128xf32> -> vector<32x128xf32>
    %c1_145 = arith.constant 1 : index
    %c0_146 = arith.constant 0 : index
    %c0_147 = arith.constant 0 : index
    %335 = vector.load %arg17[%c1_145, %c0_146, %c0_147] : memref<3x128x128xbf16, #tpu.memory_space<vmem>>, vector<1x128x128xbf16>
    %336 = vector.shape_cast %335 : vector<1x128x128xbf16> to vector<128x128xbf16>
    %cst_148 = arith.constant dense<0.000000e+00> : vector<32x128xf32>
    %337 = tpu.matmul %331, %336, %cst_148 {dimension_numbers = #tpu.dot_dimension_numbers<[1], [0], [0], [1], [0, 0, 1, 1], [], []>} : vector<32x128xbf16>, vector<128x128xbf16>, vector<32x128xf32> -> vector<32x128xf32>
    %c2_149 = arith.constant 2 : index
    %c0_150 = arith.constant 0 : index
    %c0_151 = arith.constant 0 : index
    %338 = vector.load %arg17[%c2_149, %c0_150, %c0_151] : memref<3x128x128xbf16, #tpu.memory_space<vmem>>, vector<1x128x128xbf16>
    %339 = vector.shape_cast %338 : vector<1x128x128xbf16> to vector<128x128xbf16>
    %cst_152 = arith.constant dense<0.000000e+00> : vector<32x128xf32>
    %340 = tpu.matmul %331, %339, %cst_152 {dimension_numbers = #tpu.dot_dimension_numbers<[1], [0], [0], [1], [0, 0, 1, 1], [], []>} : vector<32x128xbf16>, vector<128x128xbf16>, vector<32x128xf32> -> vector<32x128xf32>
    %c1_i32_153 = arith.constant 1 : i32
    %341 = tpu.dynamic_rotate %334 by %c1_i32_153 dim 0 : vector<32x128xf32>, i32 -> vector<32x128xf32>
    %cst_154 = arith.constant 0.000000e+00 : f32
    %342 = vector.broadcast %cst_154 : f32 to vector<32x128xf32>
    %343 = arith.select %31, %341, %342 : vector<32x128xi1>, vector<32x128xf32>
    %c31_i32_155 = arith.constant 31 : i32
    %344 = tpu.dynamic_rotate %340 by %c31_i32_155 dim 0 : vector<32x128xf32>, i32 -> vector<32x128xf32>
    %cst_156 = arith.constant 0.000000e+00 : f32
    %345 = vector.broadcast %cst_156 : f32 to vector<32x128xf32>
    %346 = arith.select %33, %344, %345 : vector<32x128xi1>, vector<32x128xf32>
    %347 = arith.addf %343, %337 : vector<32x128xf32>
    %348 = arith.addf %347, %346 : vector<32x128xf32>
    %349 = arith.addf %330, %348 : vector<32x128xf32>
    %350 = vector.broadcast %10 : vector<1x128xf32> to vector<32x128xf32>
    %351 = arith.addf %349, %350 : vector<32x128xf32>
    %352 = arith.addf %236, %351 : vector<32x128xf32>
    %cst_157 = arith.constant dense<0.000000e+00> : vector<32xf32>
    %353 = vector.multi_reduction <add>, %352, %cst_157 [1] : vector<32x128xf32> to vector<32xf32>
    %354 = vector.shape_cast %353 : vector<32xf32> to vector<32x1xf32>
    %cst_158 = arith.constant 1.280000e+02 : f32
    %355 = vector.broadcast %cst_158 : f32 to vector<32x1xf32>
    %356 = arith.divf %354, %355 : vector<32x1xf32>
    %357 = vector.broadcast %356 : vector<32x1xf32> to vector<32x128xf32>
    %358 = arith.subf %352, %357 : vector<32x128xf32>
    %359 = arith.mulf %358, %358 : vector<32x128xf32>
    %cst_159 = arith.constant dense<0.000000e+00> : vector<32xf32>
    %360 = vector.multi_reduction <add>, %359, %cst_159 [1] : vector<32x128xf32> to vector<32xf32>
    %361 = vector.shape_cast %360 : vector<32xf32> to vector<32x1xf32>
    %cst_160 = arith.constant 1.280000e+02 : f32
    %362 = vector.broadcast %cst_160 : f32 to vector<32x1xf32>
    %363 = arith.divf %361, %362 : vector<32x1xf32>
    %cst_161 = arith.constant 9.99999974E-6 : f32
    %364 = vector.broadcast %cst_161 : f32 to vector<32x1xf32>
    %365 = arith.addf %363, %364 : vector<32x1xf32>
    %366 = math.rsqrt %365 : vector<32x1xf32>
    %367 = vector.broadcast %366 : vector<32x1xf32> to vector<32x128xf32>
    %368 = arith.mulf %358, %367 : vector<32x128xf32>
    %369 = vector.broadcast %11 : vector<1x128xf32> to vector<32x128xf32>
    %370 = arith.mulf %368, %369 : vector<32x128xf32>
    %371 = vector.broadcast %12 : vector<1x128xf32> to vector<32x128xf32>
    %372 = arith.addf %370, %371 : vector<32x128xf32>
    %373 = vector.shape_cast %372 : vector<32x128xf32> to vector<2x16x128xf32>
    %c0_162 = arith.constant 0 : index
    %c0_163 = arith.constant 0 : index
    %c0_164 = arith.constant 0 : index
    %374 = vector.load %arg21[%c0_162, %c0_163, %c0_164] : memref<2x16x128xf32, #tpu.memory_space<vmem>>, vector<2x16x128xf32>
    tpu.vector_store %arg21[%c0_162, %c0_163, %c0_164], %373 {strides = array<i32>} : memref<2x16x128xf32, #tpu.memory_space<vmem>>, vector<2x16x128xf32>,
    return
  }
  func.func @transform_0(%arg0: i32) -> (i32, i32, i32) {
    %c0_i32 = arith.constant 0 : i32
    %c0_i32_0 = arith.constant 0 : i32
    %c0_i32_1 = arith.constant 0 : i32
    return %arg0, %c0_i32, %c0_i32_0 : i32, i32, i32
  }
  func.func @transform_1(%arg0: i32) -> (i32, i32) {
    %c0_i32 = arith.constant 0 : i32
    %c0_i32_0 = arith.constant 0 : i32
    %c0_i32_1 = arith.constant 0 : i32
    return %c0_i32, %c0_i32_0 : i32, i32
  }
  func.func @transform_2(%arg0: i32) -> (i32, i32) {
    %c0_i32 = arith.constant 0 : i32
    %c0_i32_0 = arith.constant 0 : i32
    %c0_i32_1 = arith.constant 0 : i32
    return %c0_i32, %c0_i32_0 : i32, i32
  }
  func.func @transform_3(%arg0: i32) -> (i32, i32, i32) {
    %c0_i32 = arith.constant 0 : i32
    %c0_i32_0 = arith.constant 0 : i32
    %c0_i32_1 = arith.constant 0 : i32
    %c0_i32_2 = arith.constant 0 : i32
    return %c0_i32, %c0_i32_0, %c0_i32_1 : i32, i32, i32
  }
  func.func @transform_4(%arg0: i32) -> (i32, i32) {
    %c0_i32 = arith.constant 0 : i32
    %c0_i32_0 = arith.constant 0 : i32
    %c0_i32_1 = arith.constant 0 : i32
    return %c0_i32, %c0_i32_0 : i32, i32
  }
  func.func @transform_5(%arg0: i32) -> (i32, i32) {
    %c0_i32 = arith.constant 0 : i32
    %c0_i32_0 = arith.constant 0 : i32
    %c0_i32_1 = arith.constant 0 : i32
    return %c0_i32, %c0_i32_0 : i32, i32
  }
  func.func @transform_6(%arg0: i32) -> (i32, i32) {
    %c0_i32 = arith.constant 0 : i32
    %c0_i32_0 = arith.constant 0 : i32
    %c0_i32_1 = arith.constant 0 : i32
    return %c0_i32, %c0_i32_0 : i32, i32
  }
  func.func @transform_7(%arg0: i32) -> (i32, i32, i32) {
    %c0_i32 = arith.constant 0 : i32
    %c0_i32_0 = arith.constant 0 : i32
    %c0_i32_1 = arith.constant 0 : i32
    %c0_i32_2 = arith.constant 0 : i32
    return %c0_i32, %c0_i32_0, %c0_i32_1 : i32, i32, i32
  }
  func.func @transform_8(%arg0: i32) -> (i32, i32) {
    %c0_i32 = arith.constant 0 : i32
    %c0_i32_0 = arith.constant 0 : i32
    %c0_i32_1 = arith.constant 0 : i32
    return %c0_i32, %c0_i32_0 : i32, i32
  }
  func.func @transform_9(%arg0: i32) -> (i32, i32, i32) {
    %c0_i32 = arith.constant 0 : i32
    %c0_i32_0 = arith.constant 0 : i32
    %c0_i32_1 = arith.constant 0 : i32
    %c0_i32_2 = arith.constant 0 : i32
    return %c0_i32, %c0_i32_0, %c0_i32_1 : i32, i32, i32
  }
  func.func @transform_10(%arg0: i32) -> (i32, i32) {
    %c0_i32 = arith.constant 0 : i32
    %c0_i32_0 = arith.constant 0 : i32
    %c0_i32_1 = arith.constant 0 : i32
    return %c0_i32, %c0_i32_0 : i32, i32
  }
  func.func @transform_11(%arg0: i32) -> (i32, i32) {
    %c0_i32 = arith.constant 0 : i32
    %c0_i32_0 = arith.constant 0 : i32
    %c0_i32_1 = arith.constant 0 : i32
    return %c0_i32, %c0_i32_0 : i32, i32
  }
  func.func @transform_12(%arg0: i32) -> (i32, i32) {
    %c0_i32 = arith.constant 0 : i32
    %c0_i32_0 = arith.constant 0 : i32
    %c0_i32_1 = arith.constant 0 : i32
    return %c0_i32, %c0_i32_0 : i32, i32
  }
  func.func @transform_13(%arg0: i32) -> (i32, i32) {
    %c0_i32 = arith.constant 0 : i32
    %c0_i32_0 = arith.constant 0 : i32
    %c0_i32_1 = arith.constant 0 : i32
    return %c0_i32, %c0_i32_0 : i32, i32
  }
  func.func @transform_14(%arg0: i32) -> (i32, i32) {
    %c0_i32 = arith.constant 0 : i32
    %c0_i32_0 = arith.constant 0 : i32
    %c0_i32_1 = arith.constant 0 : i32
    return %c0_i32, %c0_i32_0 : i32, i32
  }
  func.func @transform_15(%arg0: i32) -> (i32, i32, i32) {
    %c0_i32 = arith.constant 0 : i32
    %c0_i32_0 = arith.constant 0 : i32
    %c0_i32_1 = arith.constant 0 : i32
    %c0_i32_2 = arith.constant 0 : i32
    return %c0_i32, %c0_i32_0, %c0_i32_1 : i32, i32, i32
  }
  func.func @transform_16(%arg0: i32) -> (i32, i32, i32) {
    %c0_i32 = arith.constant 0 : i32
    %c0_i32_0 = arith.constant 0 : i32
    %c0_i32_1 = arith.constant 0 : i32
    %c0_i32_2 = arith.constant 0 : i32
    return %c0_i32, %c0_i32_0, %c0_i32_1 : i32, i32, i32
  }
  func.func @transform_17(%arg0: i32) -> (i32, i32) {
    %c0_i32 = arith.constant 0 : i32
    %c0_i32_0 = arith.constant 0 : i32
    %c0_i32_1 = arith.constant 0 : i32
    return %c0_i32, %c0_i32_0 : i32, i32
  }
  func.func @transform_18(%arg0: i32) -> (i32, i32) {
    %c0_i32 = arith.constant 0 : i32
    %c0_i32_0 = arith.constant 0 : i32
    %c0_i32_1 = arith.constant 0 : i32
    return %c0_i32, %c0_i32_0 : i32, i32
  }
  func.func @transform_19(%arg0: i32) -> (i32, i32) {
    %c0_i32 = arith.constant 0 : i32
    %c0_i32_0 = arith.constant 0 : i32
    %c0_i32_1 = arith.constant 0 : i32
    return %c0_i32, %c0_i32_0 : i32, i32
  }
  func.func @transform_20(%arg0: i32) -> (i32, i32, i32) {
    %c0_i32 = arith.constant 0 : i32
    %c0_i32_0 = arith.constant 0 : i32
    %c0_i32_1 = arith.constant 0 : i32
    return %arg0, %c0_i32, %c0_i32_0 : i32, i32, i32
  }
}

</mosaic_0001>

<llo_original>
// kernel: ham_forward_pallas.1
$region0: #{ham_forward_pallas.1}
  #allocation0 [shape = 'u32[]', space=smem, size = 0x4, offset = 0x4, fixed_abs, tag = 'smem constant byte address 0x4 - core index']
  #allocation1 [shape = 'u32[144,128]{1,0:T(1,128)}', space=vmem, size = 0x12000, scoped, tag = 'internal scratch']
  %s0 = inlined_call_operand.hbm [shape: f32[4,16,128], index: 0, kind: input, shape index: {}]
  %s1 = inlined_call_operand.hbm [shape: bf16[128,384], index: 1, kind: input, shape index: {}]
  %s2 = inlined_call_operand.vmem [shape: f32[1,384], index: 2, kind: input, shape index: {}]
  %s3 = inlined_call_operand.hbm [shape: bf16[4,32,128], index: 3, kind: input, shape index: {}]
  %s4 = inlined_call_operand.vmem [shape: f32[1,128], index: 4, kind: input, shape index: {}]
  %s5 = inlined_call_operand.vmem [shape: f32[1,128], index: 5, kind: input, shape index: {}]
  %s6 = inlined_call_operand.vmem [shape: f32[1,128], index: 6, kind: input, shape index: {}]
  %s7 = inlined_call_operand.hbm [shape: bf16[3,128,128], index: 7, kind: input, shape index: {}]
  %s8 = inlined_call_operand.vmem [shape: f32[1,128], index: 8, kind: input, shape index: {}]
  %s9 = inlined_call_operand.hbm [shape: bf16[3,128,128], index: 9, kind: input, shape index: {}]
  %s10 = inlined_call_operand.vmem [shape: f32[1,128], index: 10, kind: input, shape index: {}]
  %s11 = inlined_call_operand.hbm [shape: bf16[128,256], index: 11, kind: input, shape index: {}]
  %s12 = inlined_call_operand.vmem [shape: f32[1,256], index: 12, kind: input, shape index: {}]
  %s13 = inlined_call_operand.hbm [shape: bf16[256,128], index: 13, kind: input, shape index: {}]
  %s14 = inlined_call_operand.vmem [shape: f32[1,128], index: 14, kind: input, shape index: {}]
  %s15 = inlined_call_operand.hbm [shape: bf16[3,128,128], index: 15, kind: input, shape index: {}]
  %s16 = inlined_call_operand.hbm [shape: bf16[3,128,128], index: 16, kind: input, shape index: {}]
  %s17 = inlined_call_operand.vmem [shape: f32[1,128], index: 17, kind: input, shape index: {}]
  %s18 = inlined_call_operand.vmem [shape: f32[1,128], index: 18, kind: input, shape index: {}]
  %s19 = inlined_call_operand.vmem [shape: f32[1,128], index: 19, kind: input, shape index: {}]
  %s20 = inlined_call_operand.hbm [shape: f32[4,16,128], index: 20, kind: output, shape index: {}]
  %s21 = sld [smem:[#allocation0]]
  $region149: #{ham_forward_pallas.1} parent=0
    _
  %s23 = ssub.s32 1, %s21
  %s24 = scalar_select 0, %s23, %s21
  $region1: #{ham_forward_pallas.1} parent=0
    #allocation2 [shape = 'u8[32768]{0}', space=vmem, size = 0x8000, scoped, tag = 'input window, operand 0']
    #allocation3 [shape = 's32[2]{0}', space=sflag, size = 0x8, scoped, tag = 'scoped memory for ham_forward_pallas.1']
    #allocation4 [shape = 's32[2]{0}', space=sflag, size = 0x8, scoped, tag = 'scoped memory for ham_forward_pallas.1']
    #allocation5 [shape = 'u8[98304]{0}', space=vmem, size = 0x18000, scoped, tag = 'input window, operand 1, single buffered']
    #allocation6 [shape = 's32[1]{0}', space=sflag, size = 0x4, scoped, tag = 'scoped memory for ham_forward_pallas.1']
    #allocation7 [shape = 'u8[32768]{0}', space=vmem, size = 0x8000, scoped, tag = 'input window, operand 3, single buffered']
    #allocation8 [shape = 'u8[98304]{0}', space=vmem, size = 0x18000, scoped, tag = 'input window, operand 7, single buffered']
    #allocation9 [shape = 's32[1]{0}', space=sflag, size = 0x4, scoped, tag = 'scoped memory for ham_forward_pallas.1']
    #allocation10 [shape = 'u8[98304]{0}', space=vmem, size = 0x18000, scoped, tag = 'input window, operand 9, single buffered']
    #allocation11 [shape = 'u8[65536]{0}', space=vmem, size = 0x10000, scoped, tag = 'input window, operand 11, single buffered']
    #allocation12 [shape = 's32[1]{0}', space=sflag, size = 0x4, scoped, tag = 'scoped memory for ham_forward_pallas.1']
    #allocation13 [shape = 'u8[65536]{0}', space=vmem, size = 0x10000, scoped, tag = 'input window, operand 13, single buffered']
    #allocation14 [shape = 'u8[98304]{0}', space=vmem, size = 0x18000, scoped, tag = 'input window, operand 15, single buffered']
    #allocation15 [shape = 's32[1]{0}', space=sflag, size = 0x4, scoped, tag = 'scoped memory for ham_forward_pallas.1']
    #allocation16 [shape = 'u8[98304]{0}', space=vmem, size = 0x18000, scoped, tag = 'input window, operand 16, single buffered']
    #allocation17 [shape = 'u8[32768]{0}', space=vmem, size = 0x8000, scoped, tag = 'output window, operand 0']
    %25 = vsyncpa [#allocation3], 0
    %s26 = scalar_lea.sflag [#allocation3], 1
    %27 = vsyncpa %s26, 0
    %28 = vsyncpa [#allocation6], 0
    %29 = vsyncpa [#allocation9], 0
    %30 = vsyncpa [#allocation12], 0
    %31 = vsyncpa [#allocation15], 0
    %32 = vsyncpa [#allocation4], 0
    %s33 = scalar_lea.sflag [#allocation4], 1
    %34 = vsyncpa %s33, 0
    loop: start=0, step=1, limit=4
    $region2: #{ham_forward_pallas.1} parent=1 // loop_pre_header
      _
    $region3: #{ham_forward_pallas.1} parent=1 // loop_header
      %s36 = sphi 0, %s40
      %p37 = scmp.ge.s32.totalorder %s36, 4
      %s46 = sphi 0, %s48
      %s49 = sphi 0, %s46
      %s50 = sphi 0, %s49
      %s66 = sphi 0, %s50
      %s70 = sphi 0, %s70
      %s72 = sphi 0, %s70
      %s73 = sphi 0, %s72
      %s87 = sphi 0, %s73
      %s91 = sphi 0, %s91
      %s93 = sphi 0, %s91
      %s94 = sphi 0, %s93
      %s108 = sphi 0, %s94
      %s112 = sphi 0, %s112
      %s114 = sphi 0, %s112
      %s115 = sphi 0, %s114
      %s129 = sphi 0, %s115
      %s133 = sphi 0, %s133
      %s135 = sphi 0, %s133
      %s136 = sphi 0, %s135
      %s150 = sphi 0, %s136
      %s154 = sphi 0, %s154
      %s156 = sphi 0, %s154
      %s157 = sphi 0, %s156
      %s171 = sphi 0, %s157
      %s175 = sphi 0, %s175
      %s177 = sphi 0, %s175
      %s178 = sphi 0, %s177
      %s192 = sphi 0, %s178
      %s196 = sphi 0, %s196
      %s198 = sphi 0, %s196
      %s199 = sphi 0, %s198
      %s213 = sphi 0, %s199
      %s217 = sphi 0, %s217
      %s219 = sphi 0, %s217
      %s220 = sphi 0, %s219
      %s234 = sphi 0, %s220
      %s238 = sphi 0, %s238
      %s240 = sphi 0, %s238
      %s241 = sphi 0, %s240
      %s255 = sphi 0, %s241
      %s259 = sphi 0, %s259
      %s261 = sphi 0, %s259
      %s262 = sphi 0, %s261
      %s276 = sphi 0, %s262
      %s280 = sphi 0, %s280
      %s282 = sphi 0, %s280
      %s283 = sphi 0, %s282
      %s297 = sphi 0, %s283
      %s301 = sphi 0, %s301
      %s303 = sphi 0, %s301
      %s304 = sphi 0, %s303
      %s318 = sphi 0, %s304
      %s322 = sphi 0, %s322
      %s324 = sphi 0, %s322
      %s325 = sphi 0, %s324
      %s339 = sphi 0, %s325
      %s343 = sphi 0, %s343
      %s345 = sphi 0, %s343
      %s346 = sphi 0, %s345
      %s360 = sphi 0, %s346
      %s364 = sphi 0, %s364
      %s366 = sphi 0, %s364
      %s367 = sphi 0, %s366
      %s381 = sphi 0, %s367
      %s385 = sphi 0, %s385
      %s387 = sphi 0, %s385
      %s388 = sphi 0, %s387
      %s402 = sphi 0, %s388
      %s406 = sphi 0, %s406
      %s408 = sphi 0, %s406
      %s409 = sphi 0, %s408
      %s423 = sphi 0, %s409
      %s427 = sphi 0, %s427
      %s429 = sphi 0, %s427
      %s430 = sphi 0, %s429
      %s444 = sphi 0, %s430
      %s448 = sphi 0, %s448
      %s450 = sphi 0, %s448
      %s451 = sphi 0, %s450
      %s465 = sphi 0, %s451
      %s471 = sphi 0, %s473
      %s474 = sphi 0, %s471
      %s475 = sphi 0, %s474
      %s491 = sphi 0, %s475
    $region4: #{ham_forward_pallas.1} parent=1 // loop_header_branch
      %39 = sbr.rel (%p37) target = $region8
    $region5: #{ham_forward_pallas.1} parent=1 // loop_body
      %s41 = ssub.s32 %s36, 1
      %s42 = ssub.s32 %s36, 2
      %s43 = sadd.s32 %s36, 1
      %s44 = ssub.s32 %s36, %s43
      %p45 = scmp.eq.s32.totalorder %s44, 0
      %s47 = sadd.s32 %s46, 1
      %s48 = scalar_select %p45, %s46, %s47
      %p51 = pneg %p45
      %p52 = scmp.eq.s32.totalorder %s36, 1
      %p53 = por %p51, %p52
      %p54 = scmp.ne.s32.totalorder %s46, %s49
      %p55 = scmp.eq.s32.totalorder %s36, 0
      %p56 = por %p54, %p55
      %p57 = scmp.ne.s32.totalorder %s46, %s49
      %p58 = scmp.eq.s32.totalorder %s41, 1
      %p59 = por %p57, %p58
      %p60 = scmp.ne.s32.totalorder %s49, %s50
      %p61 = scmp.eq.s32.totalorder %s41, 0
      %p62 = por %p60, %p61
      %p63 = scmp.ne.s32.totalorder %s49, %s50
      %p64 = scmp.eq.s32.totalorder %s42, 1
      %p65 = por %p63, %p64
      %p67 = scmp.ne.s32.totalorder %s50, %s66
      %p68 = scmp.eq.s32.totalorder %s42, 0
      %p69 = por %p67, %p68
      %s71 = sadd.s32 %s70, 1
      %p74 = scmp.eq.s32.totalorder %s36, 1
      %p75 = scmp.ne.s32.totalorder %s70, %s72
      %p76 = scmp.eq.s32.totalorder %s36, 0
      %p77 = por %p75, %p76
      %p78 = scmp.ne.s32.totalorder %s70, %s72
      %p79 = scmp.eq.s32.totalorder %s41, 1
      %p80 = por %p78, %p79
      %p81 = scmp.ne.s32.totalorder %s72, %s73
      %p82 = scmp.eq.s32.totalorder %s41, 0
      %p83 = por %p81, %p82
      %p84 = scmp.ne.s32.totalorder %s72, %s73
      %p85 = scmp.eq.s32.totalorder %s42, 1
      %p86 = por %p84, %p85
      %p88 = scmp.ne.s32.totalorder %s73, %s87
      %p89 = scmp.eq.s32.totalorder %s42, 0
      %p90 = por %p88, %p89
      %s92 = sadd.s32 %s91, 1
      %p95 = scmp.eq.s32.totalorder %s36, 1
      %p96 = scmp.ne.s32.totalorder %s91, %s93
      %p97 = scmp.eq.s32.totalorder %s36, 0
      %p98 = por %p96, %p97
      %p99 = scmp.ne.s32.totalorder %s91, %s93
      %p100 = scmp.eq.s32.totalorder %s41, 1
      %p101 = por %p99, %p100
      %p102 = scmp.ne.s32.totalorder %s93, %s94
      %p103 = scmp.eq.s32.totalorder %s41, 0
      %p104 = por %p102, %p103
      %p105 = scmp.ne.s32.totalorder %s93, %s94
      %p106 = scmp.eq.s32.totalorder %s42, 1
      %p107 = por %p105, %p106
      %p109 = scmp.ne.s32.totalorder %s94, %s108
      %p110 = scmp.eq.s32.totalorder %s42, 0
      %p111 = por %p109, %p110
      %s113 = sadd.s32 %s112, 1
      %p116 = scmp.eq.s32.totalorder %s36, 1
      %p117 = scmp.ne.s32.totalorder %s112, %s114
      %p118 = scmp.eq.s32.totalorder %s36, 0
      %p119 = por %p117, %p118
      %p120 = scmp.ne.s32.totalorder %s112, %s114
      %p121 = scmp.eq.s32.totalorder %s41, 1
      %p122 = por %p120, %p121
      %p123 = scmp.ne.s32.totalorder %s114, %s115
      %p124 = scmp.eq.s32.totalorder %s41, 0
      %p125 = por %p123, %p124
      %p126 = scmp.ne.s32.totalorder %s114, %s115
      %p127 = scmp.eq.s32.totalorder %s42, 1
      %p128 = por %p126, %p127
      %p130 = scmp.ne.s32.totalorder %s115, %s129
      %p131 = scmp.eq.s32.totalorder %s42, 0
      %p132 = por %p130, %p131
      %s134 = sadd.s32 %s133, 1
      %p137 = scmp.eq.s32.totalorder %s36, 1
      %p138 = scmp.ne.s32.totalorder %s133, %s135
      %p139 = scmp.eq.s32.totalorder %s36, 0
      %p140 = por %p138, %p139
      %p141 = scmp.ne.s32.totalorder %s133, %s135
      %p142 = scmp.eq.s32.totalorder %s41, 1
      %p143 = por %p141, %p142
      %p144 = scmp.ne.s32.totalorder %s135, %s136
      %p145 = scmp.eq.s32.totalorder %s41, 0
      %p146 = por %p144, %p145
      %p147 = scmp.ne.s32.totalorder %s135, %s136
      %p148 = scmp.eq.s32.totalorder %s42, 1
      %p149 = por %p147, %p148
      %p151 = scmp.ne.s32.totalorder %s136, %s150
      %p152 = scmp.eq.s32.totalorder %s42, 0
      %p153 = por %p151, %p152
      %s155 = sadd.s32 %s154, 1
      %p158 = scmp.eq.s32.totalorder %s36, 1
      %p159 = scmp.ne.s32.totalorder %s154, %s156
      %p160 = scmp.eq.s32.totalorder %s36, 0
      %p161 = por %p159, %p160
      %p162 = scmp.ne.s32.totalorder %s154, %s156
      %p163 = scmp.eq.s32.totalorder %s41, 1
      %p164 = por %p162, %p163
      %p165 = scmp.ne.s32.totalorder %s156, %s157
      %p166 = scmp.eq.s32.totalorder %s41, 0
      %p167 = por %p165, %p166
      %p168 = scmp.ne.s32.totalorder %s156, %s157
      %p169 = scmp.eq.s32.totalorder %s42, 1
      %p170 = por %p168, %p169
      %p172 = scmp.ne.s32.totalorder %s157, %s171
      %p173 = scmp.eq.s32.totalorder %s42, 0
      %p174 = por %p172, %p173
      %s176 = sadd.s32 %s175, 1
      %p179 = scmp.eq.s32.totalorder %s36, 1
      %p180 = scmp.ne.s32.totalorder %s175, %s177
      %p181 = scmp.eq.s32.totalorder %s36, 0
      %p182 = por %p180, %p181
      %p183 = scmp.ne.s32.totalorder %s175, %s177
      %p184 = scmp.eq.s32.totalorder %s41, 1
      %p185 = por %p183, %p184
      %p186 = scmp.ne.s32.totalorder %s177, %s178
      %p187 = scmp.eq.s32.totalorder %s41, 0
      %p188 = por %p186, %p187
      %p189 = scmp.ne.s32.totalorder %s177, %s178
      %p190 = scmp.eq.s32.totalorder %s42, 1
      %p191 = por %p189, %p190
      %p193 = scmp.ne.s32.totalorder %s178, %s192
      %p194 = scmp.eq.s32.totalorder %s42, 0
      %p195 = por %p193, %p194
      %s197 = sadd.s32 %s196, 1
      %p200 = scmp.eq.s32.totalorder %s36, 1
      %p201 = scmp.ne.s32.totalorder %s196, %s198
      %p202 = scmp.eq.s32.totalorder %s36, 0
      %p203 = por %p201, %p202
      %p204 = scmp.ne.s32.totalorder %s196, %s198
      %p205 = scmp.eq.s32.totalorder %s41, 1
      %p206 = por %p204, %p205
      %p207 = scmp.ne.s32.totalorder %s198, %s199
      %p208 = scmp.eq.s32.totalorder %s41, 0
      %p209 = por %p207, %p208
      %p210 = scmp.ne.s32.totalorder %s198, %s199
      %p211 = scmp.eq.s32.totalorder %s42, 1
      %p212 = por %p210, %p211
      %p214 = scmp.ne.s32.totalorder %s199, %s213
      %p215 = scmp.eq.s32.totalorder %s42, 0
      %p216 = por %p214, %p215
      %s218 = sadd.s32 %s217, 1
      %p221 = scmp.eq.s32.totalorder %s36, 1
      %p222 = scmp.ne.s32.totalorder %s217, %s219
      %p223 = scmp.eq.s32.totalorder %s36, 0
      %p224 = por %p222, %p223
      %p225 = scmp.ne.s32.totalorder %s217, %s219
      %p226 = scmp.eq.s32.totalorder %s41, 1
      %p227 = por %p225, %p226
      %p228 = scmp.ne.s32.totalorder %s219, %s220
      %p229 = scmp.eq.s32.totalorder %s41, 0
      %p230 = por %p228, %p229
      %p231 = scmp.ne.s32.totalorder %s219, %s220
      %p232 = scmp.eq.s32.totalorder %s42, 1
      %p233 = por %p231, %p232
      %p235 = scmp.ne.s32.totalorder %s220, %s234
      %p236 = scmp.eq.s32.totalorder %s42, 0
      %p237 = por %p235, %p236
      %s239 = sadd.s32 %s238, 1
      %p242 = scmp.eq.s32.totalorder %s36, 1
      %p243 = scmp.ne.s32.totalorder %s238, %s240
      %p244 = scmp.eq.s32.totalorder %s36, 0
      %p245 = por %p243, %p244
      %p246 = scmp.ne.s32.totalorder %s238, %s240
      %p247 = scmp.eq.s32.totalorder %s41, 1
      %p248 = por %p246, %p247
      %p249 = scmp.ne.s32.totalorder %s240, %s241
      %p250 = scmp.eq.s32.totalorder %s41, 0
      %p251 = por %p249, %p250
      %p252 = scmp.ne.s32.totalorder %s240, %s241
      %p253 = scmp.eq.s32.totalorder %s42, 1
      %p254 = por %p252, %p253
      %p256 = scmp.ne.s32.totalorder %s241, %s255
      %p257 = scmp.eq.s32.totalorder %s42, 0
      %p258 = por %p256, %p257
      %s260 = sadd.s32 %s259, 1
      %p263 = scmp.eq.s32.totalorder %s36, 1
      %p264 = scmp.ne.s32.totalorder %s259, %s261
      %p265 = scmp.eq.s32.totalorder %s36, 0
      %p266 = por %p264, %p265
      %p267 = scmp.ne.s32.totalorder %s259, %s261
      %p268 = scmp.eq.s32.totalorder %s41, 1
      %p269 = por %p267, %p268
      %p270 = scmp.ne.s32.totalorder %s261, %s262
      %p271 = scmp.eq.s32.totalorder %s41, 0
      %p272 = por %p270, %p271
      %p273 = scmp.ne.s32.totalorder %s261, %s262
      %p274 = scmp.eq.s32.totalorder %s42, 1
      %p275 = por %p273, %p274
      %p277 = scmp.ne.s32.totalorder %s262, %s276
      %p278 = scmp.eq.s32.totalorder %s42, 0
      %p279 = por %p277, %p278
      %s281 = sadd.s32 %s280, 1
      %p284 = scmp.eq.s32.totalorder %s36, 1
      %p285 = scmp.ne.s32.totalorder %s280, %s282
      %p286 = scmp.eq.s32.totalorder %s36, 0
      %p287 = por %p285, %p286
      %p288 = scmp.ne.s32.totalorder %s280, %s282
      %p289 = scmp.eq.s32.totalorder %s41, 1
      %p290 = por %p288, %p289
      %p291 = scmp.ne.s32.totalorder %s282, %s283
      %p292 = scmp.eq.s32.totalorder %s41, 0
      %p293 = por %p291, %p292
      %p294 = scmp.ne.s32.totalorder %s282, %s283
      %p295 = scmp.eq.s32.totalorder %s42, 1
      %p296 = por %p294, %p295
      %p298 = scmp.ne.s32.totalorder %s283, %s297
      %p299 = scmp.eq.s32.totalorder %s42, 0
      %p300 = por %p298, %p299
      %s302 = sadd.s32 %s301, 1
      %p305 = scmp.eq.s32.totalorder %s36, 1
      %p306 = scmp.ne.s32.totalorder %s301, %s303
      %p307 = scmp.eq.s32.totalorder %s36, 0
      %p308 = por %p306, %p307
      %p309 = scmp.ne.s32.totalorder %s301, %s303
      %p310 = scmp.eq.s32.totalorder %s41, 1
      %p311 = por %p309, %p310
      %p312 = scmp.ne.s32.totalorder %s303, %s304
      %p313 = scmp.eq.s32.totalorder %s41, 0
      %p314 = por %p312, %p313
      %p315 = scmp.ne.s32.totalorder %s303, %s304
      %p316 = scmp.eq.s32.totalorder %s42, 1
      %p317 = por %p315, %p316
      %p319 = scmp.ne.s32.totalorder %s304, %s318
      %p320 = scmp.eq.s32.totalorder %s42, 0
      %p321 = por %p319, %p320
      %s323 = sadd.s32 %s322, 1
      %p326 = scmp.eq.s32.totalorder %s36, 1
      %p327 = scmp.ne.s32.totalorder %s322, %s324
      %p328 = scmp.eq.s32.totalorder %s36, 0
      %p329 = por %p327, %p328
      %p330 = scmp.ne.s32.totalorder %s322, %s324
      %p331 = scmp.eq.s32.totalorder %s41, 1
      %p332 = por %p330, %p331
      %p333 = scmp.ne.s32.totalorder %s324, %s325
      %p334 = scmp.eq.s32.totalorder %s41, 0
      %p335 = por %p333, %p334
      %p336 = scmp.ne.s32.totalorder %s324, %s325
      %p337 = scmp.eq.s32.totalorder %s42, 1
      %p338 = por %p336, %p337
      %p340 = scmp.ne.s32.totalorder %s325, %s339
      %p341 = scmp.eq.s32.totalorder %s42, 0
      %p342 = por %p340, %p341
      %s344 = sadd.s32 %s343, 1
      %p347 = scmp.eq.s32.totalorder %s36, 1
      %p348 = scmp.ne.s32.totalorder %s343, %s345
      %p349 = scmp.eq.s32.totalorder %s36, 0
      %p350 = por %p348, %p349
      %p351 = scmp.ne.s32.totalorder %s343, %s345
      %p352 = scmp.eq.s32.totalorder %s41, 1
      %p353 = por %p351, %p352
      %p354 = scmp.ne.s32.totalorder %s345, %s346
      %p355 = scmp.eq.s32.totalorder %s41, 0
      %p356 = por %p354, %p355
      %p357 = scmp.ne.s32.totalorder %s345, %s346
      %p358 = scmp.eq.s32.totalorder %s42, 1
      %p359 = por %p357, %p358
      %p361 = scmp.ne.s32.totalorder %s346, %s360
      %p362 = scmp.eq.s32.totalorder %s42, 0
      %p363 = por %p361, %p362
      %s365 = sadd.s32 %s364, 1
      %p368 = scmp.eq.s32.totalorder %s36, 1
      %p369 = scmp.ne.s32.totalorder %s364, %s366
      %p370 = scmp.eq.s32.totalorder %s36, 0
      %p371 = por %p369, %p370
      %p372 = scmp.ne.s32.totalorder %s364, %s366
      %p373 = scmp.eq.s32.totalorder %s41, 1
      %p374 = por %p372, %p373
      %p375 = scmp.ne.s32.totalorder %s366, %s367
      %p376 = scmp.eq.s32.totalorder %s41, 0
      %p377 = por %p375, %p376
      %p378 = scmp.ne.s32.totalorder %s366, %s367
      %p379 = scmp.eq.s32.totalorder %s42, 1
      %p380 = por %p378, %p379
      %p382 = scmp.ne.s32.totalorder %s367, %s381
      %p383 = scmp.eq.s32.totalorder %s42, 0
      %p384 = por %p382, %p383
      %s386 = sadd.s32 %s385, 1
      %p389 = scmp.eq.s32.totalorder %s36, 1
      %p390 = scmp.ne.s32.totalorder %s385, %s387
      %p391 = scmp.eq.s32.totalorder %s36, 0
      %p392 = por %p390, %p391
      %p393 = scmp.ne.s32.totalorder %s385, %s387
      %p394 = scmp.eq.s32.totalorder %s41, 1
      %p395 = por %p393, %p394
      %p396 = scmp.ne.s32.totalorder %s387, %s388
      %p397 = scmp.eq.s32.totalorder %s41, 0
      %p398 = por %p396, %p397
      %p399 = scmp.ne.s32.totalorder %s387, %s388
      %p400 = scmp.eq.s32.totalorder %s42, 1
      %p401 = por %p399, %p400
      %p403 = scmp.ne.s32.totalorder %s388, %s402
      %p404 = scmp.eq.s32.totalorder %s42, 0
      %p405 = por %p403, %p404
      %s407 = sadd.s32 %s406, 1
      %p410 = scmp.eq.s32.totalorder %s36, 1
      %p411 = scmp.ne.s32.totalorder %s406, %s408
      %p412 = scmp.eq.s32.totalorder %s36, 0
      %p413 = por %p411, %p412
      %p414 = scmp.ne.s32.totalorder %s406, %s408
      %p415 = scmp.eq.s32.totalorder %s41, 1
      %p416 = por %p414, %p415
      %p417 = scmp.ne.s32.totalorder %s408, %s409
      %p418 = scmp.eq.s32.totalorder %s41, 0
      %p419 = por %p417, %p418
      %p420 = scmp.ne.s32.totalorder %s408, %s409
      %p421 = scmp.eq.s32.totalorder %s42, 1
      %p422 = por %p420, %p421
      %p424 = scmp.ne.s32.totalorder %s409, %s423
      %p425 = scmp.eq.s32.totalorder %s42, 0
      %p426 = por %p424, %p425
      %s428 = sadd.s32 %s427, 1
      %p431 = scmp.eq.s32.totalorder %s36, 1
      %p432 = scmp.ne.s32.totalorder %s427, %s429
      %p433 = scmp.eq.s32.totalorder %s36, 0
      %p434 = por %p432, %p433
      %p435 = scmp.ne.s32.totalorder %s427, %s429
      %p436 = scmp.eq.s32.totalorder %s41, 1
      %p437 = por %p435, %p436
      %p438 = scmp.ne.s32.totalorder %s429, %s430
      %p439 = scmp.eq.s32.totalorder %s41, 0
      %p440 = por %p438, %p439
      %p441 = scmp.ne.s32.totalorder %s429, %s430
      %p442 = scmp.eq.s32.totalorder %s42, 1
      %p443 = por %p441, %p442
      %p445 = scmp.ne.s32.totalorder %s430, %s444
      %p446 = scmp.eq.s32.totalorder %s42, 0
      %p447 = por %p445, %p446
      %s449 = sadd.s32 %s448, 1
      %p452 = scmp.eq.s32.totalorder %s36, 1
      %p453 = scmp.ne.s32.totalorder %s448, %s450
      %p454 = scmp.eq.s32.totalorder %s36, 0
      %p455 = por %p453, %p454
      %p456 = scmp.ne.s32.totalorder %s448, %s450
      %p457 = scmp.eq.s32.totalorder %s41, 1
      %p458 = por %p456, %p457
      %p459 = scmp.ne.s32.totalorder %s450, %s451
      %p460 = scmp.eq.s32.totalorder %s41, 0
      %p461 = por %p459, %p460
      %p462 = scmp.ne.s32.totalorder %s450, %s451
      %p463 = scmp.eq.s32.totalorder %s42, 1
      %p464 = por %p462, %p463
      %p466 = scmp.ne.s32.totalorder %s451, %s465
      %p467 = scmp.eq.s32.totalorder %s42, 0
      %p468 = por %p466, %p467
      %s469 = ssub.s32 %s36, %s43
      %p470 = scmp.eq.s32.totalorder %s469, 0
      %s472 = sadd.s32 %s471, 1
      %s473 = scalar_select %p470, %s471, %s472
      %p476 = pneg %p470
      %p477 = scmp.eq.s32.totalorder %s36, 1
      %p478 = por %p476, %p477
      %p479 = scmp.ne.s32.totalorder %s471, %s474
      %p480 = scmp.eq.s32.totalorder %s36, 0
      %p481 = por %p479, %p480
      %p482 = scmp.ne.s32.totalorder %s471, %s474
      %p483 = scmp.eq.s32.totalorder %s41, 1
      %p484 = por %p482, %p483
      %p485 = scmp.ne.s32.totalorder %s474, %s475
      %p486 = scmp.eq.s32.totalorder %s41, 0
      %p487 = por %p485, %p486
      %p488 = scmp.ne.s32.totalorder %s474, %s475
      %p489 = scmp.eq.s32.totalorder %s42, 1
      %p490 = por %p488, %p489
      %p492 = scmp.ne.s32.totalorder %s475, %s491
      %p493 = scmp.eq.s32.totalorder %s42, 0
      %p494 = por %p492, %p493
      %p495 = scmp.le.s32.totalorder 1, %s36
      %p496 = scmp.lt.s32.totalorder %s36, 3
      %p497 = pnand %p495, %p496
      %p498 = pneg %p497
      // Predicated region
      $region9: #{ham_forward_pallas.1} parent=5 // pred_check
        _
      $region10: #{ham_forward_pallas.1} parent=5 // pred_check_branch
        %500 = sbr.rel (%p497) target = $region12
      $region11: #{ham_forward_pallas.1} parent=5 // pred_region
        %s501 = ssub.s32 %s36, 1
        // Predicated region
        $region13: #{ham_forward_pallas.1} parent=11 // pred_check
          %p502 = pneg %p83
        $region14: #{ham_forward_pallas.1} parent=11 // pred_check_branch
          %504 = sbr.rel (%p502) target = $region16
        $region15: #{ham_forward_pallas.1} parent=11 // pred_region
          %s506 = ssub.s32 3072, 3072
          %507 = vsyncadd [#allocation6], %s506
          %s508 = sshll.u32 [#allocation5], 4
          %s509 = int_to_ptr.vmem [resolvable:$true] %s508
          %514 = dma.hbm_to_vmem [thread:$0]  %s1, 3072, %s509, [#allocation6], 192, 192, 12
        $region16: #{ham_forward_pallas.1} parent=11 // pred_fallthru
          _
        // Predicated region
        $region17: #{ham_forward_pallas.1} parent=11 // pred_check
          %p515 = pneg %p104
        $region18: #{ham_forward_pallas.1} parent=11 // pred_check_branch
          %517 = sbr.rel (%p515) target = $region20
        $region19: #{ham_forward_pallas.1} parent=11 // pred_region
          _
        $region20: #{ham_forward_pallas.1} parent=11 // pred_fallthru
          _
        // Predicated region
        $region21: #{ham_forward_pallas.1} parent=11 // pred_check
          %p518 = pneg %p125
        $region22: #{ham_forward_pallas.1} parent=11 // pred_check_branch
          %520 = sbr.rel (%p518) target = $region24
        $region23: #{ham_forward_pallas.1} parent=11 // pred_region
          %s522 = ssub.s32 1024, 1024
          %523 = vsyncadd [#allocation6], %s522
          %s524 = sshll.u32 [#allocation7], 4
          %s525 = int_to_ptr.vmem [resolvable:$true] %s524
          %530 = dma.hbm_to_vmem [thread:$0]  %s3, 1024, %s525, [#allocation6], 64, 64, 4
        $region24: #{ham_forward_pallas.1} parent=11 // pred_fallthru
          _
        // Predicated region
        $region25: #{ham_forward_pallas.1} parent=11 // pred_check
          %p531 = pneg %p146
        $region26: #{ham_forward_pallas.1} parent=11 // pred_check_branch
          %533 = sbr.rel (%p531) target = $region28
        $region27: #{ham_forward_pallas.1} parent=11 // pred_region
          _
        $region28: #{ham_forward_pallas.1} parent=11 // pred_fallthru
          _
        // Predicated region
        $region29: #{ham_forward_pallas.1} parent=11 // pred_check
          %p534 = pneg %p167
        $region30: #{ham_forward_pallas.1} parent=11 // pred_check_branch
          %536 = sbr.rel (%p534) target = $region32
        $region31: #{ham_forward_pallas.1} parent=11 // pred_region
          _
        $region32: #{ham_forward_pallas.1} parent=11 // pred_fallthru
          _
        // Predicated region
        $region33: #{ham_forward_pallas.1} parent=11 // pred_check
          %p537 = pneg %p188
        $region34: #{ham_forward_pallas.1} parent=11 // pred_check_branch
          %539 = sbr.rel (%p537) target = $region36
        $region35: #{ham_forward_pallas.1} parent=11 // pred_region
          _
        $region36: #{ham_forward_pallas.1} parent=11 // pred_fallthru
          _
        // Predicated region
        $region37: #{ham_forward_pallas.1} parent=11 // pred_check
          %p540 = pneg %p209
        $region38: #{ham_forward_pallas.1} parent=11 // pred_check_branch
          %542 = sbr.rel (%p540) target = $region40
        $region39: #{ham_forward_pallas.1} parent=11 // pred_region
          %s544 = ssub.s32 3072, 3072
          %545 = vsyncadd [#allocation9], %s544
          %s546 = sshll.u32 [#allocation8], 4
          %s547 = int_to_ptr.vmem [resolvable:$true] %s546
          %552 = dma.hbm_to_vmem [thread:$0]  %s7, 3072, %s547, [#allocation9], 64, 64, 4
        $region40: #{ham_forward_pallas.1} parent=11 // pred_fallthru
          _
        // Predicated region
        $region41: #{ham_forward_pallas.1} parent=11 // pred_check
          %p553 = pneg %p230
        $region42: #{ham_forward_pallas.1} parent=11 // pred_check_branch
          %555 = sbr.rel (%p553) target = $region44
        $region43: #{ham_forward_pallas.1} parent=11 // pred_region
          _
        $region44: #{ham_forward_pallas.1} parent=11 // pred_fallthru
          _
        // Predicated region
        $region45: #{ham_forward_pallas.1} parent=11 // pred_check
          %p556 = pneg %p251
        $region46: #{ham_forward_pallas.1} parent=11 // pred_check_branch
          %558 = sbr.rel (%p556) target = $region48
        $region47: #{ham_forward_pallas.1} parent=11 // pred_region
          %s560 = ssub.s32 3072, 3072
          %561 = vsyncadd [#allocation9], %s560
          %s562 = sshll.u32 [#allocation10], 4
          %s563 = int_to_ptr.vmem [resolvable:$true] %s562
          %568 = dma.hbm_to_vmem [thread:$0]  %s9, 3072, %s563, [#allocation9], 64, 64, 4
        $region48: #{ham_forward_pallas.1} parent=11 // pred_fallthru
          _
        // Predicated region
        $region49: #{ham_forward_pallas.1} parent=11 // pred_check
          %p569 = pneg %p272
        $region50: #{ham_forward_pallas.1} parent=11 // pred_check_branch
          %571 = sbr.rel (%p569) target = $region52
        $region51: #{ham_forward_pallas.1} parent=11 // pred_region
          _
        $region52: #{ham_forward_pallas.1} parent=11 // pred_fallthru
          _
        // Predicated region
        $region53: #{ham_forward_pallas.1} parent=11 // pred_check
          %p572 = pneg %p293
        $region54: #{ham_forward_pallas.1} parent=11 // pred_check_branch
          %574 = sbr.rel (%p572) target = $region56
        $region55: #{ham_forward_pallas.1} parent=11 // pred_region
          %s576 = ssub.s32 2048, 2048
          %577 = vsyncadd [#allocation12], %s576
          %s578 = sshll.u32 [#allocation11], 4
          %s579 = int_to_ptr.vmem [resolvable:$true] %s578
          %584 = dma.hbm_to_vmem [thread:$0]  %s11, 2048, %s579, [#allocation12], 128, 128, 8
        $region56: #{ham_forward_pallas.1} parent=11 // pred_fallthru
          _
        // Predicated region
        $region57: #{ham_forward_pallas.1} parent=11 // pred_check
          %p585 = pneg %p314
        $region58: #{ham_forward_pallas.1} parent=11 // pred_check_branch
          %587 = sbr.rel (%p585) target = $region60
        $region59: #{ham_forward_pallas.1} parent=11 // pred_region
          _
        $region60: #{ham_forward_pallas.1} parent=11 // pred_fallthru
          _
        // Predicated region
        $region61: #{ham_forward_pallas.1} parent=11 // pred_check
          %p588 = pneg %p335
        $region62: #{ham_forward_pallas.1} parent=11 // pred_check_branch
          %590 = sbr.rel (%p588) target = $region64
        $region63: #{ham_forward_pallas.1} parent=11 // pred_region
          %s592 = ssub.s32 2048, 2048
          %593 = vsyncadd [#allocation12], %s592
          %s594 = sshll.u32 [#allocation13], 4
          %s595 = int_to_ptr.vmem [resolvable:$true] %s594
          %600 = dma.hbm_to_vmem [thread:$0]  %s13, 2048, %s595, [#allocation12], 64, 64, 4
        $region64: #{ham_forward_pallas.1} parent=11 // pred_fallthru
          _
        // Predicated region
        $region65: #{ham_forward_pallas.1} parent=11 // pred_check
          %p601 = pneg %p356
        $region66: #{ham_forward_pallas.1} parent=11 // pred_check_branch
          %603 = sbr.rel (%p601) target = $region68
        $region67: #{ham_forward_pallas.1} parent=11 // pred_region
          _
        $region68: #{ham_forward_pallas.1} parent=11 // pred_fallthru
          _
        // Predicated region
        $region69: #{ham_forward_pallas.1} parent=11 // pred_check
          %p604 = pneg %p377
        $region70: #{ham_forward_pallas.1} parent=11 // pred_check_branch
          %606 = sbr.rel (%p604) target = $region72
        $region71: #{ham_forward_pallas.1} parent=11 // pred_region
          %s608 = ssub.s32 3072, 3072
          %609 = vsyncadd [#allocation15], %s608
          %s610 = sshll.u32 [#allocation14], 4
          %s611 = int_to_ptr.vmem [resolvable:$true] %s610
          %616 = dma.hbm_to_vmem [thread:$0]  %s15, 3072, %s611, [#allocation15], 64, 64, 4
        $region72: #{ham_forward_pallas.1} parent=11 // pred_fallthru
          _
        // Predicated region
        $region73: #{ham_forward_pallas.1} parent=11 // pred_check
          %p617 = pneg %p398
        $region74: #{ham_forward_pallas.1} parent=11 // pred_check_branch
          %619 = sbr.rel (%p617) target = $region76
        $region75: #{ham_forward_pallas.1} parent=11 // pred_region
          %s621 = ssub.s32 3072, 3072
          %622 = vsyncadd [#allocation15], %s621
          %s623 = sshll.u32 [#allocation16], 4
          %s624 = int_to_ptr.vmem [resolvable:$true] %s623
          %629 = dma.hbm_to_vmem [thread:$0]  %s16, 3072, %s624, [#allocation15], 64, 64, 4
        $region76: #{ham_forward_pallas.1} parent=11 // pred_fallthru
          _
        // Predicated region
        $region77: #{ham_forward_pallas.1} parent=11 // pred_check
          %p630 = pneg %p419
        $region78: #{ham_forward_pallas.1} parent=11 // pred_check_branch
          %632 = sbr.rel (%p630) target = $region80
        $region79: #{ham_forward_pallas.1} parent=11 // pred_region
          _
        $region80: #{ham_forward_pallas.1} parent=11 // pred_fallthru
          _
        // Predicated region
        $region81: #{ham_forward_pallas.1} parent=11 // pred_check
          %p633 = pneg %p440
        $region82: #{ham_forward_pallas.1} parent=11 // pred_check_branch
          %635 = sbr.rel (%p633) target = $region84
        $region83: #{ham_forward_pallas.1} parent=11 // pred_region
          _
        $region84: #{ham_forward_pallas.1} parent=11 // pred_fallthru
          _
        // Predicated region
        $region85: #{ham_forward_pallas.1} parent=11 // pred_check
          %p636 = pneg %p461
        $region86: #{ham_forward_pallas.1} parent=11 // pred_check_branch
          %638 = sbr.rel (%p636) target = $region88
        $region87: #{ham_forward_pallas.1} parent=11 // pred_region
          _
        $region88: #{ham_forward_pallas.1} parent=11 // pred_fallthru
          _
      $region12: #{ham_forward_pallas.1} parent=5 // pred_fallthru
        _
      %p639 = scmp.lt.s32.totalorder %s36, 2
      // Predicated region
      $region89: #{ham_forward_pallas.1} parent=5 // pred_check
        %p640 = pneg %p639
      $region90: #{ham_forward_pallas.1} parent=5 // pred_check_branch
        %642 = sbr.rel (%p640) target = $region92
      $region91: #{ham_forward_pallas.1} parent=5 // pred_region
        // Predicated region
        $region93: #{ham_forward_pallas.1} parent=91 // pred_check
          %p643 = pneg %p56
        $region94: #{ham_forward_pallas.1} parent=91 // pred_check_branch
          %645 = sbr.rel (%p643) target = $region96
        $region95: #{ham_forward_pallas.1} parent=91 // pred_region
          %s646 = sand.u32 %s46, 1
          %s647 = scalar_lea.sflag [#allocation3], %s646
          %s648 = sand.u32 %s46, 1
          %s649 = smul.addr %s648, 32
          %s650 = scalar_lea.vmem [#allocation2], %s649
          %s651 = smul.u32 2, %s36
          %s653 = ssub.s32 512, 512
          %654 = vsyncadd %s647, %s653
          %s655 = smul.addr %s651, 2
          %s656 = smul.addr %s655, 128
          %s657 = scalar_lea.hbm %s0, %s656
          %s658 = sshll.u32 %s650, 4
          %s659 = int_to_ptr.vmem [resolvable:$true] %s658
          %664 = dma.hbm_to_vmem [thread:$0]  %s657, 512, %s659, %s647, 128, 128, 8
        $region96: #{ham_forward_pallas.1} parent=91 // pred_fallthru
          _
      $region92: #{ham_forward_pallas.1} parent=5 // pred_fallthru
        _
      %p665 = scmp.le.s32.totalorder 1, %s36
      %p666 = scmp.lt.s32.totalorder %s36, 3
      %p667 = pnand %p665, %p666
      %p668 = pneg %p667
      // Predicated region
      $region97: #{ham_forward_pallas.1} parent=5 // pred_check
        _
      $region98: #{ham_forward_pallas.1} parent=5 // pred_check_branch
        %670 = sbr.rel (%p667) target = $region100
      $region99: #{ham_forward_pallas.1} parent=5 // pred_region
        %s671 = ssub.s32 %s36, 1
        %s672 = sand.u32 %s49, 1
        %s673 = scalar_lea.sflag [#allocation3], %s672
        %s674 = sand.u32 %s49, 1
        %s675 = smul.addr %s674, 32
        %s676 = scalar_lea.vmem [#allocation2], %s675
        // Predicated region
        $region101: #{ham_forward_pallas.1} parent=99 // pred_check
          %p677 = pneg %p62
        $region102: #{ham_forward_pallas.1} parent=99 // pred_check_branch
          %679 = sbr.rel (%p677) target = $region104
        $region103: #{ham_forward_pallas.1} parent=99 // pred_region
          %680 = dma.done %s673, 512
        $region104: #{ham_forward_pallas.1} parent=99 // pred_fallthru
          _
        // Predicated region
        $region105: #{ham_forward_pallas.1} parent=99 // pred_check
          %p681 = pneg %p83
        $region106: #{ham_forward_pallas.1} parent=99 // pred_check_branch
          %683 = sbr.rel (%p681) target = $region108
        $region107: #{ham_forward_pallas.1} parent=99 // pred_region
          %684 = dma.done [#allocation6], 3072
        $region108: #{ham_forward_pallas.1} parent=99 // pred_fallthru
          _
        // Predicated region
        $region109: #{ham_forward_pallas.1} parent=99 // pred_check
          %p685 = pneg %p125
        $region110: #{ham_forward_pallas.1} parent=99 // pred_check_branch
          %687 = sbr.rel (%p685) target = $region112
        $region111: #{ham_forward_pallas.1} parent=99 // pred_region
          %688 = dma.done [#allocation6], 1024
        $region112: #{ham_forward_pallas.1} parent=99 // pred_fallthru
          _
        // Predicated region
        $region113: #{ham_forward_pallas.1} parent=99 // pred_check
          %p689 = pneg %p209
        $region114: #{ham_forward_pallas.1} parent=99 // pred_check_branch
          %691 = sbr.rel (%p689) target = $region116
        $region115: #{ham_forward_pallas.1} parent=99 // pred_region
          %692 = dma.done [#allocation9], 3072
        $region116: #{ham_forward_pallas.1} parent=99 // pred_fallthru
          _
        // Predicated region
        $region117: #{ham_forward_pallas.1} parent=99 // pred_check
          %p693 = pneg %p251
        $region118: #{ham_forward_pallas.1} parent=99 // pred_check_branch
          %695 = sbr.rel (%p693) target = $region120
        $region119: #{ham_forward_pallas.1} parent=99 // pred_region
          %696 = dma.done [#allocation9], 3072
        $region120: #{ham_forward_pallas.1} parent=99 // pred_fallthru
          _
        // Predicated region
        $region121: #{ham_forward_pallas.1} parent=99 // pred_check
          %p697 = pneg %p293
        $region122: #{ham_forward_pallas.1} parent=99 // pred_check_branch
          %699 = sbr.rel (%p697) target = $region124
        $region123: #{ham_forward_pallas.1} parent=99 // pred_region
          %700 = dma.done [#allocation12], 2048
        $region124: #{ham_forward_pallas.1} parent=99 // pred_fallthru
          _
        // Predicated region
        $region125: #{ham_forward_pallas.1} parent=99 // pred_check
          %p701 = pneg %p335
        $region126: #{ham_forward_pallas.1} parent=99 // pred_check_branch
          %703 = sbr.rel (%p701) target = $region128
        $region127: #{ham_forward_pallas.1} parent=99 // pred_region
          %704 = dma.done [#allocation12], 2048
        $region128: #{ham_forward_pallas.1} parent=99 // pred_fallthru
          _
        // Predicated region
        $region129: #{ham_forward_pallas.1} parent=99 // pred_check
          %p705 = pneg %p377
        $region130: #{ham_forward_pallas.1} parent=99 // pred_check_branch
          %707 = sbr.rel (%p705) target = $region132
        $region131: #{ham_forward_pallas.1} parent=99 // pred_region
          %708 = dma.done [#allocation15], 3072
        $region132: #{ham_forward_pallas.1} parent=99 // pred_fallthru
          _
        // Predicated region
        $region133: #{ham_forward_pallas.1} parent=99 // pred_check
          %p709 = pneg %p398
        $region134: #{ham_forward_pallas.1} parent=99 // pred_check_branch
          %711 = sbr.rel (%p709) target = $region136
        $region135: #{ham_forward_pallas.1} parent=99 // pred_region
          %712 = dma.done [#allocation15], 3072
        $region136: #{ham_forward_pallas.1} parent=99 // pred_fallthru
          _
        %s713 = sand.u32 %s49, 1
        %s714 = scalar_lea.sflag [#allocation3], %s713
        %s715 = sand.u32 %s49, 1
        %s716 = smul.addr %s715, 32
        %s717 = scalar_lea.vmem [#allocation2], %s716
        %p718 = pneg %p62
        %p719 = pneg %p59
        %p720 = pneg %p83
        %p721 = pneg %p80
        %p722 = pneg %p104
        %p723 = pneg %p101
        %p724 = pneg %p125
        %p725 = pneg %p122
        %p726 = pneg %p146
        %p727 = pneg %p143
        %p728 = pneg %p167
        %p729 = pneg %p164
        %p730 = pneg %p188
        %p731 = pneg %p185
        %p732 = pneg %p209
        %p733 = pneg %p206
        %p734 = pneg %p230
        %p735 = pneg %p227
        %p736 = pneg %p251
        %p737 = pneg %p248
        %p738 = pneg %p272
        %p739 = pneg %p269
        %p740 = pneg %p293
        %p741 = pneg %p290
        %p742 = pneg %p314
        %p743 = pneg %p311
        %p744 = pneg %p335
        %p745 = pneg %p332
        %p746 = pneg %p356
        %p747 = pneg %p353
        %p748 = pneg %p377
        %p749 = pneg %p374
        %p750 = pneg %p398
        %p751 = pneg %p395
        %p752 = pneg %p419
        %p753 = pneg %p416
        %p754 = pneg %p440
        %p755 = pneg %p437
        %p756 = pneg %p461
        %p757 = pneg %p458
        %p758 = pneg %p487
        %p759 = pneg %p484
        %s760 = sand.u32 %s474, 1
        %s761 = scalar_lea.sflag [#allocation4], %s760
        %s762 = sand.u32 %s474, 1
        %s763 = smul.addr %s762, 32
        %s764 = scalar_lea.vmem [#allocation17], %s763
        %s765 = smul.u32 2, %s41
        %s766 = smul.u32 2, %s41
        %v768 = vld [vmem:[%s676] sm:$0xff]
        %v769 = vld [vmem:[%s676 + $0x8] sm:$0xff]
        %v770 = vld [vmem:[%s676 + $0x10] sm:$0xff]
        %v771 = vld [vmem:[%s676 + $0x18] sm:$0xff]
        %v772 = vld [vmem:[%s2] sm:$0x7]
        %v773 = vld [vmem:[%s4] sm:$0x1]
        %v774 = vld [vmem:[%s5] sm:$0x1]
        %v775 = vld [vmem:[%s6] sm:$0x1]
        %v776 = vld [vmem:[%s8] sm:$0x1]
        %v777 = vld [vmem:[%s10] sm:$0x1]
        %v778 = vld [vmem:[%s12] sm:$0x3]
        %v779 = vld [vmem:[%s14] sm:$0x1]
        %v780 = vld [vmem:[%s17] sm:$0x1]
        %v781 = vld [vmem:[%s18] sm:$0x1]
        %v782 = vld [vmem:[%s19] sm:$0x1]
        %v783 = vlaneseq
        %v784 = vshrl.u32 %v783, 7
        %v785 = vadd.s32 %v784, 8
        %v786 = vadd.s32 %v784, 16
        %v787 = vadd.s32 %v784, 24
        %vm788 = vcmp.lt.s32.totalorder %v784, 0
        %v789 = vsub.s32 0, %v784
        %v790 = vsel %vm788, %v789, %v784
        %v791 = vshrl.u32 %v790, 4
        %v792 = vand.u32 %v790, 15
        %v793 = vsub.s32 0, %v792
        %v794 = vsel %vm788, %v793, %v792
        %vm795 = vcmp.lt.s32.totalorder %v785, 0
        %v796 = vsub.s32 0, %v785
        %v797 = vsel %vm795, %v796, %v785
        %v798 = vshrl.u32 %v797, 4
        %v799 = vand.u32 %v797, 15
        %v800 = vsub.s32 0, %v799
        %v801 = vsel %vm795, %v800, %v799
        %vm802 = vcmp.lt.s32.totalorder %v786, 0
        %v803 = vsub.s32 0, %v786
        %v804 = vsel %vm802, %v803, %v786
        %v805 = vshrl.u32 %v804, 4
        %v806 = vand.u32 %v804, 15
        %v807 = vsub.s32 0, %v806
        %v808 = vsel %vm802, %v807, %v806
        %vm809 = vcmp.lt.s32.totalorder %v787, 0
        %v810 = vsub.s32 0, %v787
        %v811 = vsel %vm809, %v810, %v787
        %v812 = vshrl.u32 %v811, 4
        %v813 = vand.u32 %v811, 15
        %v814 = vsub.s32 0, %v813
        %v815 = vsel %vm809, %v814, %v813
        %vm816 = vcmp.ne.s32.totalorder %v794, 0
        %vm817 = vcmp.ne.s32.totalorder %v801, 0
        %vm818 = vcmp.ne.s32.totalorder %v808, 0
        %vm819 = vcmp.ne.s32.totalorder %v815, 0
        %vm820 = vcmp.lt.s32.totalorder %v794, 0
        %vm821 = vcmp.lt.s32.totalorder %v801, 0
        %vm822 = vcmp.lt.s32.totalorder %v808, 0
        %vm823 = vcmp.lt.s32.totalorder %v815, 0
        %vm824 = vmand %vm820, %vm816
        %vm825 = vmand %vm821, %vm817
        %vm826 = vmand %vm822, %vm818
        %vm827 = vmand %vm823, %vm819
        %v828 = vadd.s32 %v794, 16
        %v829 = vadd.s32 %v801, 16
        %v830 = vadd.s32 %v808, 16
        %v831 = vadd.s32 %v815, 16
        %v832 = vsel %vm824, %v828, %v794
        %v833 = vsel %vm825, %v829, %v801
        %v834 = vsel %vm826, %v830, %v808
        %v835 = vsel %vm827, %v831, %v815
        %vm836 = vcmp.ne.s32.totalorder %v832, 0
        %vm837 = vcmp.ne.s32.totalorder %v833, 0
        %vm838 = vcmp.ne.s32.totalorder %v834, 0
        %vm839 = vcmp.ne.s32.totalorder %v835, 0
        %vm840 = vcmp.ne.s32.totalorder %v832, 15
        %vm841 = vcmp.ne.s32.totalorder %v833, 15
        %vm842 = vcmp.ne.s32.totalorder %v834, 15
        %vm843 = vcmp.ne.s32.totalorder %v835, 15
        %v844 = vpack.c.bf16 %v769, %v768
        %v845 = vpack.c.bf16 %v771, %v770
        %v846 = vld [vmem:[#allocation5] sm:$0xff]
        %v847 = vld [vmem:[#allocation5 + $0x8] sm:$0xf]
        %v848 = vld [vmem:[#allocation5 + $0xc] sm:$0xff]
        %v849 = vld [vmem:[#allocation5 + $0x14] sm:$0xf]
        %v850 = vld [vmem:[#allocation5 + $0x18] sm:$0xff]
        %v851 = vld [vmem:[#allocation5 + $0x20] sm:$0xf]
        %v852 = vld [vmem:[#allocation5 + $0x24] sm:$0xff]
        %v853 = vld [vmem:[#allocation5 + $0x2c] sm:$0xf]
        %v854 = vld [vmem:[#allocation5 + $0x30] sm:$0xff]
        %v855 = vld [vmem:[#allocation5 + $0x38] sm:$0xf]
        %v856 = vld [vmem:[#allocation5 + $0x3c] sm:$0xff]
        %v857 = vld [vmem:[#allocation5 + $0x44] sm:$0xf]
        %v858 = vld [vmem:[#allocation5 + $0x48] sm:$0xff]
        %v859 = vld [vmem:[#allocation5 + $0x50] sm:$0xf]
        %v860 = vld [vmem:[#allocation5 + $0x54] sm:$0xff]
        %v861 = vld [vmem:[#allocation5 + $0x5c] sm:$0xf]
        %v862 = vld [vmem:[#allocation5 + $0x60] sm:$0xff]
        %v863 = vld [vmem:[#allocation5 + $0x68] sm:$0xf]
        %v864 = vld [vmem:[#allocation5 + $0x6c] sm:$0xff]
        %v865 = vld [vmem:[#allocation5 + $0x74] sm:$0xf]
        %v866 = vld [vmem:[#allocation5 + $0x78] sm:$0xff]
        %v867 = vld [vmem:[#allocation5 + $0x80] sm:$0xf]
        %v868 = vld [vmem:[#allocation5 + $0x84] sm:$0xff]
        %v869 = vld [vmem:[#allocation5 + $0x8c] sm:$0xf]
        %v870 = vld [vmem:[#allocation5 + $0x90] sm:$0xff]
        %v871 = vld [vmem:[#allocation5 + $0x98] sm:$0xf]
        %v872 = vld [vmem:[#allocation5 + $0x9c] sm:$0xff]
        %v873 = vld [vmem:[#allocation5 + $0xa4] sm:$0xf]
        %v874 = vld [vmem:[#allocation5 + $0xa8] sm:$0xff]
        %v875 = vld [vmem:[#allocation5 + $0xb0] sm:$0xf]
        %v876 = vld [vmem:[#allocation5 + $0xb4] sm:$0xff]
        %v877 = vld [vmem:[#allocation5 + $0xbc] sm:$0xf]
        %v879 = vlaneseq
        %v880 = vshrl.u32 %v879, 7
        %v881 = vsub.s32 0, %v880
        %v882 = vrot.slane %v772, %v881
        %v883 = vlaneseq
        %v884 = vshrl.u32 %v883, 7
        %v885 = vsub.s32 1, %v884
        %v886 = vrot.slane %v772, %v885
        %v887 = vlaneseq
        %v888 = vshrl.u32 %v887, 7
        %v889 = vsub.s32 2, %v888
        %v890 = vrot.slane %v772, %v889
        %v926 = vunpack.c.l.b16 %v846
        %v927 = vunpack.c.h.b16 %v846
        %v928 = vunpack.c.l.b16 %v847
        %v929 = vunpack.c.l.b16 %v848
        %v930 = vunpack.c.h.b16 %v848
        %v931 = vunpack.c.l.b16 %v849
        %v932 = vunpack.c.l.b16 %v850
        %v933 = vunpack.c.h.b16 %v850
        %v934 = vunpack.c.l.b16 %v851
        %v935 = vunpack.c.l.b16 %v852
        %v936 = vunpack.c.h.b16 %v852
        %v937 = vunpack.c.l.b16 %v853
        %v938 = vunpack.c.l.b16 %v854
        %v939 = vunpack.c.h.b16 %v854
        %v940 = vunpack.c.l.b16 %v855
        %v941 = vunpack.c.l.b16 %v856
        %v942 = vunpack.c.h.b16 %v856
        %v943 = vunpack.c.l.b16 %v857
        %v944 = vunpack.c.l.b16 %v858
        %v945 = vunpack.c.h.b16 %v858
        %v946 = vunpack.c.l.b16 %v859
        %v947 = vunpack.c.l.b16 %v860
        %v948 = vunpack.c.h.b16 %v860
        %v949 = vunpack.c.l.b16 %v861
        %v950 = vunpack.c.l.b16 %v862
        %v951 = vunpack.c.h.b16 %v862
        %v952 = vunpack.c.l.b16 %v863
        %v953 = vunpack.c.l.b16 %v864
        %v954 = vunpack.c.h.b16 %v864
        %v955 = vunpack.c.l.b16 %v865
        %v956 = vunpack.c.l.b16 %v866
        %v957 = vunpack.c.h.b16 %v866
        %v958 = vunpack.c.l.b16 %v867
        %v959 = vunpack.c.l.b16 %v868
        %v960 = vunpack.c.h.b16 %v868
        %v961 = vunpack.c.l.b16 %v869
        %v962 = vunpack.c.l.b16 %v870
        %v963 = vunpack.c.h.b16 %v870
        %v964 = vunpack.c.l.b16 %v871
        %v965 = vunpack.c.l.b16 %v872
        %v966 = vunpack.c.h.b16 %v872
        %v967 = vunpack.c.l.b16 %v873
        %v968 = vunpack.c.l.b16 %v874
        %v969 = vunpack.c.h.b16 %v874
        %v970 = vunpack.c.l.b16 %v875
        %v971 = vunpack.c.l.b16 %v876
        %v972 = vunpack.c.h.b16 %v876
        %v973 = vunpack.c.l.b16 %v877
        %v974 = vpack.c.b16 %v929, %v926
        %v975 = vpack.c.b16 %v930, %v927
        %v976 = vpack.c.b16 %v931, %v928
        %v977 = vpack.c.b16 %v935, %v932
        %v978 = vpack.c.b16 %v936, %v933
        %v979 = vpack.c.b16 %v937, %v934
        %v980 = vpack.c.b16 %v941, %v938
        %v981 = vpack.c.b16 %v942, %v939
        %v982 = vpack.c.b16 %v943, %v940
        %v983 = vpack.c.b16 %v947, %v944
        %v984 = vpack.c.b16 %v948, %v945
        %v985 = vpack.c.b16 %v949, %v946
        %v986 = vpack.c.b16 %v953, %v950
        %v987 = vpack.c.b16 %v954, %v951
        %v988 = vpack.c.b16 %v955, %v952
        %v989 = vpack.c.b16 %v959, %v956
        %v990 = vpack.c.b16 %v960, %v957
        %v991 = vpack.c.b16 %v961, %v958
        %v992 = vpack.c.b16 %v965, %v962
        %v993 = vpack.c.b16 %v966, %v963
        %v994 = vpack.c.b16 %v967, %v964
        %v995 = vpack.c.b16 %v971, %v968
        %v996 = vpack.c.b16 %v972, %v969
        %v997 = vpack.c.b16 %v973, %v970
        %1022 = vmatprep.subr.bf16.mxu0 %v996
        %1023 = vmatpush1.bf16.msra.mxu0 %v995
        %1024 = vmatprep.subr.bf16.mxu0 %v993
        %1025 = vmatpush1.bf16.msra.mxu0 %v992
        %1026 = vmatprep.subr.bf16.mxu0 %v990
        %1027 = vmatpush1.bf16.msra.mxu0 %v989
        %1028 = vmatprep.subr.bf16.mxu0 %v987
        %1029 = vmatpush1.bf16.msra.mxu0 %v986
        %1030 = vmatprep.subr.bf16.mxu0 %v984
        %1031 = vmatpush1.bf16.msra.mxu0 %v983
        %1032 = vmatprep.subr.bf16.mxu0 %v981
        %1033 = vmatpush1.bf16.msra.mxu0 %v980
        %1034 = vmatprep.subr.bf16.mxu0 %v978
        %1035 = vmatpush1.bf16.msra.mxu0 %v977
        %1036 = vmatprep.subr.bf16.mxu0 %v975
        %1037 = vmatpush1.bf16.msra.mxu0 %v974
        %1038 = vmatprep.subr.bf16.mxu0 0
        %1039 = vmatpush2.bf16.msra.mxu0 0
        %1040 = vmatprep.subr.bf16.mxu0 0
        %1041 = vmatpush2.bf16.msra.mxu0 0
        %1042 = vmatprep.subr.bf16.mxu0 0
        %1043 = vmatpush2.bf16.msra.mxu0 0
        %1044 = vmatprep.subr.bf16.mxu0 0
        %1045 = vmatpush2.bf16.msra.mxu0 0
        %1046 = vmatprep.subr.bf16.mxu0 0
        %1047 = vmatpush2.bf16.msra.mxu0 0
        %1048 = vmatprep.subr.bf16.mxu0 0
        %1049 = vmatpush2.bf16.msra.mxu0 0
        %1050 = vmatprep.subr.bf16.mxu0 0
        %1051 = vmatpush2.bf16.msra.mxu0 0
        %1052 = vmatprep.subr.bf16.mxu0 0
        %1053 = vmatpush2.bf16.msra.mxu0 0
        %1054 = vmatprep.mubr.bf16.mxu0 0
        %1055 = vmatmul.mubr.bf16.gmra.mxu0 %v844
        %v1056 = vpop.f32.mrf.mxu0
        %v1057 = vadd.f32 %v882, %v1056
        %v1058 = vpop.f32.mrf.mxu0
        %v1059 = vadd.f32 %v886, %v1058
        %v1060 = vpop.f32.mrf.mxu0
        %v1061 = vadd.f32 %v882, %v1060
        %v1062 = vpop.f32.mrf.mxu0
        %v1063 = vadd.f32 %v886, %v1062
        %1064 = vmatprep.mubr.bf16.mxu0 0
        %1065 = vmatmul.mubr.bf16.gmra.mxu0 %v845
        %v1066 = vpop.f32.mrf.mxu0
        %v1067 = vadd.f32 %v882, %v1066
        %v1068 = vpop.f32.mrf.mxu0
        %v1069 = vadd.f32 %v886, %v1068
        %v1070 = vpop.f32.mrf.mxu0
        %v1071 = vadd.f32 %v882, %v1070
        %v1072 = vpop.f32.mrf.mxu0
        %v1073 = vadd.f32 %v886, %v1072
        %1074 = vdwg.mxu0
        %1075 = vmatprep.subr.bf16.mxu0 0
        %1076 = vmatpush1.bf16.msra.mxu0 %v997
        %1077 = vmatprep.subr.bf16.mxu0 0
        %1078 = vmatpush1.bf16.msra.mxu0 %v994
        %1079 = vmatprep.subr.bf16.mxu0 0
        %1080 = vmatpush1.bf16.msra.mxu0 %v991
        %1081 = vmatprep.subr.bf16.mxu0 0
        %1082 = vmatpush1.bf16.msra.mxu0 %v988
        %1083 = vmatprep.subr.bf16.mxu0 0
        %1084 = vmatpush1.bf16.msra.mxu0 %v985
        %1085 = vmatprep.subr.bf16.mxu0 0
        %1086 = vmatpush1.bf16.msra.mxu0 %v982
        %1087 = vmatprep.subr.bf16.mxu0 0
        %1088 = vmatpush1.bf16.msra.mxu0 %v979
        %1089 = vmatprep.subr.bf16.mxu0 0
        %1090 = vmatpush1.bf16.msra.mxu0 %v976
        %1091 = vmatprep.subr.bf16.mxu0 0
        %1092 = vmatpush2.bf16.msra.mxu0 0
        %1093 = vmatprep.subr.bf16.mxu0 0
        %1094 = vmatpush2.bf16.msra.mxu0 0
        %1095 = vmatprep.subr.bf16.mxu0 0
        %1096 = vmatpush2.bf16.msra.mxu0 0
        %1097 = vmatprep.subr.bf16.mxu0 0
        %1098 = vmatpush2.bf16.msra.mxu0 0
        %1099 = vmatprep.subr.bf16.mxu0 0
        %1100 = vmatpush2.bf16.msra.mxu0 0
        %1101 = vmatprep.subr.bf16.mxu0 0
        %1102 = vmatpush2.bf16.msra.mxu0 0
        %1103 = vmatprep.subr.bf16.mxu0 0
        %1104 = vmatpush2.bf16.msra.mxu0 0
        %1105 = vmatprep.subr.bf16.mxu0 0
        %1106 = vmatpush2.bf16.msra.mxu0 0
        %1107 = vmatprep.mubr.bf16.mxu0 0
        %1108 = vmatmul.mubr.bf16.gmra.mxu0 %v844
        %v1109 = vpop.f32.mrf.mxu0
        %v1110 = vadd.f32 %v890, %v1109
        %v1111 = vpop.f32.mrf.mxu0
        %v1112 = vpop.f32.mrf.mxu0
        %v1113 = vadd.f32 %v890, %v1112
        %v1114 = vpop.f32.mrf.mxu0
        %1115 = vmatprep.mubr.bf16.mxu0 0
        %1116 = vmatmul.mubr.bf16.gmra.mxu0 %v845
        %v1117 = vpop.f32.mrf.mxu0
        %v1118 = vadd.f32 %v890, %v1117
        %v1119 = vpop.f32.mrf.mxu0
        %v1120 = vpop.f32.mrf.mxu0
        %v1121 = vadd.f32 %v890, %v1120
        %v1122 = vpop.f32.mrf.mxu0
        %1123 = vdwg.mxu0
        %v1124 = vpack.c.bf16 %v1061, %v1057
        %v1125 = vpack.c.bf16 %v1071, %v1067
        %v1126 = vpack.c.bf16 %v1063, %v1059
        %v1127 = vpack.c.bf16 %v1073, %v1069
        %v1128 = vpack.c.bf16 %v1113, %v1110
        %v1129 = vpack.c.bf16 %v1121, %v1118
        %vm1130 = vcmask 261120
        %v1132 = vsel %vm1130, %v1124, 0
        %v1135 = vsel %vm1130, %v1126, 0
        %1137 = vmatprep.subr.bf16.mxu0 0
        %1138 = vmatpush1.bf16.xpose.msra.mxu0 0
        %1139 = vmatprep.subr.bf16.mxu0 0
        %1140 = vmatpush1.bf16.xpose.msra.mxu0 0
        %1141 = vmatprep.subr.bf16.mxu0 0
        %1142 = vmatpush1.bf16.xpose.msra.mxu0 0
        %1143 = vmatprep.subr.bf16.mxu0 0
        %1144 = vmatpush1.bf16.xpose.msra.mxu0 0
        %1145 = vmatprep.subr.bf16.mxu0 0
        %1146 = vmatpush1.bf16.xpose.msra.mxu0 0
        %1147 = vmatprep.subr.bf16.mxu0 0
        %1148 = vmatpush1.bf16.xpose.msra.mxu0 0
        %1149 = vmatprep.subr.bf16.mxu0 0
        %1150 = vmatpush1.bf16.xpose.msra.mxu0 0
        %1151 = vmatprep.subr.bf16.mxu0 0
        %1152 = vmatpush1.bf16.xpose.msra.mxu0 %v1135
        %1153 = vmatprep.subr.bf16.mxu0 0
        %1154 = vmatpush2.bf16.xpose.msra.mxu0 0
        %1155 = vmatprep.subr.bf16.mxu0 0
        %1156 = vmatpush2.bf16.xpose.msra.mxu0 0
        %1157 = vmatprep.subr.bf16.mxu0 0
        %1158 = vmatpush2.bf16.xpose.msra.mxu0 0
        %1159 = vmatprep.subr.bf16.mxu0 0
        %1160 = vmatpush2.bf16.xpose.msra.mxu0 0
        %1161 = vmatprep.subr.bf16.mxu0 0
        %1162 = vmatpush2.bf16.xpose.msra.mxu0 0
        %1163 = vmatprep.subr.bf16.mxu0 0
        %1164 = vmatpush2.bf16.xpose.msra.mxu0 0
        %1165 = vmatprep.subr.bf16.mxu0 0
        %1166 = vmatpush2.bf16.xpose.msra.mxu0 0
        %1167 = vmatprep.subr.bf16.mxu0 0
        %1168 = vmatpush2.bf16.xpose.msra.mxu0 0
        %1169 = vmatprep.mubr.bf16.mxu0 0
        %1170 = vmatmul.mubr.bf16.gmra.mxu0 %v1132
        %v1171 = vpop.f32.mrf.mxu0
        %v1172 = vadd.f32 0.0, %v1171
        %v1173 = vpop.f32.mrf.mxu0
        %v1174 = vpop.f32.mrf.mxu0
        %v1175 = vadd.f32 0.0, %v1174
        %v1176 = vpop.f32.mrf.mxu0
        %1177 = vdwg.mxu0
        %vm1178 = vcmask 130048
        %v1179 = vsel %vm1178, %v1172, -inf
        %1180 = vmax.xlane.f32.xlu0 %v1179
        %v1181 = vpop.xlane.xlu0 %1180
        %v1182 = vsel %vm1178, %v1175, -inf
        %1183 = vmax.xlane.f32.xlu0 %v1182
        %v1184 = vpop.xlane.xlu0 %1183
        %v1185 = vsub.f32 %v1172, %v1181
        %v1186 = vsub.f32 %v1175, %v1184
        %v1187 = vmul.f32 %v1185, 1.442695
        %v1188 = vpow.pop %v1187
        %v1189 = vmul.f32 %v1186, 1.442695
        %v1190 = vpow.pop %v1189
        %v1191 = vsel %vm1178, %v1188, 0.0
        %1192 = vadd.xlane.f32.xlu0 %v1191
        %v1193 = vpop.xlane.xlu0 %1192
        %v1194 = vsel %vm1178, %v1190, 0.0
        %1195 = vadd.xlane.f32.xlu0 %v1194
        %v1196 = vpop.xlane.xlu0 %1195
        %v1197 = vrcp.pop %v1193
        %v1198 = vrcp.pop %v1196
        %v1199 = vmul.f32 %v1188, %v1197
        %v1200 = vmul.f32 %v1190, %v1198
        %v1201 = vpack.c.bf16 %v1200, %v1199
        %v1203 = vsel %vm1178, %v1201, 0
        %1205 = vmatprep.subr.bf16.mxu0 0
        %1206 = vmatpush1.bf16.msra.mxu0 0
        %1207 = vmatprep.subr.bf16.mxu0 0
        %1208 = vmatpush1.bf16.msra.mxu0 0
        %1209 = vmatprep.subr.bf16.mxu0 0
        %1210 = vmatpush1.bf16.msra.mxu0 0
        %1211 = vmatprep.subr.bf16.mxu0 0
        %1212 = vmatpush1.bf16.msra.mxu0 0
        %1213 = vmatprep.subr.bf16.mxu0 0
        %1214 = vmatpush1.bf16.msra.mxu0 0
        %1215 = vmatprep.subr.bf16.mxu0 0
        %1216 = vmatpush1.bf16.msra.mxu0 0
        %1217 = vmatprep.subr.bf16.mxu0 0
        %1218 = vmatpush1.bf16.msra.mxu0 0
        %1219 = vmatprep.subr.bf16.mxu0 0
        %1220 = vmatpush1.bf16.msra.mxu0 %v1128
        %1221 = vmatprep.subr.bf16.mxu0 0
        %1222 = vmatpush2.bf16.msra.mxu0 0
        %1223 = vmatprep.subr.bf16.mxu0 0
        %1224 = vmatpush2.bf16.msra.mxu0 0
        %1225 = vmatprep.subr.bf16.mxu0 0
        %1226 = vmatpush2.bf16.msra.mxu0 0
        %1227 = vmatprep.subr.bf16.mxu0 0
        %1228 = vmatpush2.bf16.msra.mxu0 0
        %1229 = vmatprep.subr.bf16.mxu0 0
        %1230 = vmatpush2.bf16.msra.mxu0 0
        %1231 = vmatprep.subr.bf16.mxu0 0
        %1232 = vmatpush2.bf16.msra.mxu0 0
        %1233 = vmatprep.subr.bf16.mxu0 0
        %1234 = vmatpush2.bf16.msra.mxu0 0
        %1235 = vmatprep.subr.bf16.mxu0 0
        %1236 = vmatpush2.bf16.msra.mxu0 0
        %1237 = vmatprep.mubr.bf16.mxu0 0
        %1238 = vmatmul.mubr.bf16.gmra.mxu0 %v1203
        %v1239 = vpop.f32.mrf.mxu0
        %v1240 = vadd.f32 0.0, %v1239
        %v1241 = vpop.f32.mrf.mxu0
        %v1242 = vpop.f32.mrf.mxu0
        %v1243 = vadd.f32 0.0, %v1242
        %v1244 = vpop.f32.mrf.mxu0
        %1245 = vdwg.mxu0
        %v1247 = vsel %vm1130, %v1125, 0
        %v1250 = vsel %vm1130, %v1127, 0
        %1252 = vmatprep.subr.bf16.mxu0 0
        %1253 = vmatpush1.bf16.xpose.msra.mxu0 0
        %1254 = vmatprep.subr.bf16.mxu0 0
        %1255 = vmatpush1.bf16.xpose.msra.mxu0 0
        %1256 = vmatprep.subr.bf16.mxu0 0
        %1257 = vmatpush1.bf16.xpose.msra.mxu0 0
        %1258 = vmatprep.subr.bf16.mxu0 0
        %1259 = vmatpush1.bf16.xpose.msra.mxu0 0
        %1260 = vmatprep.subr.bf16.mxu0 0
        %1261 = vmatpush1.bf16.xpose.msra.mxu0 0
        %1262 = vmatprep.subr.bf16.mxu0 0
        %1263 = vmatpush1.bf16.xpose.msra.mxu0 0
        %1264 = vmatprep.subr.bf16.mxu0 0
        %1265 = vmatpush1.bf16.xpose.msra.mxu0 0
        %1266 = vmatprep.subr.bf16.mxu0 0
        %1267 = vmatpush1.bf16.xpose.msra.mxu0 %v1250
        %1268 = vmatprep.subr.bf16.mxu0 0
        %1269 = vmatpush2.bf16.xpose.msra.mxu0 0
        %1270 = vmatprep.subr.bf16.mxu0 0
        %1271 = vmatpush2.bf16.xpose.msra.mxu0 0
        %1272 = vmatprep.subr.bf16.mxu0 0
        %1273 = vmatpush2.bf16.xpose.msra.mxu0 0
        %1274 = vmatprep.subr.bf16.mxu0 0
        %1275 = vmatpush2.bf16.xpose.msra.mxu0 0
        %1276 = vmatprep.subr.bf16.mxu0 0
        %1277 = vmatpush2.bf16.xpose.msra.mxu0 0
        %1278 = vmatprep.subr.bf16.mxu0 0
        %1279 = vmatpush2.bf16.xpose.msra.mxu0 0
        %1280 = vmatprep.subr.bf16.mxu0 0
        %1281 = vmatpush2.bf16.xpose.msra.mxu0 0
        %1282 = vmatprep.subr.bf16.mxu0 0
        %1283 = vmatpush2.bf16.xpose.msra.mxu0 0
        %1284 = vmatprep.mubr.bf16.mxu0 0
        %1285 = vmatmul.mubr.bf16.gmra.mxu0 %v1247
        %v1286 = vpop.f32.mrf.mxu0
        %v1287 = vadd.f32 0.0, %v1286
        %v1288 = vpop.f32.mrf.mxu0
        %v1289 = vpop.f32.mrf.mxu0
        %v1290 = vadd.f32 0.0, %v1289
        %v1291 = vpop.f32.mrf.mxu0
        %1292 = vdwg.mxu0
        %v1293 = vsel %vm1178, %v1287, -inf
        %1294 = vmax.xlane.f32.xlu0 %v1293
        %v1295 = vpop.xlane.xlu0 %1294
        %v1296 = vsel %vm1178, %v1290, -inf
        %1297 = vmax.xlane.f32.xlu0 %v1296
        %v1298 = vpop.xlane.xlu0 %1297
        %v1299 = vsub.f32 %v1287, %v1295
        %v1300 = vsub.f32 %v1290, %v1298
        %v1301 = vmul.f32 %v1299, 1.442695
        %v1302 = vpow.pop %v1301
        %v1303 = vmul.f32 %v1300, 1.442695
        %v1304 = vpow.pop %v1303
        %v1305 = vsel %vm1178, %v1302, 0.0
        %1306 = vadd.xlane.f32.xlu0 %v1305
        %v1307 = vpop.xlane.xlu0 %1306
        %v1308 = vsel %vm1178, %v1304, 0.0
        %1309 = vadd.xlane.f32.xlu0 %v1308
        %v1310 = vpop.xlane.xlu0 %1309
        %v1311 = vrcp.pop %v1307
        %v1312 = vrcp.pop %v1310
        %v1313 = vmul.f32 %v1302, %v1311
        %v1314 = vmul.f32 %v1304, %v1312
        %v1315 = vpack.c.bf16 %v1314, %v1313
        %v1317 = vsel %vm1178, %v1315, 0
        %1319 = vmatprep.subr.bf16.mxu0 0
        %1320 = vmatpush1.bf16.msra.mxu0 0
        %1321 = vmatprep.subr.bf16.mxu0 0
        %1322 = vmatpush1.bf16.msra.mxu0 0
        %1323 = vmatprep.subr.bf16.mxu0 0
        %1324 = vmatpush1.bf16.msra.mxu0 0
        %1325 = vmatprep.subr.bf16.mxu0 0
        %1326 = vmatpush1.bf16.msra.mxu0 0
        %1327 = vmatprep.subr.bf16.mxu0 0
        %1328 = vmatpush1.bf16.msra.mxu0 0
        %1329 = vmatprep.subr.bf16.mxu0 0
        %1330 = vmatpush1.bf16.msra.mxu0 0
        %1331 = vmatprep.subr.bf16.mxu0 0
        %1332 = vmatpush1.bf16.msra.mxu0 0
        %1333 = vmatprep.subr.bf16.mxu0 0
        %1334 = vmatpush1.bf16.msra.mxu0 %v1129
        %1335 = vmatprep.subr.bf16.mxu0 0
        %1336 = vmatpush2.bf16.msra.mxu0 0
        %1337 = vmatprep.subr.bf16.mxu0 0
        %1338 = vmatpush2.bf16.msra.mxu0 0
        %1339 = vmatprep.subr.bf16.mxu0 0
        %1340 = vmatpush2.bf16.msra.mxu0 0
        %1341 = vmatprep.subr.bf16.mxu0 0
        %1342 = vmatpush2.bf16.msra.mxu0 0
        %1343 = vmatprep.subr.bf16.mxu0 0
        %1344 = vmatpush2.bf16.msra.mxu0 0
        %1345 = vmatprep.subr.bf16.mxu0 0
        %1346 = vmatpush2.bf16.msra.mxu0 0
        %1347 = vmatprep.subr.bf16.mxu0 0
        %1348 = vmatpush2.bf16.msra.mxu0 0
        %1349 = vmatprep.subr.bf16.mxu0 0
        %1350 = vmatpush2.bf16.msra.mxu0 0
        %1351 = vmatprep.mubr.bf16.mxu0 0
        %1352 = vmatmul.mubr.bf16.gmra.mxu0 %v1317
        %v1353 = vpop.f32.mrf.mxu0
        %v1354 = vadd.f32 0.0, %v1353
        %v1355 = vpop.f32.mrf.mxu0
        %v1356 = vpop.f32.mrf.mxu0
        %v1357 = vadd.f32 0.0, %v1356
        %v1358 = vpop.f32.mrf.mxu0
        %1359 = vdwg.mxu0
        %v1360 = vpack.c.bf16 %v1243, %v1240
        %v1361 = vpack.c.bf16 %v1357, %v1354
        %v1362 = vld [vmem:[#allocation7] sm:$0xf]
        %v1363 = vld [vmem:[#allocation7 + $0x4] sm:$0xf]
        %v1364 = vld [vmem:[#allocation7 + $0x8] sm:$0xf]
        %v1365 = vld [vmem:[#allocation7 + $0xc] sm:$0xf]
        %1367 = vrot.lane.b32.xlu0 %v1124, 96
        %v1368 = vpop.permute.xlu0 %1367
        %1370 = vrot.lane.b32.xlu0 %v1126, 96
        %v1371 = vpop.permute.xlu0 %1370
        %v1373 = vsel %vm1130, %v1368, 0
        %v1376 = vsel %vm1130, %v1371, 0
        %1378 = vmatprep.subr.bf16.mxu0 0
        %1379 = vmatpush1.bf16.xpose.msra.mxu0 0
        %1380 = vmatprep.subr.bf16.mxu0 0
        %1381 = vmatpush1.bf16.xpose.msra.mxu0 0
        %1382 = vmatprep.subr.bf16.mxu0 0
        %1383 = vmatpush1.bf16.xpose.msra.mxu0 0
        %1384 = vmatprep.subr.bf16.mxu0 0
        %1385 = vmatpush1.bf16.xpose.msra.mxu0 0
        %1386 = vmatprep.subr.bf16.mxu0 0
        %1387 = vmatpush1.bf16.xpose.msra.mxu0 0
        %1388 = vmatprep.subr.bf16.mxu0 0
        %1389 = vmatpush1.bf16.xpose.msra.mxu0 0
        %1390 = vmatprep.subr.bf16.mxu0 0
        %1391 = vmatpush1.bf16.xpose.msra.mxu0 0
        %1392 = vmatprep.subr.bf16.mxu0 0
        %1393 = vmatpush1.bf16.xpose.msra.mxu0 %v1376
        %1394 = vmatprep.subr.bf16.mxu0 0
        %1395 = vmatpush2.bf16.xpose.msra.mxu0 0
        %1396 = vmatprep.subr.bf16.mxu0 0
        %1397 = vmatpush2.bf16.xpose.msra.mxu0 0
        %1398 = vmatprep.subr.bf16.mxu0 0
        %1399 = vmatpush2.bf16.xpose.msra.mxu0 0
        %1400 = vmatprep.subr.bf16.mxu0 0
        %1401 = vmatpush2.bf16.xpose.msra.mxu0 0
        %1402 = vmatprep.subr.bf16.mxu0 0
        %1403 = vmatpush2.bf16.xpose.msra.mxu0 0
        %1404 = vmatprep.subr.bf16.mxu0 0
        %1405 = vmatpush2.bf16.xpose.msra.mxu0 0
        %1406 = vmatprep.subr.bf16.mxu0 0
        %1407 = vmatpush2.bf16.xpose.msra.mxu0 0
        %1408 = vmatprep.subr.bf16.mxu0 0
        %1409 = vmatpush2.bf16.xpose.msra.mxu0 0
        %1410 = vmatprep.mubr.bf16.mxu0 0
        %1411 = vmatmul.mubr.bf16.gmra.mxu0 %v1373
        %v1412 = vpop.f32.mrf.mxu0
        %v1413 = vadd.f32 0.0, %v1412
        %v1414 = vpop.f32.mrf.mxu0
        %v1415 = vpop.f32.mrf.mxu0
        %v1416 = vadd.f32 0.0, %v1415
        %v1417 = vpop.f32.mrf.mxu0
        %1418 = vdwg.mxu0
        %v1419 = vsel %vm1178, %v1413, -inf
        %1420 = vmax.xlane.f32.xlu0 %v1419
        %v1421 = vpop.xlane.xlu0 %1420
        %v1422 = vsel %vm1178, %v1416, -inf
        %1423 = vmax.xlane.f32.xlu0 %v1422
        %v1424 = vpop.xlane.xlu0 %1423
        %v1425 = vsub.f32 %v1413, %v1421
        %v1426 = vsub.f32 %v1416, %v1424
        %v1427 = vmul.f32 %v1425, 1.442695
        %v1428 = vpow.pop %v1427
        %v1429 = vmul.f32 %v1426, 1.442695
        %v1430 = vpow.pop %v1429
        %v1431 = vsel %vm1178, %v1428, 0.0
        %1432 = vadd.xlane.f32.xlu0 %v1431
        %v1433 = vpop.xlane.xlu0 %1432
        %v1434 = vsel %vm1178, %v1430, 0.0
        %1435 = vadd.xlane.f32.xlu0 %v1434
        %v1436 = vpop.xlane.xlu0 %1435
        %v1437 = vrcp.pop %v1433
        %v1438 = vrcp.pop %v1436
        %v1439 = vmul.f32 %v1428, %v1437
        %v1440 = vmul.f32 %v1430, %v1438
        %v1441 = vpack.c.bf16 %v1440, %v1439
        %1443 = vrot.lane.b32.xlu0 %v1128, 96
        %v1444 = vpop.permute.xlu0 %1443
        %v1447 = vsel %vm1178, %v1441, 0
        %1449 = vmatprep.subr.bf16.mxu0 0
        %1450 = vmatpush1.bf16.msra.mxu0 0
        %1451 = vmatprep.subr.bf16.mxu0 0
        %1452 = vmatpush1.bf16.msra.mxu0 0
        %1453 = vmatprep.subr.bf16.mxu0 0
        %1454 = vmatpush1.bf16.msra.mxu0 0
        %1455 = vmatprep.subr.bf16.mxu0 0
        %1456 = vmatpush1.bf16.msra.mxu0 0
        %1457 = vmatprep.subr.bf16.mxu0 0
        %1458 = vmatpush1.bf16.msra.mxu0 0
        %1459 = vmatprep.subr.bf16.mxu0 0
        %1460 = vmatpush1.bf16.msra.mxu0 0
        %1461 = vmatprep.subr.bf16.mxu0 0
        %1462 = vmatpush1.bf16.msra.mxu0 0
        %1463 = vmatprep.subr.bf16.mxu0 0
        %1464 = vmatpush1.bf16.msra.mxu0 %v1444
        %1465 = vmatprep.subr.bf16.mxu0 0
        %1466 = vmatpush2.bf16.msra.mxu0 0
        %1467 = vmatprep.subr.bf16.mxu0 0
        %1468 = vmatpush2.bf16.msra.mxu0 0
        %1469 = vmatprep.subr.bf16.mxu0 0
        %1470 = vmatpush2.bf16.msra.mxu0 0
        %1471 = vmatprep.subr.bf16.mxu0 0
        %1472 = vmatpush2.bf16.msra.mxu0 0
        %1473 = vmatprep.subr.bf16.mxu0 0
        %1474 = vmatpush2.bf16.msra.mxu0 0
        %1475 = vmatprep.subr.bf16.mxu0 0
        %1476 = vmatpush2.bf16.msra.mxu0 0
        %1477 = vmatprep.subr.bf16.mxu0 0
        %1478 = vmatpush2.bf16.msra.mxu0 0
        %1479 = vmatprep.subr.bf16.mxu0 0
        %1480 = vmatpush2.bf16.msra.mxu0 0
        %1481 = vmatprep.mubr.bf16.mxu0 0
        %1482 = vmatmul.mubr.bf16.gmra.mxu0 %v1447
        %v1483 = vpop.f32.mrf.mxu0
        %v1484 = vadd.f32 0.0, %v1483
        %v1485 = vpop.f32.mrf.mxu0
        %v1486 = vpop.f32.mrf.mxu0
        %v1487 = vadd.f32 0.0, %v1486
        %v1488 = vpop.f32.mrf.mxu0
        %1489 = vdwg.mxu0
        %1491 = vrot.lane.b32.xlu0 %v1125, 96
        %v1492 = vpop.permute.xlu0 %1491
        %1494 = vrot.lane.b32.xlu0 %v1127, 96
        %v1495 = vpop.permute.xlu0 %1494
        %v1497 = vsel %vm1130, %v1492, 0
        %v1500 = vsel %vm1130, %v1495, 0
        %1502 = vmatprep.subr.bf16.mxu0 0
        %1503 = vmatpush1.bf16.xpose.msra.mxu0 0
        %1504 = vmatprep.subr.bf16.mxu0 0
        %1505 = vmatpush1.bf16.xpose.msra.mxu0 0
        %1506 = vmatprep.subr.bf16.mxu0 0
        %1507 = vmatpush1.bf16.xpose.msra.mxu0 0
        %1508 = vmatprep.subr.bf16.mxu0 0
        %1509 = vmatpush1.bf16.xpose.msra.mxu0 0
        %1510 = vmatprep.subr.bf16.mxu0 0
        %1511 = vmatpush1.bf16.xpose.msra.mxu0 0
        %1512 = vmatprep.subr.bf16.mxu0 0
        %1513 = vmatpush1.bf16.xpose.msra.mxu0 0
        %1514 = vmatprep.subr.bf16.mxu0 0
        %1515 = vmatpush1.bf16.xpose.msra.mxu0 0
        %1516 = vmatprep.subr.bf16.mxu0 0
        %1517 = vmatpush1.bf16.xpose.msra.mxu0 %v1500
        %1518 = vmatprep.subr.bf16.mxu0 0
        %1519 = vmatpush2.bf16.xpose.msra.mxu0 0
        %1520 = vmatprep.subr.bf16.mxu0 0
        %1521 = vmatpush2.bf16.xpose.msra.mxu0 0
        %1522 = vmatprep.subr.bf16.mxu0 0
        %1523 = vmatpush2.bf16.xpose.msra.mxu0 0
        %1524 = vmatprep.subr.bf16.mxu0 0
        %1525 = vmatpush2.bf16.xpose.msra.mxu0 0
        %1526 = vmatprep.subr.bf16.mxu0 0
        %1527 = vmatpush2.bf16.xpose.msra.mxu0 0
        %1528 = vmatprep.subr.bf16.mxu0 0
        %1529 = vmatpush2.bf16.xpose.msra.mxu0 0
        %1530 = vmatprep.subr.bf16.mxu0 0
        %1531 = vmatpush2.bf16.xpose.msra.mxu0 0
        %1532 = vmatprep.subr.bf16.mxu0 0
        %1533 = vmatpush2.bf16.xpose.msra.mxu0 0
        %1534 = vmatprep.mubr.bf16.mxu0 0
        %1535 = vmatmul.mubr.bf16.gmra.mxu0 %v1497
        %v1536 = vpop.f32.mrf.mxu0
        %v1537 = vadd.f32 0.0, %v1536
        %v1538 = vpop.f32.mrf.mxu0
        %v1539 = vpop.f32.mrf.mxu0
        %v1540 = vadd.f32 0.0, %v1539
        %v1541 = vpop.f32.mrf.mxu0
        %1542 = vdwg.mxu0
        %v1543 = vsel %vm1178, %v1537, -inf
        %1544 = vmax.xlane.f32.xlu0 %v1543
        %v1545 = vpop.xlane.xlu0 %1544
        %v1546 = vsel %vm1178, %v1540, -inf
        %1547 = vmax.xlane.f32.xlu0 %v1546
        %v1548 = vpop.xlane.xlu0 %1547
        %v1549 = vsub.f32 %v1537, %v1545
        %v1550 = vsub.f32 %v1540, %v1548
        %v1551 = vmul.f32 %v1549, 1.442695
        %v1552 = vpow.pop %v1551
        %v1553 = vmul.f32 %v1550, 1.442695
        %v1554 = vpow.pop %v1553
        %v1555 = vsel %vm1178, %v1552, 0.0
        %1556 = vadd.xlane.f32.xlu0 %v1555
        %v1557 = vpop.xlane.xlu0 %1556
        %v1558 = vsel %vm1178, %v1554, 0.0
        %1559 = vadd.xlane.f32.xlu0 %v1558
        %v1560 = vpop.xlane.xlu0 %1559
        %v1561 = vrcp.pop %v1557
        %v1562 = vrcp.pop %v1560
        %v1563 = vmul.f32 %v1552, %v1561
        %v1564 = vmul.f32 %v1554, %v1562
        %v1565 = vpack.c.bf16 %v1564, %v1563
        %1567 = vrot.lane.b32.xlu0 %v1129, 96
        %v1568 = vpop.permute.xlu0 %1567
        %v1571 = vsel %vm1178, %v1565, 0
        %1573 = vmatprep.subr.bf16.mxu0 0
        %1574 = vmatpush1.bf16.msra.mxu0 0
        %1575 = vmatprep.subr.bf16.mxu0 0
        %1576 = vmatpush1.bf16.msra.mxu0 0
        %1577 = vmatprep.subr.bf16.mxu0 0
        %1578 = vmatpush1.bf16.msra.mxu0 0
        %1579 = vmatprep.subr.bf16.mxu0 0
        %1580 = vmatpush1.bf16.msra.mxu0 0
        %1581 = vmatprep.subr.bf16.mxu0 0
        %1582 = vmatpush1.bf16.msra.mxu0 0
        %1583 = vmatprep.subr.bf16.mxu0 0
        %1584 = vmatpush1.bf16.msra.mxu0 0
        %1585 = vmatprep.subr.bf16.mxu0 0
        %1586 = vmatpush1.bf16.msra.mxu0 0
        %1587 = vmatprep.subr.bf16.mxu0 0
        %1588 = vmatpush1.bf16.msra.mxu0 %v1568
        %1589 = vmatprep.subr.bf16.mxu0 0
        %1590 = vmatpush2.bf16.msra.mxu0 0
        %1591 = vmatprep.subr.bf16.mxu0 0
        %1592 = vmatpush2.bf16.msra.mxu0 0
        %1593 = vmatprep.subr.bf16.mxu0 0
        %1594 = vmatpush2.bf16.msra.mxu0 0
        %1595 = vmatprep.subr.bf16.mxu0 0
        %1596 = vmatpush2.bf16.msra.mxu0 0
        %1597 = vmatprep.subr.bf16.mxu0 0
        %1598 = vmatpush2.bf16.msra.mxu0 0
        %1599 = vmatprep.subr.bf16.mxu0 0
        %1600 = vmatpush2.bf16.msra.mxu0 0
        %1601 = vmatprep.subr.bf16.mxu0 0
        %1602 = vmatpush2.bf16.msra.mxu0 0
        %1603 = vmatprep.subr.bf16.mxu0 0
        %1604 = vmatpush2.bf16.msra.mxu0 0
        %1605 = vmatprep.mubr.bf16.mxu0 0
        %1606 = vmatmul.mubr.bf16.gmra.mxu0 %v1571
        %v1607 = vpop.f32.mrf.mxu0
        %v1608 = vadd.f32 0.0, %v1607
        %v1609 = vpop.f32.mrf.mxu0
        %v1610 = vpop.f32.mrf.mxu0
        %v1611 = vadd.f32 0.0, %v1610
        %v1612 = vpop.f32.mrf.mxu0
        %1613 = vdwg.mxu0
        %v1614 = vpack.c.bf16 %v1487, %v1484
        %v1615 = vpack.c.bf16 %v1611, %v1608
        %s1616 = scalar_lea.vmem [#allocation7], 16
        %v1617 = vld [vmem:[%s1616] sm:$0xf]
        %v1618 = vld [vmem:[%s1616 + $0x4] sm:$0xf]
        %v1619 = vld [vmem:[%s1616 + $0x8] sm:$0xf]
        %v1620 = vld [vmem:[%s1616 + $0xc] sm:$0xf]
        %v1625 = vunpack.c.l.b16 %v1617
        %v1626 = vunpack.c.l.b16 %v1618
        %v1627 = vunpack.c.l.b16 %v1619
        %v1628 = vunpack.c.l.b16 %v1620
        %v1629 = vpack.c.b16 %v1626, %v1625
        %v1630 = vpack.c.b16 %v1628, %v1627
        %v1634 = vsel %vm1130, %v1614, 0
        %v1637 = vsel %vm1130, %v1615, 0
        %1639 = vmatprep.subr.bf16.mxu0 0
        %1640 = vmatpush1.bf16.msra.mxu0 0
        %1641 = vmatprep.subr.bf16.mxu0 0
        %1642 = vmatpush1.bf16.msra.mxu0 0
        %1643 = vmatprep.subr.bf16.mxu0 0
        %1644 = vmatpush1.bf16.msra.mxu0 0
        %1645 = vmatprep.subr.bf16.mxu0 0
        %1646 = vmatpush1.bf16.msra.mxu0 0
        %1647 = vmatprep.subr.bf16.mxu0 0
        %1648 = vmatpush1.bf16.msra.mxu0 0
        %1649 = vmatprep.subr.bf16.mxu0 0
        %1650 = vmatpush1.bf16.msra.mxu0 0
        %1651 = vmatprep.subr.bf16.mxu0 0
        %1652 = vmatpush1.bf16.msra.mxu0 %v1630
        %1653 = vmatprep.subr.bf16.mxu0 0
        %1654 = vmatpush1.bf16.msra.mxu0 %v1629
        %1655 = vmatprep.subr.bf16.mxu0 0
        %1656 = vmatpush2.bf16.msra.mxu0 0
        %1657 = vmatprep.subr.bf16.mxu0 0
        %1658 = vmatpush2.bf16.msra.mxu0 0
        %1659 = vmatprep.subr.bf16.mxu0 0
        %1660 = vmatpush2.bf16.msra.mxu0 0
        %1661 = vmatprep.subr.bf16.mxu0 0
        %1662 = vmatpush2.bf16.msra.mxu0 0
        %1663 = vmatprep.subr.bf16.mxu0 0
        %1664 = vmatpush2.bf16.msra.mxu0 0
        %1665 = vmatprep.subr.bf16.mxu0 0
        %1666 = vmatpush2.bf16.msra.mxu0 0
        %1667 = vmatprep.subr.bf16.mxu0 0
        %1668 = vmatpush2.bf16.msra.mxu0 0
        %1669 = vmatprep.subr.bf16.mxu0 0
        %1670 = vmatpush2.bf16.msra.mxu0 0
        %1671 = vmatprep.mubr.bf16.mxu0 0
        %1672 = vmatmul.mubr.bf16.gmra.mxu0 %v1634
        %v1673 = vpop.f32.mrf.mxu0
        %v1674 = vadd.f32 0.0, %v1673
        %v1675 = vpop.f32.mrf.mxu0
        %v1676 = vpop.f32.mrf.mxu0
        %v1677 = vadd.f32 0.0, %v1676
        %v1678 = vpop.f32.mrf.mxu0
        %1679 = vmatprep.mubr.bf16.mxu0 0
        %1680 = vmatmul.mubr.bf16.gmra.mxu0 %v1637
        %v1681 = vpop.f32.mrf.mxu0
        %v1682 = vadd.f32 0.0, %v1681
        %v1683 = vpop.f32.mrf.mxu0
        %v1684 = vpop.f32.mrf.mxu0
        %v1685 = vadd.f32 0.0, %v1684
        %v1686 = vpop.f32.mrf.mxu0
        %1687 = vdwg.mxu0
        %v1692 = vunpack.c.l.b16 %v1362
        %v1693 = vunpack.c.l.b16 %v1363
        %v1694 = vunpack.c.l.b16 %v1364
        %v1695 = vunpack.c.l.b16 %v1365
        %v1696 = vpack.c.b16 %v1693, %v1692
        %v1697 = vpack.c.b16 %v1695, %v1694
        %v1701 = vsel %vm1130, %v1360, 0
        %v1704 = vsel %vm1130, %v1361, 0
        %1706 = vmatprep.subr.bf16.mxu0 0
        %1707 = vmatpush1.bf16.msra.mxu0 0
        %1708 = vmatprep.subr.bf16.mxu0 0
        %1709 = vmatpush1.bf16.msra.mxu0 0
        %1710 = vmatprep.subr.bf16.mxu0 0
        %1711 = vmatpush1.bf16.msra.mxu0 0
        %1712 = vmatprep.subr.bf16.mxu0 0
        %1713 = vmatpush1.bf16.msra.mxu0 0
        %1714 = vmatprep.subr.bf16.mxu0 0
        %1715 = vmatpush1.bf16.msra.mxu0 0
        %1716 = vmatprep.subr.bf16.mxu0 0
        %1717 = vmatpush1.bf16.msra.mxu0 0
        %1718 = vmatprep.subr.bf16.mxu0 0
        %1719 = vmatpush1.bf16.msra.mxu0 %v1697
        %1720 = vmatprep.subr.bf16.mxu0 0
        %1721 = vmatpush1.bf16.msra.mxu0 %v1696
        %1722 = vmatprep.subr.bf16.mxu0 0
        %1723 = vmatpush2.bf16.msra.mxu0 0
        %1724 = vmatprep.subr.bf16.mxu0 0
        %1725 = vmatpush2.bf16.msra.mxu0 0
        %1726 = vmatprep.subr.bf16.mxu0 0
        %1727 = vmatpush2.bf16.msra.mxu0 0
        %1728 = vmatprep.subr.bf16.mxu0 0
        %1729 = vmatpush2.bf16.msra.mxu0 0
        %1730 = vmatprep.subr.bf16.mxu0 0
        %1731 = vmatpush2.bf16.msra.mxu0 0
        %1732 = vmatprep.subr.bf16.mxu0 0
        %1733 = vmatpush2.bf16.msra.mxu0 0
        %1734 = vmatprep.subr.bf16.mxu0 0
        %1735 = vmatpush2.bf16.msra.mxu0 0
        %1736 = vmatprep.subr.bf16.mxu0 0
        %1737 = vmatpush2.bf16.msra.mxu0 0
        %1738 = vmatprep.mubr.bf16.mxu0 0
        %1739 = vmatmul.mubr.bf16.gmra.mxu0 %v1701
        %v1740 = vpop.f32.mrf.mxu0
        %v1741 = vadd.f32 %v1674, %v1740
        %v1742 = vpop.f32.mrf.mxu0
        %v1743 = vpop.f32.mrf.mxu0
        %v1744 = vadd.f32 %v1677, %v1743
        %v1745 = vpop.f32.mrf.mxu0
        %1746 = vmatprep.mubr.bf16.mxu0 0
        %1747 = vmatmul.mubr.bf16.gmra.mxu0 %v1704
        %v1748 = vpop.f32.mrf.mxu0
        %v1749 = vadd.f32 %v1682, %v1748
        %v1750 = vpop.f32.mrf.mxu0
        %v1751 = vpop.f32.mrf.mxu0
        %v1752 = vadd.f32 %v1685, %v1751
        %v1753 = vpop.f32.mrf.mxu0
        %1754 = vdwg.mxu0
        %1755 = vrot.lane.b32.xlu0 %v1124, 64
        %v1756 = vpop.permute.xlu0 %1755
        %1757 = vrot.lane.b32.xlu0 %v1126, 64
        %v1758 = vpop.permute.xlu0 %1757
        %v1760 = vsel %vm1130, %v1756, 0
        %v1763 = vsel %vm1130, %v1758, 0
        %1765 = vmatprep.subr.bf16.mxu0 0
        %1766 = vmatpush1.bf16.xpose.msra.mxu0 0
        %1767 = vmatprep.subr.bf16.mxu0 0
        %1768 = vmatpush1.bf16.xpose.msra.mxu0 0
        %1769 = vmatprep.subr.bf16.mxu0 0
        %1770 = vmatpush1.bf16.xpose.msra.mxu0 0
        %1771 = vmatprep.subr.bf16.mxu0 0
        %1772 = vmatpush1.bf16.xpose.msra.mxu0 0
        %1773 = vmatprep.subr.bf16.mxu0 0
        %1774 = vmatpush1.bf16.xpose.msra.mxu0 0
        %1775 = vmatprep.subr.bf16.mxu0 0
        %1776 = vmatpush1.bf16.xpose.msra.mxu0 0
        %1777 = vmatprep.subr.bf16.mxu0 0
        %1778 = vmatpush1.bf16.xpose.msra.mxu0 0
        %1779 = vmatprep.subr.bf16.mxu0 0
        %1780 = vmatpush1.bf16.xpose.msra.mxu0 %v1763
        %1781 = vmatprep.subr.bf16.mxu0 0
        %1782 = vmatpush2.bf16.xpose.msra.mxu0 0
        %1783 = vmatprep.subr.bf16.mxu0 0
        %1784 = vmatpush2.bf16.xpose.msra.mxu0 0
        %1785 = vmatprep.subr.bf16.mxu0 0
        %1786 = vmatpush2.bf16.xpose.msra.mxu0 0
        %1787 = vmatprep.subr.bf16.mxu0 0
        %1788 = vmatpush2.bf16.xpose.msra.mxu0 0
        %1789 = vmatprep.subr.bf16.mxu0 0
        %1790 = vmatpush2.bf16.xpose.msra.mxu0 0
        %1791 = vmatprep.subr.bf16.mxu0 0
        %1792 = vmatpush2.bf16.xpose.msra.mxu0 0
        %1793 = vmatprep.subr.bf16.mxu0 0
        %1794 = vmatpush2.bf16.xpose.msra.mxu0 0
        %1795 = vmatprep.subr.bf16.mxu0 0
        %1796 = vmatpush2.bf16.xpose.msra.mxu0 0
        %1797 = vmatprep.mubr.bf16.mxu0 0
        %1798 = vmatmul.mubr.bf16.gmra.mxu0 %v1760
        %v1799 = vpop.f32.mrf.mxu0
        %v1800 = vadd.f32 0.0, %v1799
        %v1801 = vpop.f32.mrf.mxu0
        %v1802 = vpop.f32.mrf.mxu0
        %v1803 = vadd.f32 0.0, %v1802
        %v1804 = vpop.f32.mrf.mxu0
        %1805 = vdwg.mxu0
        %v1806 = vsel %vm1178, %v1800, -inf
        %1807 = vmax.xlane.f32.xlu0 %v1806
        %v1808 = vpop.xlane.xlu0 %1807
        %v1809 = vsel %vm1178, %v1803, -inf
        %1810 = vmax.xlane.f32.xlu0 %v1809
        %v1811 = vpop.xlane.xlu0 %1810
        %v1812 = vsub.f32 %v1800, %v1808
        %v1813 = vsub.f32 %v1803, %v1811
        %v1814 = vmul.f32 %v1812, 1.442695
        %v1815 = vpow.pop %v1814
        %v1816 = vmul.f32 %v1813, 1.442695
        %v1817 = vpow.pop %v1816
        %v1818 = vsel %vm1178, %v1815, 0.0
        %1819 = vadd.xlane.f32.xlu0 %v1818
        %v1820 = vpop.xlane.xlu0 %1819
        %v1821 = vsel %vm1178, %v1817, 0.0
        %1822 = vadd.xlane.f32.xlu0 %v1821
        %v1823 = vpop.xlane.xlu0 %1822
        %v1824 = vrcp.pop %v1820
        %v1825 = vrcp.pop %v1823
        %v1826 = vmul.f32 %v1815, %v1824
        %v1827 = vmul.f32 %v1817, %v1825
        %v1828 = vpack.c.bf16 %v1827, %v1826
        %1829 = vrot.lane.b32.xlu0 %v1128, 64
        %v1830 = vpop.permute.xlu0 %1829
        %v1833 = vsel %vm1178, %v1828, 0
        %1835 = vmatprep.subr.bf16.mxu0 0
        %1836 = vmatpush1.bf16.msra.mxu0 0
        %1837 = vmatprep.subr.bf16.mxu0 0
        %1838 = vmatpush1.bf16.msra.mxu0 0
        %1839 = vmatprep.subr.bf16.mxu0 0
        %1840 = vmatpush1.bf16.msra.mxu0 0
        %1841 = vmatprep.subr.bf16.mxu0 0
        %1842 = vmatpush1.bf16.msra.mxu0 0
        %1843 = vmatprep.subr.bf16.mxu0 0
        %1844 = vmatpush1.bf16.msra.mxu0 0
        %1845 = vmatprep.subr.bf16.mxu0 0
        %1846 = vmatpush1.bf16.msra.mxu0 0
        %1847 = vmatprep.subr.bf16.mxu0 0
        %1848 = vmatpush1.bf16.msra.mxu0 0
        %1849 = vmatprep.subr.bf16.mxu0 0
        %1850 = vmatpush1.bf16.msra.mxu0 %v1830
        %1851 = vmatprep.subr.bf16.mxu0 0
        %1852 = vmatpush2.bf16.msra.mxu0 0
        %1853 = vmatprep.subr.bf16.mxu0 0
        %1854 = vmatpush2.bf16.msra.mxu0 0
        %1855 = vmatprep.subr.bf16.mxu0 0
        %1856 = vmatpush2.bf16.msra.mxu0 0
        %1857 = vmatprep.subr.bf16.mxu0 0
        %1858 = vmatpush2.bf16.msra.mxu0 0
        %1859 = vmatprep.subr.bf16.mxu0 0
        %1860 = vmatpush2.bf16.msra.mxu0 0
        %1861 = vmatprep.subr.bf16.mxu0 0
        %1862 = vmatpush2.bf16.msra.mxu0 0
        %1863 = vmatprep.subr.bf16.mxu0 0
        %1864 = vmatpush2.bf16.msra.mxu0 0
        %1865 = vmatprep.subr.bf16.mxu0 0
        %1866 = vmatpush2.bf16.msra.mxu0 0
        %1867 = vmatprep.mubr.bf16.mxu0 0
        %1868 = vmatmul.mubr.bf16.gmra.mxu0 %v1833
        %v1869 = vpop.f32.mrf.mxu0
        %v1870 = vadd.f32 0.0, %v1869
        %v1871 = vpop.f32.mrf.mxu0
        %v1872 = vpop.f32.mrf.mxu0
        %v1873 = vadd.f32 0.0, %v1872
        %v1874 = vpop.f32.mrf.mxu0
        %1875 = vdwg.mxu0
        %1876 = vrot.lane.b32.xlu0 %v1125, 64
        %v1877 = vpop.permute.xlu0 %1876
        %1878 = vrot.lane.b32.xlu0 %v1127, 64
        %v1879 = vpop.permute.xlu0 %1878
        %v1881 = vsel %vm1130, %v1877, 0
        %v1884 = vsel %vm1130, %v1879, 0
        %1886 = vmatprep.subr.bf16.mxu0 0
        %1887 = vmatpush1.bf16.xpose.msra.mxu0 0
        %1888 = vmatprep.subr.bf16.mxu0 0
        %1889 = vmatpush1.bf16.xpose.msra.mxu0 0
        %1890 = vmatprep.subr.bf16.mxu0 0
        %1891 = vmatpush1.bf16.xpose.msra.mxu0 0
        %1892 = vmatprep.subr.bf16.mxu0 0
        %1893 = vmatpush1.bf16.xpose.msra.mxu0 0
        %1894 = vmatprep.subr.bf16.mxu0 0
        %1895 = vmatpush1.bf16.xpose.msra.mxu0 0
        %1896 = vmatprep.subr.bf16.mxu0 0
        %1897 = vmatpush1.bf16.xpose.msra.mxu0 0
        %1898 = vmatprep.subr.bf16.mxu0 0
        %1899 = vmatpush1.bf16.xpose.msra.mxu0 0
        %1900 = vmatprep.subr.bf16.mxu0 0
        %1901 = vmatpush1.bf16.xpose.msra.mxu0 %v1884
        %1902 = vmatprep.subr.bf16.mxu0 0
        %1903 = vmatpush2.bf16.xpose.msra.mxu0 0
        %1904 = vmatprep.subr.bf16.mxu0 0
        %1905 = vmatpush2.bf16.xpose.msra.mxu0 0
        %1906 = vmatprep.subr.bf16.mxu0 0
        %1907 = vmatpush2.bf16.xpose.msra.mxu0 0
        %1908 = vmatprep.subr.bf16.mxu0 0
        %1909 = vmatpush2.bf16.xpose.msra.mxu0 0
        %1910 = vmatprep.subr.bf16.mxu0 0
        %1911 = vmatpush2.bf16.xpose.msra.mxu0 0
        %1912 = vmatprep.subr.bf16.mxu0 0
        %1913 = vmatpush2.bf16.xpose.msra.mxu0 0
        %1914 = vmatprep.subr.bf16.mxu0 0
        %1915 = vmatpush2.bf16.xpose.msra.mxu0 0
        %1916 = vmatprep.subr.bf16.mxu0 0
        %1917 = vmatpush2.bf16.xpose.msra.mxu0 0
        %1918 = vmatprep.mubr.bf16.mxu0 0
        %1919 = vmatmul.mubr.bf16.gmra.mxu0 %v1881
        %v1920 = vpop.f32.mrf.mxu0
        %v1921 = vadd.f32 0.0, %v1920
        %v1922 = vpop.f32.mrf.mxu0
        %v1923 = vpop.f32.mrf.mxu0
        %v1924 = vadd.f32 0.0, %v1923
        %v1925 = vpop.f32.mrf.mxu0
        %1926 = vdwg.mxu0
        %v1927 = vsel %vm1178, %v1921, -inf
        %1928 = vmax.xlane.f32.xlu0 %v1927
        %v1929 = vpop.xlane.xlu0 %1928
        %v1930 = vsel %vm1178, %v1924, -inf
        %1931 = vmax.xlane.f32.xlu0 %v1930
        %v1932 = vpop.xlane.xlu0 %1931
        %v1933 = vsub.f32 %v1921, %v1929
        %v1934 = vsub.f32 %v1924, %v1932
        %v1935 = vmul.f32 %v1933, 1.442695
        %v1936 = vpow.pop %v1935
        %v1937 = vmul.f32 %v1934, 1.442695
        %v1938 = vpow.pop %v1937
        %v1939 = vsel %vm1178, %v1936, 0.0
        %1940 = vadd.xlane.f32.xlu0 %v1939
        %v1941 = vpop.xlane.xlu0 %1940
        %v1942 = vsel %vm1178, %v1938, 0.0
        %1943 = vadd.xlane.f32.xlu0 %v1942
        %v1944 = vpop.xlane.xlu0 %1943
        %v1945 = vrcp.pop %v1941
        %v1946 = vrcp.pop %v1944
        %v1947 = vmul.f32 %v1936, %v1945
        %v1948 = vmul.f32 %v1938, %v1946
        %v1949 = vpack.c.bf16 %v1948, %v1947
        %1950 = vrot.lane.b32.xlu0 %v1129, 64
        %v1951 = vpop.permute.xlu0 %1950
        %v1954 = vsel %vm1178, %v1949, 0
        %1956 = vmatprep.subr.bf16.mxu0 0
        %1957 = vmatpush1.bf16.msra.mxu0 0
        %1958 = vmatprep.subr.bf16.mxu0 0
        %1959 = vmatpush1.bf16.msra.mxu0 0
        %1960 = vmatprep.subr.bf16.mxu0 0
        %1961 = vmatpush1.bf16.msra.mxu0 0
        %1962 = vmatprep.subr.bf16.mxu0 0
        %1963 = vmatpush1.bf16.msra.mxu0 0
        %1964 = vmatprep.subr.bf16.mxu0 0
        %1965 = vmatpush1.bf16.msra.mxu0 0
        %1966 = vmatprep.subr.bf16.mxu0 0
        %1967 = vmatpush1.bf16.msra.mxu0 0
        %1968 = vmatprep.subr.bf16.mxu0 0
        %1969 = vmatpush1.bf16.msra.mxu0 0
        %1970 = vmatprep.subr.bf16.mxu0 0
        %1971 = vmatpush1.bf16.msra.mxu0 %v1951
        %1972 = vmatprep.subr.bf16.mxu0 0
        %1973 = vmatpush2.bf16.msra.mxu0 0
        %1974 = vmatprep.subr.bf16.mxu0 0
        %1975 = vmatpush2.bf16.msra.mxu0 0
        %1976 = vmatprep.subr.bf16.mxu0 0
        %1977 = vmatpush2.bf16.msra.mxu0 0
        %1978 = vmatprep.subr.bf16.mxu0 0
        %1979 = vmatpush2.bf16.msra.mxu0 0
        %1980 = vmatprep.subr.bf16.mxu0 0
        %1981 = vmatpush2.bf16.msra.mxu0 0
        %1982 = vmatprep.subr.bf16.mxu0 0
        %1983 = vmatpush2.bf16.msra.mxu0 0
        %1984 = vmatprep.subr.bf16.mxu0 0
        %1985 = vmatpush2.bf16.msra.mxu0 0
        %1986 = vmatprep.subr.bf16.mxu0 0
        %1987 = vmatpush2.bf16.msra.mxu0 0
        %1988 = vmatprep.mubr.bf16.mxu0 0
        %1989 = vmatmul.mubr.bf16.gmra.mxu0 %v1954
        %v1990 = vpop.f32.mrf.mxu0
        %v1991 = vadd.f32 0.0, %v1990
        %v1992 = vpop.f32.mrf.mxu0
        %v1993 = vpop.f32.mrf.mxu0
        %v1994 = vadd.f32 0.0, %v1993
        %v1995 = vpop.f32.mrf.mxu0
        %1996 = vdwg.mxu0
        %v1997 = vpack.c.bf16 %v1873, %v1870
        %v1998 = vpack.c.bf16 %v1994, %v1991
        %s1999 = scalar_lea.vmem [#allocation7], 32
        %v2000 = vld [vmem:[%s1999] sm:$0xf]
        %v2001 = vld [vmem:[%s1999 + $0x4] sm:$0xf]
        %v2002 = vld [vmem:[%s1999 + $0x8] sm:$0xf]
        %v2003 = vld [vmem:[%s1999 + $0xc] sm:$0xf]
        %v2008 = vunpack.c.l.b16 %v2000
        %v2009 = vunpack.c.l.b16 %v2001
        %v2010 = vunpack.c.l.b16 %v2002
        %v2011 = vunpack.c.l.b16 %v2003
        %v2012 = vpack.c.b16 %v2009, %v2008
        %v2013 = vpack.c.b16 %v2011, %v2010
        %v2017 = vsel %vm1130, %v1997, 0
        %v2020 = vsel %vm1130, %v1998, 0
        %2022 = vmatprep.subr.bf16.mxu0 0
        %2023 = vmatpush1.bf16.msra.mxu0 0
        %2024 = vmatprep.subr.bf16.mxu0 0
        %2025 = vmatpush1.bf16.msra.mxu0 0
        %2026 = vmatprep.subr.bf16.mxu0 0
        %2027 = vmatpush1.bf16.msra.mxu0 0
        %2028 = vmatprep.subr.bf16.mxu0 0
        %2029 = vmatpush1.bf16.msra.mxu0 0
        %2030 = vmatprep.subr.bf16.mxu0 0
        %2031 = vmatpush1.bf16.msra.mxu0 0
        %2032 = vmatprep.subr.bf16.mxu0 0
        %2033 = vmatpush1.bf16.msra.mxu0 0
        %2034 = vmatprep.subr.bf16.mxu0 0
        %2035 = vmatpush1.bf16.msra.mxu0 %v2013
        %2036 = vmatprep.subr.bf16.mxu0 0
        %2037 = vmatpush1.bf16.msra.mxu0 %v2012
        %2038 = vmatprep.subr.bf16.mxu0 0
        %2039 = vmatpush2.bf16.msra.mxu0 0
        %2040 = vmatprep.subr.bf16.mxu0 0
        %2041 = vmatpush2.bf16.msra.mxu0 0
        %2042 = vmatprep.subr.bf16.mxu0 0
        %2043 = vmatpush2.bf16.msra.mxu0 0
        %2044 = vmatprep.subr.bf16.mxu0 0
        %2045 = vmatpush2.bf16.msra.mxu0 0
        %2046 = vmatprep.subr.bf16.mxu0 0
        %2047 = vmatpush2.bf16.msra.mxu0 0
        %2048 = vmatprep.subr.bf16.mxu0 0
        %2049 = vmatpush2.bf16.msra.mxu0 0
        %2050 = vmatprep.subr.bf16.mxu0 0
        %2051 = vmatpush2.bf16.msra.mxu0 0
        %2052 = vmatprep.subr.bf16.mxu0 0
        %2053 = vmatpush2.bf16.msra.mxu0 0
        %2054 = vmatprep.mubr.bf16.mxu0 0
        %2055 = vmatmul.mubr.bf16.gmra.mxu0 %v2017
        %v2056 = vpop.f32.mrf.mxu0
        %v2057 = vadd.f32 0.0, %v2056
        %v2058 = vpop.f32.mrf.mxu0
        %v2059 = vpop.f32.mrf.mxu0
        %v2060 = vadd.f32 0.0, %v2059
        %v2061 = vpop.f32.mrf.mxu0
        %2062 = vmatprep.mubr.bf16.mxu0 0
        %2063 = vmatmul.mubr.bf16.gmra.mxu0 %v2020
        %v2064 = vpop.f32.mrf.mxu0
        %v2065 = vadd.f32 0.0, %v2064
        %v2066 = vpop.f32.mrf.mxu0
        %v2067 = vpop.f32.mrf.mxu0
        %v2068 = vadd.f32 0.0, %v2067
        %v2069 = vpop.f32.mrf.mxu0
        %2070 = vdwg.mxu0
        %v2071 = vadd.f32 %v1741, %v2057
        %v2072 = vadd.f32 %v1744, %v2060
        %v2073 = vadd.f32 %v1749, %v2065
        %v2074 = vadd.f32 %v1752, %v2068
        %2075 = vrot.lane.b32.xlu0 %v1124, 32
        %v2076 = vpop.permute.xlu0 %2075
        %2077 = vrot.lane.b32.xlu0 %v1126, 32
        %v2078 = vpop.permute.xlu0 %2077
        %v2080 = vsel %vm1130, %v2076, 0
        %v2083 = vsel %vm1130, %v2078, 0
        %2085 = vmatprep.subr.bf16.mxu0 0
        %2086 = vmatpush1.bf16.xpose.msra.mxu0 0
        %2087 = vmatprep.subr.bf16.mxu0 0
        %2088 = vmatpush1.bf16.xpose.msra.mxu0 0
        %2089 = vmatprep.subr.bf16.mxu0 0
        %2090 = vmatpush1.bf16.xpose.msra.mxu0 0
        %2091 = vmatprep.subr.bf16.mxu0 0
        %2092 = vmatpush1.bf16.xpose.msra.mxu0 0
        %2093 = vmatprep.subr.bf16.mxu0 0
        %2094 = vmatpush1.bf16.xpose.msra.mxu0 0
        %2095 = vmatprep.subr.bf16.mxu0 0
        %2096 = vmatpush1.bf16.xpose.msra.mxu0 0
        %2097 = vmatprep.subr.bf16.mxu0 0
        %2098 = vmatpush1.bf16.xpose.msra.mxu0 0
        %2099 = vmatprep.subr.bf16.mxu0 0
        %2100 = vmatpush1.bf16.xpose.msra.mxu0 %v2083
        %2101 = vmatprep.subr.bf16.mxu0 0
        %2102 = vmatpush2.bf16.xpose.msra.mxu0 0
        %2103 = vmatprep.subr.bf16.mxu0 0
        %2104 = vmatpush2.bf16.xpose.msra.mxu0 0
        %2105 = vmatprep.subr.bf16.mxu0 0
        %2106 = vmatpush2.bf16.xpose.msra.mxu0 0
        %2107 = vmatprep.subr.bf16.mxu0 0
        %2108 = vmatpush2.bf16.xpose.msra.mxu0 0
        %2109 = vmatprep.subr.bf16.mxu0 0
        %2110 = vmatpush2.bf16.xpose.msra.mxu0 0
        %2111 = vmatprep.subr.bf16.mxu0 0
        %2112 = vmatpush2.bf16.xpose.msra.mxu0 0
        %2113 = vmatprep.subr.bf16.mxu0 0
        %2114 = vmatpush2.bf16.xpose.msra.mxu0 0
        %2115 = vmatprep.subr.bf16.mxu0 0
        %2116 = vmatpush2.bf16.xpose.msra.mxu0 0
        %2117 = vmatprep.mubr.bf16.mxu0 0
        %2118 = vmatmul.mubr.bf16.gmra.mxu0 %v2080
        %v2119 = vpop.f32.mrf.mxu0
        %v2120 = vadd.f32 0.0, %v2119
        %v2121 = vpop.f32.mrf.mxu0
        %v2122 = vpop.f32.mrf.mxu0
        %v2123 = vadd.f32 0.0, %v2122
        %v2124 = vpop.f32.mrf.mxu0
        %2125 = vdwg.mxu0
        %v2126 = vsel %vm1178, %v2120, -inf
        %2127 = vmax.xlane.f32.xlu0 %v2126
        %v2128 = vpop.xlane.xlu0 %2127
        %v2129 = vsel %vm1178, %v2123, -inf
        %2130 = vmax.xlane.f32.xlu0 %v2129
        %v2131 = vpop.xlane.xlu0 %2130
        %v2132 = vsub.f32 %v2120, %v2128
        %v2133 = vsub.f32 %v2123, %v2131
        %v2134 = vmul.f32 %v2132, 1.442695
        %v2135 = vpow.pop %v2134
        %v2136 = vmul.f32 %v2133, 1.442695
        %v2137 = vpow.pop %v2136
        %v2138 = vsel %vm1178, %v2135, 0.0
        %2139 = vadd.xlane.f32.xlu0 %v2138
        %v2140 = vpop.xlane.xlu0 %2139
        %v2141 = vsel %vm1178, %v2137, 0.0
        %2142 = vadd.xlane.f32.xlu0 %v2141
        %v2143 = vpop.xlane.xlu0 %2142
        %v2144 = vrcp.pop %v2140
        %v2145 = vrcp.pop %v2143
        %v2146 = vmul.f32 %v2135, %v2144
        %v2147 = vmul.f32 %v2137, %v2145
        %v2148 = vpack.c.bf16 %v2147, %v2146
        %2149 = vrot.lane.b32.xlu0 %v1128, 32
        %v2150 = vpop.permute.xlu0 %2149
        %v2153 = vsel %vm1178, %v2148, 0
        %2155 = vmatprep.subr.bf16.mxu0 0
        %2156 = vmatpush1.bf16.msra.mxu0 0
        %2157 = vmatprep.subr.bf16.mxu0 0
        %2158 = vmatpush1.bf16.msra.mxu0 0
        %2159 = vmatprep.subr.bf16.mxu0 0
        %2160 = vmatpush1.bf16.msra.mxu0 0
        %2161 = vmatprep.subr.bf16.mxu0 0
        %2162 = vmatpush1.bf16.msra.mxu0 0
        %2163 = vmatprep.subr.bf16.mxu0 0
        %2164 = vmatpush1.bf16.msra.mxu0 0
        %2165 = vmatprep.subr.bf16.mxu0 0
        %2166 = vmatpush1.bf16.msra.mxu0 0
        %2167 = vmatprep.subr.bf16.mxu0 0
        %2168 = vmatpush1.bf16.msra.mxu0 0
        %2169 = vmatprep.subr.bf16.mxu0 0
        %2170 = vmatpush1.bf16.msra.mxu0 %v2150
        %2171 = vmatprep.subr.bf16.mxu0 0
        %2172 = vmatpush2.bf16.msra.mxu0 0
        %2173 = vmatprep.subr.bf16.mxu0 0
        %2174 = vmatpush2.bf16.msra.mxu0 0
        %2175 = vmatprep.subr.bf16.mxu0 0
        %2176 = vmatpush2.bf16.msra.mxu0 0
        %2177 = vmatprep.subr.bf16.mxu0 0
        %2178 = vmatpush2.bf16.msra.mxu0 0
        %2179 = vmatprep.subr.bf16.mxu0 0
        %2180 = vmatpush2.bf16.msra.mxu0 0
        %2181 = vmatprep.subr.bf16.mxu0 0
        %2182 = vmatpush2.bf16.msra.mxu0 0
        %2183 = vmatprep.subr.bf16.mxu0 0
        %2184 = vmatpush2.bf16.msra.mxu0 0
        %2185 = vmatprep.subr.bf16.mxu0 0
        %2186 = vmatpush2.bf16.msra.mxu0 0
        %2187 = vmatprep.mubr.bf16.mxu0 0
        %2188 = vmatmul.mubr.bf16.gmra.mxu0 %v2153
        %v2189 = vpop.f32.mrf.mxu0
        %v2190 = vadd.f32 0.0, %v2189
        %v2191 = vpop.f32.mrf.mxu0
        %v2192 = vpop.f32.mrf.mxu0
        %v2193 = vadd.f32 0.0, %v2192
        %v2194 = vpop.f32.mrf.mxu0
        %2195 = vdwg.mxu0
        %2196 = vrot.lane.b32.xlu0 %v1125, 32
        %v2197 = vpop.permute.xlu0 %2196
        %2198 = vrot.lane.b32.xlu0 %v1127, 32
        %v2199 = vpop.permute.xlu0 %2198
        %v2201 = vsel %vm1130, %v2197, 0
        %v2204 = vsel %vm1130, %v2199, 0
        %2206 = vmatprep.subr.bf16.mxu0 0
        %2207 = vmatpush1.bf16.xpose.msra.mxu0 0
        %2208 = vmatprep.subr.bf16.mxu0 0
        %2209 = vmatpush1.bf16.xpose.msra.mxu0 0
        %2210 = vmatprep.subr.bf16.mxu0 0
        %2211 = vmatpush1.bf16.xpose.msra.mxu0 0
        %2212 = vmatprep.subr.bf16.mxu0 0
        %2213 = vmatpush1.bf16.xpose.msra.mxu0 0
        %2214 = vmatprep.subr.bf16.mxu0 0
        %2215 = vmatpush1.bf16.xpose.msra.mxu0 0
        %2216 = vmatprep.subr.bf16.mxu0 0
        %2217 = vmatpush1.bf16.xpose.msra.mxu0 0
        %2218 = vmatprep.subr.bf16.mxu0 0
        %2219 = vmatpush1.bf16.xpose.msra.mxu0 0
        %2220 = vmatprep.subr.bf16.mxu0 0
        %2221 = vmatpush1.bf16.xpose.msra.mxu0 %v2204
        %2222 = vmatprep.subr.bf16.mxu0 0
        %2223 = vmatpush2.bf16.xpose.msra.mxu0 0
        %2224 = vmatprep.subr.bf16.mxu0 0
        %2225 = vmatpush2.bf16.xpose.msra.mxu0 0
        %2226 = vmatprep.subr.bf16.mxu0 0
        %2227 = vmatpush2.bf16.xpose.msra.mxu0 0
        %2228 = vmatprep.subr.bf16.mxu0 0
        %2229 = vmatpush2.bf16.xpose.msra.mxu0 0
        %2230 = vmatprep.subr.bf16.mxu0 0
        %2231 = vmatpush2.bf16.xpose.msra.mxu0 0
        %2232 = vmatprep.subr.bf16.mxu0 0
        %2233 = vmatpush2.bf16.xpose.msra.mxu0 0
        %2234 = vmatprep.subr.bf16.mxu0 0
        %2235 = vmatpush2.bf16.xpose.msra.mxu0 0
        %2236 = vmatprep.subr.bf16.mxu0 0
        %2237 = vmatpush2.bf16.xpose.msra.mxu0 0
        %2238 = vmatprep.mubr.bf16.mxu0 0
        %2239 = vmatmul.mubr.bf16.gmra.mxu0 %v2201
        %v2240 = vpop.f32.mrf.mxu0
        %v2241 = vadd.f32 0.0, %v2240
        %v2242 = vpop.f32.mrf.mxu0
        %v2243 = vpop.f32.mrf.mxu0
        %v2244 = vadd.f32 0.0, %v2243
        %v2245 = vpop.f32.mrf.mxu0
        %2246 = vdwg.mxu0
        %v2247 = vsel %vm1178, %v2241, -inf
        %2248 = vmax.xlane.f32.xlu0 %v2247
        %v2249 = vpop.xlane.xlu0 %2248
        %v2250 = vsel %vm1178, %v2244, -inf
        %2251 = vmax.xlane.f32.xlu0 %v2250
        %v2252 = vpop.xlane.xlu0 %2251
        %v2253 = vsub.f32 %v2241, %v2249
        %v2254 = vsub.f32 %v2244, %v2252
        %v2255 = vmul.f32 %v2253, 1.442695
        %v2256 = vpow.pop %v2255
        %v2257 = vmul.f32 %v2254, 1.442695
        %v2258 = vpow.pop %v2257
        %v2259 = vsel %vm1178, %v2256, 0.0
        %2260 = vadd.xlane.f32.xlu0 %v2259
        %v2261 = vpop.xlane.xlu0 %2260
        %v2262 = vsel %vm1178, %v2258, 0.0
        %2263 = vadd.xlane.f32.xlu0 %v2262
        %v2264 = vpop.xlane.xlu0 %2263
        %v2265 = vrcp.pop %v2261
        %v2266 = vrcp.pop %v2264
        %v2267 = vmul.f32 %v2256, %v2265
        %v2268 = vmul.f32 %v2258, %v2266
        %v2269 = vpack.c.bf16 %v2268, %v2267
        %2270 = vrot.lane.b32.xlu0 %v1129, 32
        %v2271 = vpop.permute.xlu0 %2270
        %v2274 = vsel %vm1178, %v2269, 0
        %2276 = vmatprep.subr.bf16.mxu0 0
        %2277 = vmatpush1.bf16.msra.mxu0 0
        %2278 = vmatprep.subr.bf16.mxu0 0
        %2279 = vmatpush1.bf16.msra.mxu0 0
        %2280 = vmatprep.subr.bf16.mxu0 0
        %2281 = vmatpush1.bf16.msra.mxu0 0
        %2282 = vmatprep.subr.bf16.mxu0 0
        %2283 = vmatpush1.bf16.msra.mxu0 0
        %2284 = vmatprep.subr.bf16.mxu0 0
        %2285 = vmatpush1.bf16.msra.mxu0 0
        %2286 = vmatprep.subr.bf16.mxu0 0
        %2287 = vmatpush1.bf16.msra.mxu0 0
        %2288 = vmatprep.subr.bf16.mxu0 0
        %2289 = vmatpush1.bf16.msra.mxu0 0
        %2290 = vmatprep.subr.bf16.mxu0 0
        %2291 = vmatpush1.bf16.msra.mxu0 %v2271
        %2292 = vmatprep.subr.bf16.mxu0 0
        %2293 = vmatpush2.bf16.msra.mxu0 0
        %2294 = vmatprep.subr.bf16.mxu0 0
        %2295 = vmatpush2.bf16.msra.mxu0 0
        %2296 = vmatprep.subr.bf16.mxu0 0
        %2297 = vmatpush2.bf16.msra.mxu0 0
        %2298 = vmatprep.subr.bf16.mxu0 0
        %2299 = vmatpush2.bf16.msra.mxu0 0
        %2300 = vmatprep.subr.bf16.mxu0 0
        %2301 = vmatpush2.bf16.msra.mxu0 0
        %2302 = vmatprep.subr.bf16.mxu0 0
        %2303 = vmatpush2.bf16.msra.mxu0 0
        %2304 = vmatprep.subr.bf16.mxu0 0
        %2305 = vmatpush2.bf16.msra.mxu0 0
        %2306 = vmatprep.subr.bf16.mxu0 0
        %2307 = vmatpush2.bf16.msra.mxu0 0
        %2308 = vmatprep.mubr.bf16.mxu0 0
        %2309 = vmatmul.mubr.bf16.gmra.mxu0 %v2274
        %v2310 = vpop.f32.mrf.mxu0
        %v2311 = vadd.f32 0.0, %v2310
        %v2312 = vpop.f32.mrf.mxu0
        %v2313 = vpop.f32.mrf.mxu0
        %v2314 = vadd.f32 0.0, %v2313
        %v2315 = vpop.f32.mrf.mxu0
        %2316 = vdwg.mxu0
        %v2317 = vpack.c.bf16 %v2193, %v2190
        %v2318 = vpack.c.bf16 %v2314, %v2311
        %s2319 = scalar_lea.vmem [#allocation7], 48
        %v2320 = vld [vmem:[%s2319] sm:$0xf]
        %v2321 = vld [vmem:[%s2319 + $0x4] sm:$0xf]
        %v2322 = vld [vmem:[%s2319 + $0x8] sm:$0xf]
        %v2323 = vld [vmem:[%s2319 + $0xc] sm:$0xf]
        %v2328 = vunpack.c.l.b16 %v2320
        %v2329 = vunpack.c.l.b16 %v2321
        %v2330 = vunpack.c.l.b16 %v2322
        %v2331 = vunpack.c.l.b16 %v2323
        %v2332 = vpack.c.b16 %v2329, %v2328
        %v2333 = vpack.c.b16 %v2331, %v2330
        %v2337 = vsel %vm1130, %v2317, 0
        %v2340 = vsel %vm1130, %v2318, 0
        %2342 = vmatprep.subr.bf16.mxu0 0
        %2343 = vmatpush1.bf16.msra.mxu0 0
        %2344 = vmatprep.subr.bf16.mxu0 0
        %2345 = vmatpush1.bf16.msra.mxu0 0
        %2346 = vmatprep.subr.bf16.mxu0 0
        %2347 = vmatpush1.bf16.msra.mxu0 0
        %2348 = vmatprep.subr.bf16.mxu0 0
        %2349 = vmatpush1.bf16.msra.mxu0 0
        %2350 = vmatprep.subr.bf16.mxu0 0
        %2351 = vmatpush1.bf16.msra.mxu0 0
        %2352 = vmatprep.subr.bf16.mxu0 0
        %2353 = vmatpush1.bf16.msra.mxu0 0
        %2354 = vmatprep.subr.bf16.mxu0 0
        %2355 = vmatpush1.bf16.msra.mxu0 %v2333
        %2356 = vmatprep.subr.bf16.mxu0 0
        %2357 = vmatpush1.bf16.msra.mxu0 %v2332
        %2358 = vmatprep.subr.bf16.mxu0 0
        %2359 = vmatpush2.bf16.msra.mxu0 0
        %2360 = vmatprep.subr.bf16.mxu0 0
        %2361 = vmatpush2.bf16.msra.mxu0 0
        %2362 = vmatprep.subr.bf16.mxu0 0
        %2363 = vmatpush2.bf16.msra.mxu0 0
        %2364 = vmatprep.subr.bf16.mxu0 0
        %2365 = vmatpush2.bf16.msra.mxu0 0
        %2366 = vmatprep.subr.bf16.mxu0 0
        %2367 = vmatpush2.bf16.msra.mxu0 0
        %2368 = vmatprep.subr.bf16.mxu0 0
        %2369 = vmatpush2.bf16.msra.mxu0 0
        %2370 = vmatprep.subr.bf16.mxu0 0
        %2371 = vmatpush2.bf16.msra.mxu0 0
        %2372 = vmatprep.subr.bf16.mxu0 0
        %2373 = vmatpush2.bf16.msra.mxu0 0
        %2374 = vmatprep.mubr.bf16.mxu0 0
        %2375 = vmatmul.mubr.bf16.gmra.mxu0 %v2337
        %v2376 = vpop.f32.mrf.mxu0
        %v2377 = vadd.f32 0.0, %v2376
        %v2378 = vpop.f32.mrf.mxu0
        %v2379 = vpop.f32.mrf.mxu0
        %v2380 = vadd.f32 0.0, %v2379
        %v2381 = vpop.f32.mrf.mxu0
        %2382 = vmatprep.mubr.bf16.mxu0 0
        %2383 = vmatmul.mubr.bf16.gmra.mxu0 %v2340
        %v2384 = vpop.f32.mrf.mxu0
        %v2385 = vadd.f32 0.0, %v2384
        %v2386 = vpop.f32.mrf.mxu0
        %v2387 = vpop.f32.mrf.mxu0
        %v2388 = vadd.f32 0.0, %v2387
        %v2389 = vpop.f32.mrf.mxu0
        %2390 = vdwg.mxu0
        %v2391 = vadd.f32 %v2071, %v2377
        %v2392 = vadd.f32 %v2072, %v2380
        %v2393 = vadd.f32 %v2073, %v2385
        %v2394 = vadd.f32 %v2074, %v2388
        %v2396 = vlaneseq
        %v2397 = vshrl.u32 %v2396, 7
        %v2398 = vsub.s32 0, %v2397
        %v2399 = vrot.slane %v773, %v2398
        %v2401 = vadd.f32 %v2391, %v2399
        %v2402 = vadd.f32 %v2392, %v2399
        %v2403 = vadd.f32 %v2393, %v2399
        %v2404 = vadd.f32 %v2394, %v2399
        %v2405 = vadd.f32 %v768, %v2401
        %v2406 = vadd.f32 %v769, %v2402
        %v2407 = vadd.f32 %v770, %v2403
        %v2408 = vadd.f32 %v771, %v2404
        %2409 = vadd.xlane.f32.xlu0 %v2405
        %v2410 = vpop.xlane.xlu0 %2409
        %2411 = vadd.xlane.f32.xlu0 %v2406
        %v2412 = vpop.xlane.xlu0 %2411
        %2413 = vadd.xlane.f32.xlu0 %v2407
        %v2414 = vpop.xlane.xlu0 %2413
        %2415 = vadd.xlane.f32.xlu0 %v2408
        %v2416 = vpop.xlane.xlu0 %2415
        %v2417 = vrcp.pop 128.0
        %v2418 = vmul.f32 %v2410, %v2417
        %v2419 = vmul.f32 %v2412, %v2417
        %v2420 = vmul.f32 %v2414, %v2417
        %v2421 = vmul.f32 %v2416, %v2417
        %v2422 = vsub.f32 %v2405, %v2418
        %v2423 = vsub.f32 %v2406, %v2419
        %v2424 = vsub.f32 %v2407, %v2420
        %v2425 = vsub.f32 %v2408, %v2421
        %v2426 = vmul.f32 %v2422, %v2422
        %v2427 = vmul.f32 %v2423, %v2423
        %v2428 = vmul.f32 %v2424, %v2424
        %v2429 = vmul.f32 %v2425, %v2425
        %2430 = vadd.xlane.f32.xlu0 %v2426
        %v2431 = vpop.xlane.xlu0 %2430
        %2432 = vadd.xlane.f32.xlu0 %v2427
        %v2433 = vpop.xlane.xlu0 %2432
        %2434 = vadd.xlane.f32.xlu0 %v2428
        %v2435 = vpop.xlane.xlu0 %2434
        %2436 = vadd.xlane.f32.xlu0 %v2429
        %v2437 = vpop.xlane.xlu0 %2436
        %v2438 = vmul.f32 %v2431, %v2417
        %v2439 = vmul.f32 %v2433, %v2417
        %v2440 = vmul.f32 %v2435, %v2417
        %v2441 = vmul.f32 %v2437, %v2417
        %v2442 = vadd.f32 %v2438, 1e-05
        %v2443 = vadd.f32 %v2439, 1e-05
        %v2444 = vadd.f32 %v2440, 1e-05
        %v2445 = vadd.f32 %v2441, 1e-05
        %v2446 = vrsqrt.pop %v2442
        %v2447 = vrsqrt.pop %v2443
        %v2448 = vrsqrt.pop %v2444
        %v2449 = vrsqrt.pop %v2445
        %v2450 = vmul.f32 %v2422, %v2446
        %v2451 = vmul.f32 %v2423, %v2447
        %v2452 = vmul.f32 %v2424, %v2448
        %v2453 = vmul.f32 %v2425, %v2449
        %v2455 = vlaneseq
        %v2456 = vshrl.u32 %v2455, 7
        %v2457 = vsub.s32 0, %v2456
        %v2458 = vrot.slane %v774, %v2457
        %v2460 = vmul.f32 %v2450, %v2458
        %v2461 = vmul.f32 %v2451, %v2458
        %v2462 = vmul.f32 %v2452, %v2458
        %v2463 = vmul.f32 %v2453, %v2458
        %v2465 = vlaneseq
        %v2466 = vshrl.u32 %v2465, 7
        %v2467 = vsub.s32 0, %v2466
        %v2468 = vrot.slane %v775, %v2467
        %v2470 = vadd.f32 %v2460, %v2468
        %v2471 = vadd.f32 %v2461, %v2468
        %v2472 = vadd.f32 %v2462, %v2468
        %v2473 = vadd.f32 %v2463, %v2468
        %v2474 = vpack.c.bf16 %v2471, %v2470
        %v2475 = vpack.c.bf16 %v2473, %v2472
        %v2476 = vld [vmem:[#allocation8] sm:$0xf]
        %v2477 = vld [vmem:[#allocation8 + $0x4] sm:$0xf]
        %v2478 = vld [vmem:[#allocation8 + $0x8] sm:$0xf]
        %v2479 = vld [vmem:[#allocation8 + $0xc] sm:$0xf]
        %v2480 = vld [vmem:[#allocation8 + $0x10] sm:$0xf]
        %v2481 = vld [vmem:[#allocation8 + $0x14] sm:$0xf]
        %v2482 = vld [vmem:[#allocation8 + $0x18] sm:$0xf]
        %v2483 = vld [vmem:[#allocation8 + $0x1c] sm:$0xf]
        %v2484 = vld [vmem:[#allocation8 + $0x20] sm:$0xf]
        %v2485 = vld [vmem:[#allocation8 + $0x24] sm:$0xf]
        %v2486 = vld [vmem:[#allocation8 + $0x28] sm:$0xf]
        %v2487 = vld [vmem:[#allocation8 + $0x2c] sm:$0xf]
        %v2488 = vld [vmem:[#allocation8 + $0x30] sm:$0xf]
        %v2489 = vld [vmem:[#allocation8 + $0x34] sm:$0xf]
        %v2490 = vld [vmem:[#allocation8 + $0x38] sm:$0xf]
        %v2491 = vld [vmem:[#allocation8 + $0x3c] sm:$0xf]
        %v2508 = vunpack.c.l.b16 %v2476
        %v2509 = vunpack.c.l.b16 %v2477
        %v2510 = vunpack.c.l.b16 %v2478
        %v2511 = vunpack.c.l.b16 %v2479
        %v2512 = vunpack.c.l.b16 %v2480
        %v2513 = vunpack.c.l.b16 %v2481
        %v2514 = vunpack.c.l.b16 %v2482
        %v2515 = vunpack.c.l.b16 %v2483
        %v2516 = vunpack.c.l.b16 %v2484
        %v2517 = vunpack.c.l.b16 %v2485
        %v2518 = vunpack.c.l.b16 %v2486
        %v2519 = vunpack.c.l.b16 %v2487
        %v2520 = vunpack.c.l.b16 %v2488
        %v2521 = vunpack.c.l.b16 %v2489
        %v2522 = vunpack.c.l.b16 %v2490
        %v2523 = vunpack.c.l.b16 %v2491
        %v2524 = vpack.c.b16 %v2509, %v2508
        %v2525 = vpack.c.b16 %v2511, %v2510
        %v2526 = vpack.c.b16 %v2513, %v2512
        %v2527 = vpack.c.b16 %v2515, %v2514
        %v2528 = vpack.c.b16 %v2517, %v2516
        %v2529 = vpack.c.b16 %v2519, %v2518
        %v2530 = vpack.c.b16 %v2521, %v2520
        %v2531 = vpack.c.b16 %v2523, %v2522
        %2540 = vmatprep.subr.bf16.mxu0 0
        %2541 = vmatpush1.bf16.msra.mxu0 %v2531
        %2542 = vmatprep.subr.bf16.mxu0 0
        %2543 = vmatpush1.bf16.msra.mxu0 %v2530
        %2544 = vmatprep.subr.bf16.mxu0 0
        %2545 = vmatpush1.bf16.msra.mxu0 %v2529
        %2546 = vmatprep.subr.bf16.mxu0 0
        %2547 = vmatpush1.bf16.msra.mxu0 %v2528
        %2548 = vmatprep.subr.bf16.mxu0 0
        %2549 = vmatpush1.bf16.msra.mxu0 %v2527
        %2550 = vmatprep.subr.bf16.mxu0 0
        %2551 = vmatpush1.bf16.msra.mxu0 %v2526
        %2552 = vmatprep.subr.bf16.mxu0 0
        %2553 = vmatpush1.bf16.msra.mxu0 %v2525
        %2554 = vmatprep.subr.bf16.mxu0 0
        %2555 = vmatpush1.bf16.msra.mxu0 %v2524
        %2556 = vmatprep.subr.bf16.mxu0 0
        %2557 = vmatpush2.bf16.msra.mxu0 0
        %2558 = vmatprep.subr.bf16.mxu0 0
        %2559 = vmatpush2.bf16.msra.mxu0 0
        %2560 = vmatprep.subr.bf16.mxu0 0
        %2561 = vmatpush2.bf16.msra.mxu0 0
        %2562 = vmatprep.subr.bf16.mxu0 0
        %2563 = vmatpush2.bf16.msra.mxu0 0
        %2564 = vmatprep.subr.bf16.mxu0 0
        %2565 = vmatpush2.bf16.msra.mxu0 0
        %2566 = vmatprep.subr.bf16.mxu0 0
        %2567 = vmatpush2.bf16.msra.mxu0 0
        %2568 = vmatprep.subr.bf16.mxu0 0
        %2569 = vmatpush2.bf16.msra.mxu0 0
        %2570 = vmatprep.subr.bf16.mxu0 0
        %2571 = vmatpush2.bf16.msra.mxu0 0
        %2572 = vmatprep.mubr.bf16.mxu0 0
        %2573 = vmatmul.mubr.bf16.gmra.mxu0 %v2474
        %v2574 = vpop.f32.mrf.mxu0
        %v2575 = vadd.f32 0.0, %v2574
        %v2576 = vpop.f32.mrf.mxu0
        %v2577 = vpop.f32.mrf.mxu0
        %v2578 = vadd.f32 0.0, %v2577
        %v2579 = vpop.f32.mrf.mxu0
        %2580 = vmatprep.mubr.bf16.mxu0 0
        %2581 = vmatmul.mubr.bf16.gmra.mxu0 %v2475
        %v2582 = vpop.f32.mrf.mxu0
        %v2583 = vadd.f32 0.0, %v2582
        %v2584 = vpop.f32.mrf.mxu0
        %v2585 = vpop.f32.mrf.mxu0
        %v2586 = vadd.f32 0.0, %v2585
        %v2587 = vpop.f32.mrf.mxu0
        %2588 = vdwg.mxu0
        %s2589 = scalar_lea.vmem [#allocation8], 64
        %v2590 = vld [vmem:[%s2589] sm:$0xf]
        %v2591 = vld [vmem:[%s2589 + $0x4] sm:$0xf]
        %v2592 = vld [vmem:[%s2589 + $0x8] sm:$0xf]
        %v2593 = vld [vmem:[%s2589 + $0xc] sm:$0xf]
        %v2594 = vld [vmem:[%s2589 + $0x10] sm:$0xf]
        %v2595 = vld [vmem:[%s2589 + $0x14] sm:$0xf]
        %v2596 = vld [vmem:[%s2589 + $0x18] sm:$0xf]
        %v2597 = vld [vmem:[%s2589 + $0x1c] sm:$0xf]
        %v2598 = vld [vmem:[%s2589 + $0x20] sm:$0xf]
        %v2599 = vld [vmem:[%s2589 + $0x24] sm:$0xf]
        %v2600 = vld [vmem:[%s2589 + $0x28] sm:$0xf]
        %v2601 = vld [vmem:[%s2589 + $0x2c] sm:$0xf]
        %v2602 = vld [vmem:[%s2589 + $0x30] sm:$0xf]
        %v2603 = vld [vmem:[%s2589 + $0x34] sm:$0xf]
        %v2604 = vld [vmem:[%s2589 + $0x38] sm:$0xf]
        %v2605 = vld [vmem:[%s2589 + $0x3c] sm:$0xf]
        %v2622 = vunpack.c.l.b16 %v2590
        %v2623 = vunpack.c.l.b16 %v2591
        %v2624 = vunpack.c.l.b16 %v2592
        %v2625 = vunpack.c.l.b16 %v2593
        %v2626 = vunpack.c.l.b16 %v2594
        %v2627 = vunpack.c.l.b16 %v2595
        %v2628 = vunpack.c.l.b16 %v2596
        %v2629 = vunpack.c.l.b16 %v2597
        %v2630 = vunpack.c.l.b16 %v2598
        %v2631 = vunpack.c.l.b16 %v2599
        %v2632 = vunpack.c.l.b16 %v2600
        %v2633 = vunpack.c.l.b16 %v2601
        %v2634 = vunpack.c.l.b16 %v2602
        %v2635 = vunpack.c.l.b16 %v2603
        %v2636 = vunpack.c.l.b16 %v2604
        %v2637 = vunpack.c.l.b16 %v2605
        %v2638 = vpack.c.b16 %v2623, %v2622
        %v2639 = vpack.c.b16 %v2625, %v2624
        %v2640 = vpack.c.b16 %v2627, %v2626
        %v2641 = vpack.c.b16 %v2629, %v2628
        %v2642 = vpack.c.b16 %v2631, %v2630
        %v2643 = vpack.c.b16 %v2633, %v2632
        %v2644 = vpack.c.b16 %v2635, %v2634
        %v2645 = vpack.c.b16 %v2637, %v2636
        %2654 = vmatprep.subr.bf16.mxu0 0
        %2655 = vmatpush1.bf16.msra.mxu0 %v2645
        %2656 = vmatprep.subr.bf16.mxu0 0
        %2657 = vmatpush1.bf16.msra.mxu0 %v2644
        %2658 = vmatprep.subr.bf16.mxu0 0
        %2659 = vmatpush1.bf16.msra.mxu0 %v2643
        %2660 = vmatprep.subr.bf16.mxu0 0
        %2661 = vmatpush1.bf16.msra.mxu0 %v2642
        %2662 = vmatprep.subr.bf16.mxu0 0
        %2663 = vmatpush1.bf16.msra.mxu0 %v2641
        %2664 = vmatprep.subr.bf16.mxu0 0
        %2665 = vmatpush1.bf16.msra.mxu0 %v2640
        %2666 = vmatprep.subr.bf16.mxu0 0
        %2667 = vmatpush1.bf16.msra.mxu0 %v2639
        %2668 = vmatprep.subr.bf16.mxu0 0
        %2669 = vmatpush1.bf16.msra.mxu0 %v2638
        %2670 = vmatprep.subr.bf16.mxu0 0
        %2671 = vmatpush2.bf16.msra.mxu0 0
        %2672 = vmatprep.subr.bf16.mxu0 0
        %2673 = vmatpush2.bf16.msra.mxu0 0
        %2674 = vmatprep.subr.bf16.mxu0 0
        %2675 = vmatpush2.bf16.msra.mxu0 0
        %2676 = vmatprep.subr.bf16.mxu0 0
        %2677 = vmatpush2.bf16.msra.mxu0 0
        %2678 = vmatprep.subr.bf16.mxu0 0
        %2679 = vmatpush2.bf16.msra.mxu0 0
        %2680 = vmatprep.subr.bf16.mxu0 0
        %2681 = vmatpush2.bf16.msra.mxu0 0
        %2682 = vmatprep.subr.bf16.mxu0 0
        %2683 = vmatpush2.bf16.msra.mxu0 0
        %2684 = vmatprep.subr.bf16.mxu0 0
        %2685 = vmatpush2.bf16.msra.mxu0 0
        %2686 = vmatprep.mubr.bf16.mxu0 0
        %2687 = vmatmul.mubr.bf16.gmra.mxu0 %v2474
        %v2688 = vpop.f32.mrf.mxu0
        %v2689 = vadd.f32 0.0, %v2688
        %v2690 = vpop.f32.mrf.mxu0
        %v2691 = vpop.f32.mrf.mxu0
        %v2692 = vadd.f32 0.0, %v2691
        %v2693 = vpop.f32.mrf.mxu0
        %2694 = vmatprep.mubr.bf16.mxu0 0
        %2695 = vmatmul.mubr.bf16.gmra.mxu0 %v2475
        %v2696 = vpop.f32.mrf.mxu0
        %v2697 = vadd.f32 0.0, %v2696
        %v2698 = vpop.f32.mrf.mxu0
        %v2699 = vpop.f32.mrf.mxu0
        %v2700 = vadd.f32 0.0, %v2699
        %v2701 = vpop.f32.mrf.mxu0
        %2702 = vdwg.mxu0
        %s2703 = scalar_lea.vmem [#allocation8], 128
        %v2704 = vld [vmem:[%s2703] sm:$0xf]
        %v2705 = vld [vmem:[%s2703 + $0x4] sm:$0xf]
        %v2706 = vld [vmem:[%s2703 + $0x8] sm:$0xf]
        %v2707 = vld [vmem:[%s2703 + $0xc] sm:$0xf]
        %v2708 = vld [vmem:[%s2703 + $0x10] sm:$0xf]
        %v2709 = vld [vmem:[%s2703 + $0x14] sm:$0xf]
        %v2710 = vld [vmem:[%s2703 + $0x18] sm:$0xf]
        %v2711 = vld [vmem:[%s2703 + $0x1c] sm:$0xf]
        %v2712 = vld [vmem:[%s2703 + $0x20] sm:$0xf]
        %v2713 = vld [vmem:[%s2703 + $0x24] sm:$0xf]
        %v2714 = vld [vmem:[%s2703 + $0x28] sm:$0xf]
        %v2715 = vld [vmem:[%s2703 + $0x2c] sm:$0xf]
        %v2716 = vld [vmem:[%s2703 + $0x30] sm:$0xf]
        %v2717 = vld [vmem:[%s2703 + $0x34] sm:$0xf]
        %v2718 = vld [vmem:[%s2703 + $0x38] sm:$0xf]
        %v2719 = vld [vmem:[%s2703 + $0x3c] sm:$0xf]
        %v2736 = vunpack.c.l.b16 %v2704
        %v2737 = vunpack.c.l.b16 %v2705
        %v2738 = vunpack.c.l.b16 %v2706
        %v2739 = vunpack.c.l.b16 %v2707
        %v2740 = vunpack.c.l.b16 %v2708
        %v2741 = vunpack.c.l.b16 %v2709
        %v2742 = vunpack.c.l.b16 %v2710
        %v2743 = vunpack.c.l.b16 %v2711
        %v2744 = vunpack.c.l.b16 %v2712
        %v2745 = vunpack.c.l.b16 %v2713
        %v2746 = vunpack.c.l.b16 %v2714
        %v2747 = vunpack.c.l.b16 %v2715
        %v2748 = vunpack.c.l.b16 %v2716
        %v2749 = vunpack.c.l.b16 %v2717
        %v2750 = vunpack.c.l.b16 %v2718
        %v2751 = vunpack.c.l.b16 %v2719
        %v2752 = vpack.c.b16 %v2737, %v2736
        %v2753 = vpack.c.b16 %v2739, %v2738
        %v2754 = vpack.c.b16 %v2741, %v2740
        %v2755 = vpack.c.b16 %v2743, %v2742
        %v2756 = vpack.c.b16 %v2745, %v2744
        %v2757 = vpack.c.b16 %v2747, %v2746
        %v2758 = vpack.c.b16 %v2749, %v2748
        %v2759 = vpack.c.b16 %v2751, %v2750
        %2768 = vmatprep.subr.bf16.mxu0 0
        %2769 = vmatpush1.bf16.msra.mxu0 %v2759
        %2770 = vmatprep.subr.bf16.mxu0 0
        %2771 = vmatpush1.bf16.msra.mxu0 %v2758
        %2772 = vmatprep.subr.bf16.mxu0 0
        %2773 = vmatpush1.bf16.msra.mxu0 %v2757
        %2774 = vmatprep.subr.bf16.mxu0 0
        %2775 = vmatpush1.bf16.msra.mxu0 %v2756
        %2776 = vmatprep.subr.bf16.mxu0 0
        %2777 = vmatpush1.bf16.msra.mxu0 %v2755
        %2778 = vmatprep.subr.bf16.mxu0 0
        %2779 = vmatpush1.bf16.msra.mxu0 %v2754
        %2780 = vmatprep.subr.bf16.mxu0 0
        %2781 = vmatpush1.bf16.msra.mxu0 %v2753
        %2782 = vmatprep.subr.bf16.mxu0 0
        %2783 = vmatpush1.bf16.msra.mxu0 %v2752
        %2784 = vmatprep.subr.bf16.mxu0 0
        %2785 = vmatpush2.bf16.msra.mxu0 0
        %2786 = vmatprep.subr.bf16.mxu0 0
        %2787 = vmatpush2.bf16.msra.mxu0 0
        %2788 = vmatprep.subr.bf16.mxu0 0
        %2789 = vmatpush2.bf16.msra.mxu0 0
        %2790 = vmatprep.subr.bf16.mxu0 0
        %2791 = vmatpush2.bf16.msra.mxu0 0
        %2792 = vmatprep.subr.bf16.mxu0 0
        %2793 = vmatpush2.bf16.msra.mxu0 0
        %2794 = vmatprep.subr.bf16.mxu0 0
        %2795 = vmatpush2.bf16.msra.mxu0 0
        %2796 = vmatprep.subr.bf16.mxu0 0
        %2797 = vmatpush2.bf16.msra.mxu0 0
        %2798 = vmatprep.subr.bf16.mxu0 0
        %2799 = vmatpush2.bf16.msra.mxu0 0
        %2800 = vmatprep.mubr.bf16.mxu0 0
        %2801 = vmatmul.mubr.bf16.gmra.mxu0 %v2474
        %v2802 = vpop.f32.mrf.mxu0
        %v2803 = vadd.f32 0.0, %v2802
        %v2804 = vpop.f32.mrf.mxu0
        %v2805 = vpop.f32.mrf.mxu0
        %v2806 = vadd.f32 0.0, %v2805
        %v2807 = vpop.f32.mrf.mxu0
        %2808 = vmatprep.mubr.bf16.mxu0 0
        %2809 = vmatmul.mubr.bf16.gmra.mxu0 %v2475
        %v2810 = vpop.f32.mrf.mxu0
        %v2811 = vadd.f32 0.0, %v2810
        %v2812 = vpop.f32.mrf.mxu0
        %v2813 = vpop.f32.mrf.mxu0
        %v2814 = vadd.f32 0.0, %v2813
        %v2815 = vpop.f32.mrf.mxu0
        %2816 = vdwg.mxu0
        %v2817 = vrot.slane %v2575, 7
        %v2818 = vrot.slane %v2578, 7
        %v2819 = vrot.slane %v2583, 7
        %v2820 = vrot.slane %v2586, 7
        %vm2821 = vcmp.lt.s32.totalorder %v784, 1
        %v2822 = vsel %vm2821, %v2819, %v2820
        %v2823 = vsel %vm2821, %v2818, %v2819
        %v2824 = vsel %vm2821, %v2817, %v2818
        %v2825 = vsel %vm2821, %v2820, %v2817
        %v2826 = vsel %vm836, %v2825, 0.0
        %v2827 = vsel %vm837, %v2824, 0.0
        %v2828 = vsel %vm838, %v2823, 0.0
        %v2829 = vsel %vm839, %v2822, 0.0
        %v2830 = vrot.slane %v2803, 1
        %v2831 = vrot.slane %v2806, 1
        %v2832 = vrot.slane %v2811, 1
        %v2833 = vrot.slane %v2814, 1
        %vm2834 = vcmp.lt.s32.totalorder %v784, 7
        %v2835 = vsel %vm2834, %v2832, %v2833
        %v2836 = vsel %vm2834, %v2831, %v2832
        %v2837 = vsel %vm2834, %v2830, %v2831
        %v2838 = vsel %vm2834, %v2833, %v2830
        %v2839 = vsel %vm840, %v2837, 0.0
        %v2840 = vsel %vm841, %v2836, 0.0
        %v2841 = vsel %vm842, %v2835, 0.0
        %v2842 = vsel %vm843, %v2838, 0.0
        %v2843 = vadd.f32 %v2826, %v2689
        %v2844 = vadd.f32 %v2827, %v2692
        %v2845 = vadd.f32 %v2828, %v2697
        %v2846 = vadd.f32 %v2829, %v2700
        %v2847 = vadd.f32 %v2843, %v2839
        %v2848 = vadd.f32 %v2844, %v2840
        %v2849 = vadd.f32 %v2845, %v2841
        %v2850 = vadd.f32 %v2846, %v2842
        %v2852 = vlaneseq
        %v2853 = vshrl.u32 %v2852, 7
        %v2854 = vsub.s32 0, %v2853
        %v2855 = vrot.slane %v776, %v2854
        %v2857 = vadd.f32 %v2847, %v2855
        %v2858 = vadd.f32 %v2848, %v2855
        %v2859 = vadd.f32 %v2849, %v2855
        %v2860 = vadd.f32 %v2850, %v2855
        %v2861 = vmul.f32 %v2857, %v2857
        %v2862 = vmul.f32 %v2858, %v2858
        %v2863 = vmul.f32 %v2859, %v2859
        %v2864 = vmul.f32 %v2860, %v2860
        %v2865 = vmul.f32 %v2857, %v2861
        %v2866 = vmul.f32 %v2858, %v2862
        %v2867 = vmul.f32 %v2859, %v2863
        %v2868 = vmul.f32 %v2860, %v2864
        %v2869 = vmul.f32 %v2865, 0.044715
        %v2870 = vmul.f32 %v2866, 0.044715
        %v2871 = vmul.f32 %v2867, 0.044715
        %v2872 = vmul.f32 %v2868, 0.044715
        %v2873 = vadd.f32 %v2857, %v2869
        %v2874 = vadd.f32 %v2858, %v2870
        %v2875 = vadd.f32 %v2859, %v2871
        %v2876 = vadd.f32 %v2860, %v2872
        %v2877 = vmul.f32 %v2873, 0.7978846
        %v2878 = vmul.f32 %v2874, 0.7978846
        %v2879 = vmul.f32 %v2875, 0.7978846
        %v2880 = vmul.f32 %v2876, 0.7978846
        %v2881 = vtanh.pop %v2877
        %v2882 = vtanh.pop %v2878
        %v2883 = vtanh.pop %v2879
        %v2884 = vtanh.pop %v2880
        %v2885 = vadd.f32 %v2881, 1.0
        %v2886 = vadd.f32 %v2882, 1.0
        %v2887 = vadd.f32 %v2883, 1.0
        %v2888 = vadd.f32 %v2884, 1.0
        %v2889 = vmul.f32 %v2885, 0.5
        %v2890 = vmul.f32 %v2886, 0.5
        %v2891 = vmul.f32 %v2887, 0.5
        %v2892 = vmul.f32 %v2888, 0.5
        %v2893 = vmul.f32 %v2857, %v2889
        %v2894 = vmul.f32 %v2858, %v2890
        %v2895 = vmul.f32 %v2859, %v2891
        %v2896 = vmul.f32 %v2860, %v2892
        %v2897 = vpack.c.bf16 %v2894, %v2893
        %v2898 = vpack.c.bf16 %v2896, %v2895
        %v2899 = vld [vmem:[#allocation10] sm:$0xf]
        %v2900 = vld [vmem:[#allocation10 + $0x4] sm:$0xf]
        %v2901 = vld [vmem:[#allocation10 + $0x8] sm:$0xf]
        %v2902 = vld [vmem:[#allocation10 + $0xc] sm:$0xf]
        %v2903 = vld [vmem:[#allocation10 + $0x10] sm:$0xf]
        %v2904 = vld [vmem:[#allocation10 + $0x14] sm:$0xf]
        %v2905 = vld [vmem:[#allocation10 + $0x18] sm:$0xf]
        %v2906 = vld [vmem:[#allocation10 + $0x1c] sm:$0xf]
        %v2907 = vld [vmem:[#allocation10 + $0x20] sm:$0xf]
        %v2908 = vld [vmem:[#allocation10 + $0x24] sm:$0xf]
        %v2909 = vld [vmem:[#allocation10 + $0x28] sm:$0xf]
        %v2910 = vld [vmem:[#allocation10 + $0x2c] sm:$0xf]
        %v2911 = vld [vmem:[#allocation10 + $0x30] sm:$0xf]
        %v2912 = vld [vmem:[#allocation10 + $0x34] sm:$0xf]
        %v2913 = vld [vmem:[#allocation10 + $0x38] sm:$0xf]
        %v2914 = vld [vmem:[#allocation10 + $0x3c] sm:$0xf]
        %v2931 = vunpack.c.l.b16 %v2899
        %v2932 = vunpack.c.l.b16 %v2900
        %v2933 = vunpack.c.l.b16 %v2901
        %v2934 = vunpack.c.l.b16 %v2902
        %v2935 = vunpack.c.l.b16 %v2903
        %v2936 = vunpack.c.l.b16 %v2904
        %v2937 = vunpack.c.l.b16 %v2905
        %v2938 = vunpack.c.l.b16 %v2906
        %v2939 = vunpack.c.l.b16 %v2907
        %v2940 = vunpack.c.l.b16 %v2908
        %v2941 = vunpack.c.l.b16 %v2909
        %v2942 = vunpack.c.l.b16 %v2910
        %v2943 = vunpack.c.l.b16 %v2911
        %v2944 = vunpack.c.l.b16 %v2912
        %v2945 = vunpack.c.l.b16 %v2913
        %v2946 = vunpack.c.l.b16 %v2914
        %v2947 = vpack.c.b16 %v2932, %v2931
        %v2948 = vpack.c.b16 %v2934, %v2933
        %v2949 = vpack.c.b16 %v2936, %v2935
        %v2950 = vpack.c.b16 %v2938, %v2937
        %v2951 = vpack.c.b16 %v2940, %v2939
        %v2952 = vpack.c.b16 %v2942, %v2941
        %v2953 = vpack.c.b16 %v2944, %v2943
        %v2954 = vpack.c.b16 %v2946, %v2945
        %2963 = vmatprep.subr.bf16.mxu0 0
        %2964 = vmatpush1.bf16.msra.mxu0 %v2954
        %2965 = vmatprep.subr.bf16.mxu0 0
        %2966 = vmatpush1.bf16.msra.mxu0 %v2953
        %2967 = vmatprep.subr.bf16.mxu0 0
        %2968 = vmatpush1.bf16.msra.mxu0 %v2952
        %2969 = vmatprep.subr.bf16.mxu0 0
        %2970 = vmatpush1.bf16.msra.mxu0 %v2951
        %2971 = vmatprep.subr.bf16.mxu0 0
        %2972 = vmatpush1.bf16.msra.mxu0 %v2950
        %2973 = vmatprep.subr.bf16.mxu0 0
        %2974 = vmatpush1.bf16.msra.mxu0 %v2949
        %2975 = vmatprep.subr.bf16.mxu0 0
        %2976 = vmatpush1.bf16.msra.mxu0 %v2948
        %2977 = vmatprep.subr.bf16.mxu0 0
        %2978 = vmatpush1.bf16.msra.mxu0 %v2947
        %2979 = vmatprep.subr.bf16.mxu0 0
        %2980 = vmatpush2.bf16.msra.mxu0 0
        %2981 = vmatprep.subr.bf16.mxu0 0
        %2982 = vmatpush2.bf16.msra.mxu0 0
        %2983 = vmatprep.subr.bf16.mxu0 0
        %2984 = vmatpush2.bf16.msra.mxu0 0
        %2985 = vmatprep.subr.bf16.mxu0 0
        %2986 = vmatpush2.bf16.msra.mxu0 0
        %2987 = vmatprep.subr.bf16.mxu0 0
        %2988 = vmatpush2.bf16.msra.mxu0 0
        %2989 = vmatprep.subr.bf16.mxu0 0
        %2990 = vmatpush2.bf16.msra.mxu0 0
        %2991 = vmatprep.subr.bf16.mxu0 0
        %2992 = vmatpush2.bf16.msra.mxu0 0
        %2993 = vmatprep.subr.bf16.mxu0 0
        %2994 = vmatpush2.bf16.msra.mxu0 0
        %2995 = vmatprep.mubr.bf16.mxu0 0
        %2996 = vmatmul.mubr.bf16.gmra.mxu0 %v2897
        %v2997 = vpop.f32.mrf.mxu0
        %v2998 = vadd.f32 0.0, %v2997
        %v2999 = vpop.f32.mrf.mxu0
        %v3000 = vpop.f32.mrf.mxu0
        %v3001 = vadd.f32 0.0, %v3000
        %v3002 = vpop.f32.mrf.mxu0
        %3003 = vmatprep.mubr.bf16.mxu0 0
        %3004 = vmatmul.mubr.bf16.gmra.mxu0 %v2898
        %v3005 = vpop.f32.mrf.mxu0
        %v3006 = vadd.f32 0.0, %v3005
        %v3007 = vpop.f32.mrf.mxu0
        %v3008 = vpop.f32.mrf.mxu0
        %v3009 = vadd.f32 0.0, %v3008
        %v3010 = vpop.f32.mrf.mxu0
        %3011 = vdwg.mxu0
        %s3012 = scalar_lea.vmem [#allocation10], 64
        %v3013 = vld [vmem:[%s3012] sm:$0xf]
        %v3014 = vld [vmem:[%s3012 + $0x4] sm:$0xf]
        %v3015 = vld [vmem:[%s3012 + $0x8] sm:$0xf]
        %v3016 = vld [vmem:[%s3012 + $0xc] sm:$0xf]
        %v3017 = vld [vmem:[%s3012 + $0x10] sm:$0xf]
        %v3018 = vld [vmem:[%s3012 + $0x14] sm:$0xf]
        %v3019 = vld [vmem:[%s3012 + $0x18] sm:$0xf]
        %v3020 = vld [vmem:[%s3012 + $0x1c] sm:$0xf]
        %v3021 = vld [vmem:[%s3012 + $0x20] sm:$0xf]
        %v3022 = vld [vmem:[%s3012 + $0x24] sm:$0xf]
        %v3023 = vld [vmem:[%s3012 + $0x28] sm:$0xf]
        %v3024 = vld [vmem:[%s3012 + $0x2c] sm:$0xf]
        %v3025 = vld [vmem:[%s3012 + $0x30] sm:$0xf]
        %v3026 = vld [vmem:[%s3012 + $0x34] sm:$0xf]
        %v3027 = vld [vmem:[%s3012 + $0x38] sm:$0xf]
        %v3028 = vld [vmem:[%s3012 + $0x3c] sm:$0xf]
        %v3045 = vunpack.c.l.b16 %v3013
        %v3046 = vunpack.c.l.b16 %v3014
        %v3047 = vunpack.c.l.b16 %v3015
        %v3048 = vunpack.c.l.b16 %v3016
        %v3049 = vunpack.c.l.b16 %v3017
        %v3050 = vunpack.c.l.b16 %v3018
        %v3051 = vunpack.c.l.b16 %v3019
        %v3052 = vunpack.c.l.b16 %v3020
        %v3053 = vunpack.c.l.b16 %v3021
        %v3054 = vunpack.c.l.b16 %v3022
        %v3055 = vunpack.c.l.b16 %v3023
        %v3056 = vunpack.c.l.b16 %v3024
        %v3057 = vunpack.c.l.b16 %v3025
        %v3058 = vunpack.c.l.b16 %v3026
        %v3059 = vunpack.c.l.b16 %v3027
        %v3060 = vunpack.c.l.b16 %v3028
        %v3061 = vpack.c.b16 %v3046, %v3045
        %v3062 = vpack.c.b16 %v3048, %v3047
        %v3063 = vpack.c.b16 %v3050, %v3049
        %v3064 = vpack.c.b16 %v3052, %v3051
        %v3065 = vpack.c.b16 %v3054, %v3053
        %v3066 = vpack.c.b16 %v3056, %v3055
        %v3067 = vpack.c.b16 %v3058, %v3057
        %v3068 = vpack.c.b16 %v3060, %v3059
        %3077 = vmatprep.subr.bf16.mxu0 0
        %3078 = vmatpush1.bf16.msra.mxu0 %v3068
        %3079 = vmatprep.subr.bf16.mxu0 0
        %3080 = vmatpush1.bf16.msra.mxu0 %v3067
        %3081 = vmatprep.subr.bf16.mxu0 0
        %3082 = vmatpush1.bf16.msra.mxu0 %v3066
        %3083 = vmatprep.subr.bf16.mxu0 0
        %3084 = vmatpush1.bf16.msra.mxu0 %v3065
        %3085 = vmatprep.subr.bf16.mxu0 0
        %3086 = vmatpush1.bf16.msra.mxu0 %v3064
        %3087 = vmatprep.subr.bf16.mxu0 0
        %3088 = vmatpush1.bf16.msra.mxu0 %v3063
        %3089 = vmatprep.subr.bf16.mxu0 0
        %3090 = vmatpush1.bf16.msra.mxu0 %v3062
        %3091 = vmatprep.subr.bf16.mxu0 0
        %3092 = vmatpush1.bf16.msra.mxu0 %v3061
        %3093 = vmatprep.subr.bf16.mxu0 0
        %3094 = vmatpush2.bf16.msra.mxu0 0
        %3095 = vmatprep.subr.bf16.mxu0 0
        %3096 = vmatpush2.bf16.msra.mxu0 0
        %3097 = vmatprep.subr.bf16.mxu0 0
        %3098 = vmatpush2.bf16.msra.mxu0 0
        %3099 = vmatprep.subr.bf16.mxu0 0
        %3100 = vmatpush2.bf16.msra.mxu0 0
        %3101 = vmatprep.subr.bf16.mxu0 0
        %3102 = vmatpush2.bf16.msra.mxu0 0
        %3103 = vmatprep.subr.bf16.mxu0 0
        %3104 = vmatpush2.bf16.msra.mxu0 0
        %3105 = vmatprep.subr.bf16.mxu0 0
        %3106 = vmatpush2.bf16.msra.mxu0 0
        %3107 = vmatprep.subr.bf16.mxu0 0
        %3108 = vmatpush2.bf16.msra.mxu0 0
        %3109 = vmatprep.mubr.bf16.mxu0 0
        %3110 = vmatmul.mubr.bf16.gmra.mxu0 %v2897
        %v3111 = vpop.f32.mrf.mxu0
        %v3112 = vadd.f32 0.0, %v3111
        %v3113 = vpop.f32.mrf.mxu0
        %v3114 = vpop.f32.mrf.mxu0
        %v3115 = vadd.f32 0.0, %v3114
        %v3116 = vpop.f32.mrf.mxu0
        %3117 = vmatprep.mubr.bf16.mxu0 0
        %3118 = vmatmul.mubr.bf16.gmra.mxu0 %v2898
        %v3119 = vpop.f32.mrf.mxu0
        %v3120 = vadd.f32 0.0, %v3119
        %v3121 = vpop.f32.mrf.mxu0
        %v3122 = vpop.f32.mrf.mxu0
        %v3123 = vadd.f32 0.0, %v3122
        %v3124 = vpop.f32.mrf.mxu0
        %3125 = vdwg.mxu0
        %s3126 = scalar_lea.vmem [#allocation10], 128
        %v3127 = vld [vmem:[%s3126] sm:$0xf]
        %v3128 = vld [vmem:[%s3126 + $0x4] sm:$0xf]
        %v3129 = vld [vmem:[%s3126 + $0x8] sm:$0xf]
        %v3130 = vld [vmem:[%s3126 + $0xc] sm:$0xf]
        %v3131 = vld [vmem:[%s3126 + $0x10] sm:$0xf]
        %v3132 = vld [vmem:[%s3126 + $0x14] sm:$0xf]
        %v3133 = vld [vmem:[%s3126 + $0x18] sm:$0xf]
        %v3134 = vld [vmem:[%s3126 + $0x1c] sm:$0xf]
        %v3135 = vld [vmem:[%s3126 + $0x20] sm:$0xf]
        %v3136 = vld [vmem:[%s3126 + $0x24] sm:$0xf]
        %v3137 = vld [vmem:[%s3126 + $0x28] sm:$0xf]
        %v3138 = vld [vmem:[%s3126 + $0x2c] sm:$0xf]
        %v3139 = vld [vmem:[%s3126 + $0x30] sm:$0xf]
        %v3140 = vld [vmem:[%s3126 + $0x34] sm:$0xf]
        %v3141 = vld [vmem:[%s3126 + $0x38] sm:$0xf]
        %v3142 = vld [vmem:[%s3126 + $0x3c] sm:$0xf]
        %v3159 = vunpack.c.l.b16 %v3127
        %v3160 = vunpack.c.l.b16 %v3128
        %v3161 = vunpack.c.l.b16 %v3129
        %v3162 = vunpack.c.l.b16 %v3130
        %v3163 = vunpack.c.l.b16 %v3131
        %v3164 = vunpack.c.l.b16 %v3132
        %v3165 = vunpack.c.l.b16 %v3133
        %v3166 = vunpack.c.l.b16 %v3134
        %v3167 = vunpack.c.l.b16 %v3135
        %v3168 = vunpack.c.l.b16 %v3136
        %v3169 = vunpack.c.l.b16 %v3137
        %v3170 = vunpack.c.l.b16 %v3138
        %v3171 = vunpack.c.l.b16 %v3139
        %v3172 = vunpack.c.l.b16 %v3140
        %v3173 = vunpack.c.l.b16 %v3141
        %v3174 = vunpack.c.l.b16 %v3142
        %v3175 = vpack.c.b16 %v3160, %v3159
        %v3176 = vpack.c.b16 %v3162, %v3161
        %v3177 = vpack.c.b16 %v3164, %v3163
        %v3178 = vpack.c.b16 %v3166, %v3165
        %v3179 = vpack.c.b16 %v3168, %v3167
        %v3180 = vpack.c.b16 %v3170, %v3169
        %v3181 = vpack.c.b16 %v3172, %v3171
        %v3182 = vpack.c.b16 %v3174, %v3173
        %3191 = vmatprep.subr.bf16.mxu0 0
        %3192 = vmatpush1.bf16.msra.mxu0 %v3182
        %3193 = vmatprep.subr.bf16.mxu0 0
        %3194 = vmatpush1.bf16.msra.mxu0 %v3181
        %3195 = vmatprep.subr.bf16.mxu0 0
        %3196 = vmatpush1.bf16.msra.mxu0 %v3180
        %3197 = vmatprep.subr.bf16.mxu0 0
        %3198 = vmatpush1.bf16.msra.mxu0 %v3179
        %3199 = vmatprep.subr.bf16.mxu0 0
        %3200 = vmatpush1.bf16.msra.mxu0 %v3178
        %3201 = vmatprep.subr.bf16.mxu0 0
        %3202 = vmatpush1.bf16.msra.mxu0 %v3177
        %3203 = vmatprep.subr.bf16.mxu0 0
        %3204 = vmatpush1.bf16.msra.mxu0 %v3176
        %3205 = vmatprep.subr.bf16.mxu0 0
        %3206 = vmatpush1.bf16.msra.mxu0 %v3175
        %3207 = vmatprep.subr.bf16.mxu0 0
        %3208 = vmatpush2.bf16.msra.mxu0 0
        %3209 = vmatprep.subr.bf16.mxu0 0
        %3210 = vmatpush2.bf16.msra.mxu0 0
        %3211 = vmatprep.subr.bf16.mxu0 0
        %3212 = vmatpush2.bf16.msra.mxu0 0
        %3213 = vmatprep.subr.bf16.mxu0 0
        %3214 = vmatpush2.bf16.msra.mxu0 0
        %3215 = vmatprep.subr.bf16.mxu0 0
        %3216 = vmatpush2.bf16.msra.mxu0 0
        %3217 = vmatprep.subr.bf16.mxu0 0
        %3218 = vmatpush2.bf16.msra.mxu0 0
        %3219 = vmatprep.subr.bf16.mxu0 0
        %3220 = vmatpush2.bf16.msra.mxu0 0
        %3221 = vmatprep.subr.bf16.mxu0 0
        %3222 = vmatpush2.bf16.msra.mxu0 0
        %3223 = vmatprep.mubr.bf16.mxu0 0
        %3224 = vmatmul.mubr.bf16.gmra.mxu0 %v2897
        %v3225 = vpop.f32.mrf.mxu0
        %v3226 = vadd.f32 0.0, %v3225
        %v3227 = vpop.f32.mrf.mxu0
        %v3228 = vpop.f32.mrf.mxu0
        %v3229 = vadd.f32 0.0, %v3228
        %v3230 = vpop.f32.mrf.mxu0
        %3231 = vmatprep.mubr.bf16.mxu0 0
        %3232 = vmatmul.mubr.bf16.gmra.mxu0 %v2898
        %v3233 = vpop.f32.mrf.mxu0
        %v3234 = vadd.f32 0.0, %v3233
        %v3235 = vpop.f32.mrf.mxu0
        %v3236 = vpop.f32.mrf.mxu0
        %v3237 = vadd.f32 0.0, %v3236
        %v3238 = vpop.f32.mrf.mxu0
        %3239 = vdwg.mxu0
        %v3240 = vrot.slane %v2998, 7
        %v3241 = vrot.slane %v3001, 7
        %v3242 = vrot.slane %v3006, 7
        %v3243 = vrot.slane %v3009, 7
        %v3244 = vsel %vm2821, %v3242, %v3243
        %v3245 = vsel %vm2821, %v3241, %v3242
        %v3246 = vsel %vm2821, %v3240, %v3241
        %v3247 = vsel %vm2821, %v3243, %v3240
        %v3248 = vsel %vm836, %v3247, 0.0
        %v3249 = vsel %vm837, %v3246, 0.0
        %v3250 = vsel %vm838, %v3245, 0.0
        %v3251 = vsel %vm839, %v3244, 0.0
        %v3252 = vrot.slane %v3226, 1
        %v3253 = vrot.slane %v3229, 1
        %v3254 = vrot.slane %v3234, 1
        %v3255 = vrot.slane %v3237, 1
        %v3256 = vsel %vm2834, %v3254, %v3255
        %v3257 = vsel %vm2834, %v3253, %v3254
        %v3258 = vsel %vm2834, %v3252, %v3253
        %v3259 = vsel %vm2834, %v3255, %v3252
        %v3260 = vsel %vm840, %v3258, 0.0
        %v3261 = vsel %vm841, %v3257, 0.0
        %v3262 = vsel %vm842, %v3256, 0.0
        %v3263 = vsel %vm843, %v3259, 0.0
        %v3264 = vadd.f32 %v3248, %v3112
        %v3265 = vadd.f32 %v3249, %v3115
        %v3266 = vadd.f32 %v3250, %v3120
        %v3267 = vadd.f32 %v3251, %v3123
        %v3268 = vadd.f32 %v3264, %v3260
        %v3269 = vadd.f32 %v3265, %v3261
        %v3270 = vadd.f32 %v3266, %v3262
        %v3271 = vadd.f32 %v3267, %v3263
        %v3273 = vlaneseq
        %v3274 = vshrl.u32 %v3273, 7
        %v3275 = vsub.s32 0, %v3274
        %v3276 = vrot.slane %v777, %v3275
        %v3278 = vadd.f32 %v3268, %v3276
        %v3279 = vadd.f32 %v3269, %v3276
        %v3280 = vadd.f32 %v3270, %v3276
        %v3281 = vadd.f32 %v3271, %v3276
        %v3282 = vadd.f32 %v2470, %v3278
        %v3283 = vadd.f32 %v2471, %v3279
        %v3284 = vadd.f32 %v2472, %v3280
        %v3285 = vadd.f32 %v2473, %v3281
        %v3286 = vld [vmem:[#allocation11] sm:$0xff]
        %v3287 = vld [vmem:[#allocation11 + $0x8] sm:$0xff]
        %v3288 = vld [vmem:[#allocation11 + $0x10] sm:$0xff]
        %v3289 = vld [vmem:[#allocation11 + $0x18] sm:$0xff]
        %v3290 = vld [vmem:[#allocation11 + $0x20] sm:$0xff]
        %v3291 = vld [vmem:[#allocation11 + $0x28] sm:$0xff]
        %v3292 = vld [vmem:[#allocation11 + $0x30] sm:$0xff]
        %v3293 = vld [vmem:[#allocation11 + $0x38] sm:$0xff]
        %v3294 = vld [vmem:[#allocation11 + $0x40] sm:$0xff]
        %v3295 = vld [vmem:[#allocation11 + $0x48] sm:$0xff]
        %v3296 = vld [vmem:[#allocation11 + $0x50] sm:$0xff]
        %v3297 = vld [vmem:[#allocation11 + $0x58] sm:$0xff]
        %v3298 = vld [vmem:[#allocation11 + $0x60] sm:$0xff]
        %v3299 = vld [vmem:[#allocation11 + $0x68] sm:$0xff]
        %v3300 = vld [vmem:[#allocation11 + $0x70] sm:$0xff]
        %v3301 = vld [vmem:[#allocation11 + $0x78] sm:$0xff]
        %v3303 = vlaneseq
        %v3304 = vshrl.u32 %v3303, 7
        %v3305 = vsub.s32 0, %v3304
        %v3306 = vrot.slane %v778, %v3305
        %v3307 = vlaneseq
        %v3308 = vshrl.u32 %v3307, 7
        %v3309 = vsub.s32 1, %v3308
        %v3310 = vrot.slane %v778, %v3309
        %v3329 = vunpack.c.l.b16 %v3286
        %v3330 = vunpack.c.h.b16 %v3286
        %v3331 = vunpack.c.l.b16 %v3287
        %v3332 = vunpack.c.h.b16 %v3287
        %v3333 = vunpack.c.l.b16 %v3288
        %v3334 = vunpack.c.h.b16 %v3288
        %v3335 = vunpack.c.l.b16 %v3289
        %v3336 = vunpack.c.h.b16 %v3289
        %v3337 = vunpack.c.l.b16 %v3290
        %v3338 = vunpack.c.h.b16 %v3290
        %v3339 = vunpack.c.l.b16 %v3291
        %v3340 = vunpack.c.h.b16 %v3291
        %v3341 = vunpack.c.l.b16 %v3292
        %v3342 = vunpack.c.h.b16 %v3292
        %v3343 = vunpack.c.l.b16 %v3293
        %v3344 = vunpack.c.h.b16 %v3293
        %v3345 = vunpack.c.l.b16 %v3294
        %v3346 = vunpack.c.h.b16 %v3294
        %v3347 = vunpack.c.l.b16 %v3295
        %v3348 = vunpack.c.h.b16 %v3295
        %v3349 = vunpack.c.l.b16 %v3296
        %v3350 = vunpack.c.h.b16 %v3296
        %v3351 = vunpack.c.l.b16 %v3297
        %v3352 = vunpack.c.h.b16 %v3297
        %v3353 = vunpack.c.l.b16 %v3298
        %v3354 = vunpack.c.h.b16 %v3298
        %v3355 = vunpack.c.l.b16 %v3299
        %v3356 = vunpack.c.h.b16 %v3299
        %v3357 = vunpack.c.l.b16 %v3300
        %v3358 = vunpack.c.h.b16 %v3300
        %v3359 = vunpack.c.l.b16 %v3301
        %v3360 = vunpack.c.h.b16 %v3301
        %v3361 = vpack.c.b16 %v3331, %v3329
        %v3362 = vpack.c.b16 %v3332, %v3330
        %v3363 = vpack.c.b16 %v3335, %v3333
        %v3364 = vpack.c.b16 %v3336, %v3334
        %v3365 = vpack.c.b16 %v3339, %v3337
        %v3366 = vpack.c.b16 %v3340, %v3338
        %v3367 = vpack.c.b16 %v3343, %v3341
        %v3368 = vpack.c.b16 %v3344, %v3342
        %v3369 = vpack.c.b16 %v3347, %v3345
        %v3370 = vpack.c.b16 %v3348, %v3346
        %v3371 = vpack.c.b16 %v3351, %v3349
        %v3372 = vpack.c.b16 %v3352, %v3350
        %v3373 = vpack.c.b16 %v3355, %v3353
        %v3374 = vpack.c.b16 %v3356, %v3354
        %v3375 = vpack.c.b16 %v3359, %v3357
        %v3376 = vpack.c.b16 %v3360, %v3358
        %3393 = vmatprep.subr.bf16.mxu0 %v3376
        %3394 = vmatpush1.bf16.msra.mxu0 %v3375
        %3395 = vmatprep.subr.bf16.mxu0 %v3374
        %3396 = vmatpush1.bf16.msra.mxu0 %v3373
        %3397 = vmatprep.subr.bf16.mxu0 %v3372
        %3398 = vmatpush1.bf16.msra.mxu0 %v3371
        %3399 = vmatprep.subr.bf16.mxu0 %v3370
        %3400 = vmatpush1.bf16.msra.mxu0 %v3369
        %3401 = vmatprep.subr.bf16.mxu0 %v3368
        %3402 = vmatpush1.bf16.msra.mxu0 %v3367
        %3403 = vmatprep.subr.bf16.mxu0 %v3366
        %3404 = vmatpush1.bf16.msra.mxu0 %v3365
        %3405 = vmatprep.subr.bf16.mxu0 %v3364
        %3406 = vmatpush1.bf16.msra.mxu0 %v3363
        %3407 = vmatprep.subr.bf16.mxu0 %v3362
        %3408 = vmatpush1.bf16.msra.mxu0 %v3361
        %3409 = vmatprep.subr.bf16.mxu0 0
        %3410 = vmatpush2.bf16.msra.mxu0 0
        %3411 = vmatprep.subr.bf16.mxu0 0
        %3412 = vmatpush2.bf16.msra.mxu0 0
        %3413 = vmatprep.subr.bf16.mxu0 0
        %3414 = vmatpush2.bf16.msra.mxu0 0
        %3415 = vmatprep.subr.bf16.mxu0 0
        %3416 = vmatpush2.bf16.msra.mxu0 0
        %3417 = vmatprep.subr.bf16.mxu0 0
        %3418 = vmatpush2.bf16.msra.mxu0 0
        %3419 = vmatprep.subr.bf16.mxu0 0
        %3420 = vmatpush2.bf16.msra.mxu0 0
        %3421 = vmatprep.subr.bf16.mxu0 0
        %3422 = vmatpush2.bf16.msra.mxu0 0
        %3423 = vmatprep.subr.bf16.mxu0 0
        %3424 = vmatpush2.bf16.msra.mxu0 0
        %3425 = vmatprep.mubr.bf16.mxu0 0
        %3426 = vmatmul.mubr.bf16.gmra.mxu0 %v2474
        %v3427 = vpop.f32.mrf.mxu0
        %v3428 = vadd.f32 %v3306, %v3427
        %v3429 = vpop.f32.mrf.mxu0
        %v3430 = vadd.f32 %v3310, %v3429
        %v3431 = vpop.f32.mrf.mxu0
        %v3432 = vadd.f32 %v3306, %v3431
        %v3433 = vpop.f32.mrf.mxu0
        %v3434 = vadd.f32 %v3310, %v3433
        %3435 = vmatprep.mubr.bf16.mxu0 0
        %3436 = vmatmul.mubr.bf16.gmra.mxu0 %v2475
        %v3437 = vpop.f32.mrf.mxu0
        %v3438 = vadd.f32 %v3306, %v3437
        %v3439 = vpop.f32.mrf.mxu0
        %v3440 = vadd.f32 %v3310, %v3439
        %v3441 = vpop.f32.mrf.mxu0
        %v3442 = vadd.f32 %v3306, %v3441
        %v3443 = vpop.f32.mrf.mxu0
        %v3444 = vadd.f32 %v3310, %v3443
        %3445 = vdwg.mxu0
        %v3446 = vmul.f32 %v3428, %v3428
        %v3447 = vmul.f32 %v3430, %v3430
        %v3448 = vmul.f32 %v3432, %v3432
        %v3449 = vmul.f32 %v3434, %v3434
        %v3450 = vmul.f32 %v3438, %v3438
        %v3451 = vmul.f32 %v3440, %v3440
        %v3452 = vmul.f32 %v3442, %v3442
        %v3453 = vmul.f32 %v3444, %v3444
        %v3454 = vmul.f32 %v3428, %v3446
        %v3455 = vmul.f32 %v3430, %v3447
        %v3456 = vmul.f32 %v3432, %v3448
        %v3457 = vmul.f32 %v3434, %v3449
        %v3458 = vmul.f32 %v3438, %v3450
        %v3459 = vmul.f32 %v3440, %v3451
        %v3460 = vmul.f32 %v3442, %v3452
        %v3461 = vmul.f32 %v3444, %v3453
        %v3462 = vmul.f32 %v3454, 0.044715
        %v3463 = vmul.f32 %v3455, 0.044715
        %v3464 = vmul.f32 %v3456, 0.044715
        %v3465 = vmul.f32 %v3457, 0.044715
        %v3466 = vmul.f32 %v3458, 0.044715
        %v3467 = vmul.f32 %v3459, 0.044715
        %v3468 = vmul.f32 %v3460, 0.044715
        %v3469 = vmul.f32 %v3461, 0.044715
        %v3470 = vadd.f32 %v3428, %v3462
        %v3471 = vadd.f32 %v3430, %v3463
        %v3472 = vadd.f32 %v3432, %v3464
        %v3473 = vadd.f32 %v3434, %v3465
        %v3474 = vadd.f32 %v3438, %v3466
        %v3475 = vadd.f32 %v3440, %v3467
        %v3476 = vadd.f32 %v3442, %v3468
        %v3477 = vadd.f32 %v3444, %v3469
        %v3478 = vmul.f32 %v3470, 0.7978846
        %v3479 = vmul.f32 %v3471, 0.7978846
        %v3480 = vmul.f32 %v3472, 0.7978846
        %v3481 = vmul.f32 %v3473, 0.7978846
        %v3482 = vmul.f32 %v3474, 0.7978846
        %v3483 = vmul.f32 %v3475, 0.7978846
        %v3484 = vmul.f32 %v3476, 0.7978846
        %v3485 = vmul.f32 %v3477, 0.7978846
        %v3486 = vtanh.pop %v3478
        %v3487 = vtanh.pop %v3479
        %v3488 = vtanh.pop %v3480
        %v3489 = vtanh.pop %v3481
        %v3490 = vtanh.pop %v3482
        %v3491 = vtanh.pop %v3483
        %v3492 = vtanh.pop %v3484
        %v3493 = vtanh.pop %v3485
        %v3494 = vadd.f32 %v3486, 1.0
        %v3495 = vadd.f32 %v3487, 1.0
        %v3496 = vadd.f32 %v3488, 1.0
        %v3497 = vadd.f32 %v3489, 1.0
        %v3498 = vadd.f32 %v3490, 1.0
        %v3499 = vadd.f32 %v3491, 1.0
        %v3500 = vadd.f32 %v3492, 1.0
        %v3501 = vadd.f32 %v3493, 1.0
        %v3502 = vmul.f32 %v3494, 0.5
        %v3503 = vmul.f32 %v3495, 0.5
        %v3504 = vmul.f32 %v3496, 0.5
        %v3505 = vmul.f32 %v3497, 0.5
        %v3506 = vmul.f32 %v3498, 0.5
        %v3507 = vmul.f32 %v3499, 0.5
        %v3508 = vmul.f32 %v3500, 0.5
        %v3509 = vmul.f32 %v3501, 0.5
        %v3510 = vmul.f32 %v3428, %v3502
        %v3511 = vmul.f32 %v3430, %v3503
        %v3512 = vmul.f32 %v3432, %v3504
        %v3513 = vmul.f32 %v3434, %v3505
        %v3514 = vmul.f32 %v3438, %v3506
        %v3515 = vmul.f32 %v3440, %v3507
        %v3516 = vmul.f32 %v3442, %v3508
        %v3517 = vmul.f32 %v3444, %v3509
        %v3518 = vpack.c.bf16 %v3512, %v3510
        %v3519 = vpack.c.bf16 %v3513, %v3511
        %v3520 = vpack.c.bf16 %v3516, %v3514
        %v3521 = vpack.c.bf16 %v3517, %v3515
        %v3522 = vld [vmem:[#allocation13] sm:$0xf]
        %v3523 = vld [vmem:[#allocation13 + $0x4] sm:$0xf]
        %v3524 = vld [vmem:[#allocation13 + $0x8] sm:$0xf]
        %v3525 = vld [vmem:[#allocation13 + $0xc] sm:$0xf]
        %v3526 = vld [vmem:[#allocation13 + $0x10] sm:$0xf]
        %v3527 = vld [vmem:[#allocation13 + $0x14] sm:$0xf]
        %v3528 = vld [vmem:[#allocation13 + $0x18] sm:$0xf]
        %v3529 = vld [vmem:[#allocation13 + $0x1c] sm:$0xf]
        %v3530 = vld [vmem:[#allocation13 + $0x20] sm:$0xf]
        %v3531 = vld [vmem:[#allocation13 + $0x24] sm:$0xf]
        %v3532 = vld [vmem:[#allocation13 + $0x28] sm:$0xf]
        %v3533 = vld [vmem:[#allocation13 + $0x2c] sm:$0xf]
        %v3534 = vld [vmem:[#allocation13 + $0x30] sm:$0xf]
        %v3535 = vld [vmem:[#allocation13 + $0x34] sm:$0xf]
        %v3536 = vld [vmem:[#allocation13 + $0x38] sm:$0xf]
        %v3537 = vld [vmem:[#allocation13 + $0x3c] sm:$0xf]
        %v3538 = vld [vmem:[#allocation13 + $0x40] sm:$0xf]
        %v3539 = vld [vmem:[#allocation13 + $0x44] sm:$0xf]
        %v3540 = vld [vmem:[#allocation13 + $0x48] sm:$0xf]
        %v3541 = vld [vmem:[#allocation13 + $0x4c] sm:$0xf]
        %v3542 = vld [vmem:[#allocation13 + $0x50] sm:$0xf]
        %v3543 = vld [vmem:[#allocation13 + $0x54] sm:$0xf]
        %v3544 = vld [vmem:[#allocation13 + $0x58] sm:$0xf]
        %v3545 = vld [vmem:[#allocation13 + $0x5c] sm:$0xf]
        %v3546 = vld [vmem:[#allocation13 + $0x60] sm:$0xf]
        %v3547 = vld [vmem:[#allocation13 + $0x64] sm:$0xf]
        %v3548 = vld [vmem:[#allocation13 + $0x68] sm:$0xf]
        %v3549 = vld [vmem:[#allocation13 + $0x6c] sm:$0xf]
        %v3550 = vld [vmem:[#allocation13 + $0x70] sm:$0xf]
        %v3551 = vld [vmem:[#allocation13 + $0x74] sm:$0xf]
        %v3552 = vld [vmem:[#allocation13 + $0x78] sm:$0xf]
        %v3553 = vld [vmem:[#allocation13 + $0x7c] sm:$0xf]
        %v3555 = vlaneseq
        %v3556 = vshrl.u32 %v3555, 7
        %v3557 = vsub.s32 0, %v3556
        %v3558 = vrot.slane %v779, %v3557
        %v3592 = vunpack.c.l.b16 %v3522
        %v3593 = vunpack.c.l.b16 %v3523
        %v3594 = vunpack.c.l.b16 %v3524
        %v3595 = vunpack.c.l.b16 %v3525
        %v3596 = vunpack.c.l.b16 %v3526
        %v3597 = vunpack.c.l.b16 %v3527
        %v3598 = vunpack.c.l.b16 %v3528
        %v3599 = vunpack.c.l.b16 %v3529
        %v3600 = vunpack.c.l.b16 %v3530
        %v3601 = vunpack.c.l.b16 %v3531
        %v3602 = vunpack.c.l.b16 %v3532
        %v3603 = vunpack.c.l.b16 %v3533
        %v3604 = vunpack.c.l.b16 %v3534
        %v3605 = vunpack.c.l.b16 %v3535
        %v3606 = vunpack.c.l.b16 %v3536
        %v3607 = vunpack.c.l.b16 %v3537
        %v3608 = vunpack.c.l.b16 %v3538
        %v3609 = vunpack.c.l.b16 %v3539
        %v3610 = vunpack.c.l.b16 %v3540
        %v3611 = vunpack.c.l.b16 %v3541
        %v3612 = vunpack.c.l.b16 %v3542
        %v3613 = vunpack.c.l.b16 %v3543
        %v3614 = vunpack.c.l.b16 %v3544
        %v3615 = vunpack.c.l.b16 %v3545
        %v3616 = vunpack.c.l.b16 %v3546
        %v3617 = vunpack.c.l.b16 %v3547
        %v3618 = vunpack.c.l.b16 %v3548
        %v3619 = vunpack.c.l.b16 %v3549
        %v3620 = vunpack.c.l.b16 %v3550
        %v3621 = vunpack.c.l.b16 %v3551
        %v3622 = vunpack.c.l.b16 %v3552
        %v3623 = vunpack.c.l.b16 %v3553
        %v3624 = vpack.c.b16 %v3593, %v3592
        %v3625 = vpack.c.b16 %v3595, %v3594
        %v3626 = vpack.c.b16 %v3597, %v3596
        %v3627 = vpack.c.b16 %v3599, %v3598
        %v3628 = vpack.c.b16 %v3601, %v3600
        %v3629 = vpack.c.b16 %v3603, %v3602
        %v3630 = vpack.c.b16 %v3605, %v3604
        %v3631 = vpack.c.b16 %v3607, %v3606
        %v3632 = vpack.c.b16 %v3609, %v3608
        %v3633 = vpack.c.b16 %v3611, %v3610
        %v3634 = vpack.c.b16 %v3613, %v3612
        %v3635 = vpack.c.b16 %v3615, %v3614
        %v3636 = vpack.c.b16 %v3617, %v3616
        %v3637 = vpack.c.b16 %v3619, %v3618
        %v3638 = vpack.c.b16 %v3621, %v3620
        %v3639 = vpack.c.b16 %v3623, %v3622
        %3656 = vmatprep.subr.bf16.mxu0 0
        %3657 = vmatpush1.bf16.msra.mxu0 %v3631
        %3658 = vmatprep.subr.bf16.mxu0 0
        %3659 = vmatpush1.bf16.msra.mxu0 %v3630
        %3660 = vmatprep.subr.bf16.mxu0 0
        %3661 = vmatpush1.bf16.msra.mxu0 %v3629
        %3662 = vmatprep.subr.bf16.mxu0 0
        %3663 = vmatpush1.bf16.msra.mxu0 %v3628
        %3664 = vmatprep.subr.bf16.mxu0 0
        %3665 = vmatpush1.bf16.msra.mxu0 %v3627
        %3666 = vmatprep.subr.bf16.mxu0 0
        %3667 = vmatpush1.bf16.msra.mxu0 %v3626
        %3668 = vmatprep.subr.bf16.mxu0 0
        %3669 = vmatpush1.bf16.msra.mxu0 %v3625
        %3670 = vmatprep.subr.bf16.mxu0 0
        %3671 = vmatpush1.bf16.msra.mxu0 %v3624
        %3672 = vmatprep.subr.bf16.mxu0 0
        %3673 = vmatpush2.bf16.msra.mxu0 %v3639
        %3674 = vmatprep.subr.bf16.mxu0 0
        %3675 = vmatpush2.bf16.msra.mxu0 %v3638
        %3676 = vmatprep.subr.bf16.mxu0 0
        %3677 = vmatpush2.bf16.msra.mxu0 %v3637
        %3678 = vmatprep.subr.bf16.mxu0 0
        %3679 = vmatpush2.bf16.msra.mxu0 %v3636
        %3680 = vmatprep.subr.bf16.mxu0 0
        %3681 = vmatpush2.bf16.msra.mxu0 %v3635
        %3682 = vmatprep.subr.bf16.mxu0 0
        %3683 = vmatpush2.bf16.msra.mxu0 %v3634
        %3684 = vmatprep.subr.bf16.mxu0 0
        %3685 = vmatpush2.bf16.msra.mxu0 %v3633
        %3686 = vmatprep.subr.bf16.mxu0 0
        %3687 = vmatpush2.bf16.msra.mxu0 %v3632
        %3688 = vmatprep.mubr.bf16.mxu0 %v3519
        %3689 = vmatmul.mubr.bf16.gmra.mxu0 %v3518
        %v3690 = vpop.f32.mrf.mxu0
        %v3691 = vadd.f32 %v3558, %v3690
        %v3692 = vpop.f32.mrf.mxu0
        %v3693 = vpop.f32.mrf.mxu0
        %v3694 = vadd.f32 %v3558, %v3693
        %v3695 = vpop.f32.mrf.mxu0
        %3696 = vmatprep.mubr.bf16.mxu0 %v3521
        %3697 = vmatmul.mubr.bf16.gmra.mxu0 %v3520
        %v3698 = vpop.f32.mrf.mxu0
        %v3699 = vadd.f32 %v3558, %v3698
        %v3700 = vpop.f32.mrf.mxu0
        %v3701 = vpop.f32.mrf.mxu0
        %v3702 = vadd.f32 %v3558, %v3701
        %v3703 = vpop.f32.mrf.mxu0
        %3704 = vdwg.mxu0
        %v3705 = vpack.c.bf16 %v3283, %v3282
        %v3706 = vpack.c.bf16 %v3285, %v3284
        %v3707 = vld [vmem:[#allocation14] sm:$0xf]
        %v3708 = vld [vmem:[#allocation14 + $0x4] sm:$0xf]
        %v3709 = vld [vmem:[#allocation14 + $0x8] sm:$0xf]
        %v3710 = vld [vmem:[#allocation14 + $0xc] sm:$0xf]
        %v3711 = vld [vmem:[#allocation14 + $0x10] sm:$0xf]
        %v3712 = vld [vmem:[#allocation14 + $0x14] sm:$0xf]
        %v3713 = vld [vmem:[#allocation14 + $0x18] sm:$0xf]
        %v3714 = vld [vmem:[#allocation14 + $0x1c] sm:$0xf]
        %v3715 = vld [vmem:[#allocation14 + $0x20] sm:$0xf]
        %v3716 = vld [vmem:[#allocation14 + $0x24] sm:$0xf]
        %v3717 = vld [vmem:[#allocation14 + $0x28] sm:$0xf]
        %v3718 = vld [vmem:[#allocation14 + $0x2c] sm:$0xf]
        %v3719 = vld [vmem:[#allocation14 + $0x30] sm:$0xf]
        %v3720 = vld [vmem:[#allocation14 + $0x34] sm:$0xf]
        %v3721 = vld [vmem:[#allocation14 + $0x38] sm:$0xf]
        %v3722 = vld [vmem:[#allocation14 + $0x3c] sm:$0xf]
        %v3739 = vunpack.c.l.b16 %v3707
        %v3740 = vunpack.c.l.b16 %v3708
        %v3741 = vunpack.c.l.b16 %v3709
        %v3742 = vunpack.c.l.b16 %v3710
        %v3743 = vunpack.c.l.b16 %v3711
        %v3744 = vunpack.c.l.b16 %v3712
        %v3745 = vunpack.c.l.b16 %v3713
        %v3746 = vunpack.c.l.b16 %v3714
        %v3747 = vunpack.c.l.b16 %v3715
        %v3748 = vunpack.c.l.b16 %v3716
        %v3749 = vunpack.c.l.b16 %v3717
        %v3750 = vunpack.c.l.b16 %v3718
        %v3751 = vunpack.c.l.b16 %v3719
        %v3752 = vunpack.c.l.b16 %v3720
        %v3753 = vunpack.c.l.b16 %v3721
        %v3754 = vunpack.c.l.b16 %v3722
        %v3755 = vpack.c.b16 %v3740, %v3739
        %v3756 = vpack.c.b16 %v3742, %v3741
        %v3757 = vpack.c.b16 %v3744, %v3743
        %v3758 = vpack.c.b16 %v3746, %v3745
        %v3759 = vpack.c.b16 %v3748, %v3747
        %v3760 = vpack.c.b16 %v3750, %v3749
        %v3761 = vpack.c.b16 %v3752, %v3751
        %v3762 = vpack.c.b16 %v3754, %v3753
        %3771 = vmatprep.subr.bf16.mxu0 0
        %3772 = vmatpush1.bf16.msra.mxu0 %v3762
        %3773 = vmatprep.subr.bf16.mxu0 0
        %3774 = vmatpush1.bf16.msra.mxu0 %v3761
        %3775 = vmatprep.subr.bf16.mxu0 0
        %3776 = vmatpush1.bf16.msra.mxu0 %v3760
        %3777 = vmatprep.subr.bf16.mxu0 0
        %3778 = vmatpush1.bf16.msra.mxu0 %v3759
        %3779 = vmatprep.subr.bf16.mxu0 0
        %3780 = vmatpush1.bf16.msra.mxu0 %v3758
        %3781 = vmatprep.subr.bf16.mxu0 0
        %3782 = vmatpush1.bf16.msra.mxu0 %v3757
        %3783 = vmatprep.subr.bf16.mxu0 0
        %3784 = vmatpush1.bf16.msra.mxu0 %v3756
        %3785 = vmatprep.subr.bf16.mxu0 0
        %3786 = vmatpush1.bf16.msra.mxu0 %v3755
        %3787 = vmatprep.subr.bf16.mxu0 0
        %3788 = vmatpush2.bf16.msra.mxu0 0
        %3789 = vmatprep.subr.bf16.mxu0 0
        %3790 = vmatpush2.bf16.msra.mxu0 0
        %3791 = vmatprep.subr.bf16.mxu0 0
        %3792 = vmatpush2.bf16.msra.mxu0 0
        %3793 = vmatprep.subr.bf16.mxu0 0
        %3794 = vmatpush2.bf16.msra.mxu0 0
        %3795 = vmatprep.subr.bf16.mxu0 0
        %3796 = vmatpush2.bf16.msra.mxu0 0
        %3797 = vmatprep.subr.bf16.mxu0 0
        %3798 = vmatpush2.bf16.msra.mxu0 0
        %3799 = vmatprep.subr.bf16.mxu0 0
        %3800 = vmatpush2.bf16.msra.mxu0 0
        %3801 = vmatprep.subr.bf16.mxu0 0
        %3802 = vmatpush2.bf16.msra.mxu0 0
        %3803 = vmatprep.mubr.bf16.mxu0 0
        %3804 = vmatmul.mubr.bf16.gmra.mxu0 %v3705
        %v3805 = vpop.f32.mrf.mxu0
        %v3806 = vadd.f32 0.0, %v3805
        %v3807 = vpop.f32.mrf.mxu0
        %v3808 = vpop.f32.mrf.mxu0
        %v3809 = vadd.f32 0.0, %v3808
        %v3810 = vpop.f32.mrf.mxu0
        %3811 = vmatprep.mubr.bf16.mxu0 0
        %3812 = vmatmul.mubr.bf16.gmra.mxu0 %v3706
        %v3813 = vpop.f32.mrf.mxu0
        %v3814 = vadd.f32 0.0, %v3813
        %v3815 = vpop.f32.mrf.mxu0
        %v3816 = vpop.f32.mrf.mxu0
        %v3817 = vadd.f32 0.0, %v3816
        %v3818 = vpop.f32.mrf.mxu0
        %3819 = vdwg.mxu0
        %s3820 = scalar_lea.vmem [#allocation14], 64
        %v3821 = vld [vmem:[%s3820] sm:$0xf]
        %v3822 = vld [vmem:[%s3820 + $0x4] sm:$0xf]
        %v3823 = vld [vmem:[%s3820 + $0x8] sm:$0xf]
        %v3824 = vld [vmem:[%s3820 + $0xc] sm:$0xf]
        %v3825 = vld [vmem:[%s3820 + $0x10] sm:$0xf]
        %v3826 = vld [vmem:[%s3820 + $0x14] sm:$0xf]
        %v3827 = vld [vmem:[%s3820 + $0x18] sm:$0xf]
        %v3828 = vld [vmem:[%s3820 + $0x1c] sm:$0xf]
        %v3829 = vld [vmem:[%s3820 + $0x20] sm:$0xf]
        %v3830 = vld [vmem:[%s3820 + $0x24] sm:$0xf]
        %v3831 = vld [vmem:[%s3820 + $0x28] sm:$0xf]
        %v3832 = vld [vmem:[%s3820 + $0x2c] sm:$0xf]
        %v3833 = vld [vmem:[%s3820 + $0x30] sm:$0xf]
        %v3834 = vld [vmem:[%s3820 + $0x34] sm:$0xf]
        %v3835 = vld [vmem:[%s3820 + $0x38] sm:$0xf]
        %v3836 = vld [vmem:[%s3820 + $0x3c] sm:$0xf]
        %v3853 = vunpack.c.l.b16 %v3821
        %v3854 = vunpack.c.l.b16 %v3822
        %v3855 = vunpack.c.l.b16 %v3823
        %v3856 = vunpack.c.l.b16 %v3824
        %v3857 = vunpack.c.l.b16 %v3825
        %v3858 = vunpack.c.l.b16 %v3826
        %v3859 = vunpack.c.l.b16 %v3827
        %v3860 = vunpack.c.l.b16 %v3828
        %v3861 = vunpack.c.l.b16 %v3829
        %v3862 = vunpack.c.l.b16 %v3830
        %v3863 = vunpack.c.l.b16 %v3831
        %v3864 = vunpack.c.l.b16 %v3832
        %v3865 = vunpack.c.l.b16 %v3833
        %v3866 = vunpack.c.l.b16 %v3834
        %v3867 = vunpack.c.l.b16 %v3835
        %v3868 = vunpack.c.l.b16 %v3836
        %v3869 = vpack.c.b16 %v3854, %v3853
        %v3870 = vpack.c.b16 %v3856, %v3855
        %v3871 = vpack.c.b16 %v3858, %v3857
        %v3872 = vpack.c.b16 %v3860, %v3859
        %v3873 = vpack.c.b16 %v3862, %v3861
        %v3874 = vpack.c.b16 %v3864, %v3863
        %v3875 = vpack.c.b16 %v3866, %v3865
        %v3876 = vpack.c.b16 %v3868, %v3867
        %3885 = vmatprep.subr.bf16.mxu0 0
        %3886 = vmatpush1.bf16.msra.mxu0 %v3876
        %3887 = vmatprep.subr.bf16.mxu0 0
        %3888 = vmatpush1.bf16.msra.mxu0 %v3875
        %3889 = vmatprep.subr.bf16.mxu0 0
        %3890 = vmatpush1.bf16.msra.mxu0 %v3874
        %3891 = vmatprep.subr.bf16.mxu0 0
        %3892 = vmatpush1.bf16.msra.mxu0 %v3873
        %3893 = vmatprep.subr.bf16.mxu0 0
        %3894 = vmatpush1.bf16.msra.mxu0 %v3872
        %3895 = vmatprep.subr.bf16.mxu0 0
        %3896 = vmatpush1.bf16.msra.mxu0 %v3871
        %3897 = vmatprep.subr.bf16.mxu0 0
        %3898 = vmatpush1.bf16.msra.mxu0 %v3870
        %3899 = vmatprep.subr.bf16.mxu0 0
        %3900 = vmatpush1.bf16.msra.mxu0 %v3869
        %3901 = vmatprep.subr.bf16.mxu0 0
        %3902 = vmatpush2.bf16.msra.mxu0 0
        %3903 = vmatprep.subr.bf16.mxu0 0
        %3904 = vmatpush2.bf16.msra.mxu0 0
        %3905 = vmatprep.subr.bf16.mxu0 0
        %3906 = vmatpush2.bf16.msra.mxu0 0
        %3907 = vmatprep.subr.bf16.mxu0 0
        %3908 = vmatpush2.bf16.msra.mxu0 0
        %3909 = vmatprep.subr.bf16.mxu0 0
        %3910 = vmatpush2.bf16.msra.mxu0 0
        %3911 = vmatprep.subr.bf16.mxu0 0
        %3912 = vmatpush2.bf16.msra.mxu0 0
        %3913 = vmatprep.subr.bf16.mxu0 0
        %3914 = vmatpush2.bf16.msra.mxu0 0
        %3915 = vmatprep.subr.bf16.mxu0 0
        %3916 = vmatpush2.bf16.msra.mxu0 0
        %3917 = vmatprep.mubr.bf16.mxu0 0
        %3918 = vmatmul.mubr.bf16.gmra.mxu0 %v3705
        %v3919 = vpop.f32.mrf.mxu0
        %v3920 = vadd.f32 0.0, %v3919
        %v3921 = vpop.f32.mrf.mxu0
        %v3922 = vpop.f32.mrf.mxu0
        %v3923 = vadd.f32 0.0, %v3922
        %v3924 = vpop.f32.mrf.mxu0
        %3925 = vmatprep.mubr.bf16.mxu0 0
        %3926 = vmatmul.mubr.bf16.gmra.mxu0 %v3706
        %v3927 = vpop.f32.mrf.mxu0
        %v3928 = vadd.f32 0.0, %v3927
        %v3929 = vpop.f32.mrf.mxu0
        %v3930 = vpop.f32.mrf.mxu0
        %v3931 = vadd.f32 0.0, %v3930
        %v3932 = vpop.f32.mrf.mxu0
        %3933 = vdwg.mxu0
        %s3934 = scalar_lea.vmem [#allocation14], 128
        %v3935 = vld [vmem:[%s3934] sm:$0xf]
        %v3936 = vld [vmem:[%s3934 + $0x4] sm:$0xf]
        %v3937 = vld [vmem:[%s3934 + $0x8] sm:$0xf]
        %v3938 = vld [vmem:[%s3934 + $0xc] sm:$0xf]
        %v3939 = vld [vmem:[%s3934 + $0x10] sm:$0xf]
        %v3940 = vld [vmem:[%s3934 + $0x14] sm:$0xf]
        %v3941 = vld [vmem:[%s3934 + $0x18] sm:$0xf]
        %v3942 = vld [vmem:[%s3934 + $0x1c] sm:$0xf]
        %v3943 = vld [vmem:[%s3934 + $0x20] sm:$0xf]
        %v3944 = vld [vmem:[%s3934 + $0x24] sm:$0xf]
        %v3945 = vld [vmem:[%s3934 + $0x28] sm:$0xf]
        %v3946 = vld [vmem:[%s3934 + $0x2c] sm:$0xf]
        %v3947 = vld [vmem:[%s3934 + $0x30] sm:$0xf]
        %v3948 = vld [vmem:[%s3934 + $0x34] sm:$0xf]
        %v3949 = vld [vmem:[%s3934 + $0x38] sm:$0xf]
        %v3950 = vld [vmem:[%s3934 + $0x3c] sm:$0xf]
        %v3967 = vunpack.c.l.b16 %v3935
        %v3968 = vunpack.c.l.b16 %v3936
        %v3969 = vunpack.c.l.b16 %v3937
        %v3970 = vunpack.c.l.b16 %v3938
        %v3971 = vunpack.c.l.b16 %v3939
        %v3972 = vunpack.c.l.b16 %v3940
        %v3973 = vunpack.c.l.b16 %v3941
        %v3974 = vunpack.c.l.b16 %v3942
        %v3975 = vunpack.c.l.b16 %v3943
        %v3976 = vunpack.c.l.b16 %v3944
        %v3977 = vunpack.c.l.b16 %v3945
        %v3978 = vunpack.c.l.b16 %v3946
        %v3979 = vunpack.c.l.b16 %v3947
        %v3980 = vunpack.c.l.b16 %v3948
        %v3981 = vunpack.c.l.b16 %v3949
        %v3982 = vunpack.c.l.b16 %v3950
        %v3983 = vpack.c.b16 %v3968, %v3967
        %v3984 = vpack.c.b16 %v3970, %v3969
        %v3985 = vpack.c.b16 %v3972, %v3971
        %v3986 = vpack.c.b16 %v3974, %v3973
        %v3987 = vpack.c.b16 %v3976, %v3975
        %v3988 = vpack.c.b16 %v3978, %v3977
        %v3989 = vpack.c.b16 %v3980, %v3979
        %v3990 = vpack.c.b16 %v3982, %v3981
        %3999 = vmatprep.subr.bf16.mxu0 0
        %4000 = vmatpush1.bf16.msra.mxu0 %v3990
        %4001 = vmatprep.subr.bf16.mxu0 0
        %4002 = vmatpush1.bf16.msra.mxu0 %v3989
        %4003 = vmatprep.subr.bf16.mxu0 0
        %4004 = vmatpush1.bf16.msra.mxu0 %v3988
        %4005 = vmatprep.subr.bf16.mxu0 0
        %4006 = vmatpush1.bf16.msra.mxu0 %v3987
        %4007 = vmatprep.subr.bf16.mxu0 0
        %4008 = vmatpush1.bf16.msra.mxu0 %v3986
        %4009 = vmatprep.subr.bf16.mxu0 0
        %4010 = vmatpush1.bf16.msra.mxu0 %v3985
        %4011 = vmatprep.subr.bf16.mxu0 0
        %4012 = vmatpush1.bf16.msra.mxu0 %v3984
        %4013 = vmatprep.subr.bf16.mxu0 0
        %4014 = vmatpush1.bf16.msra.mxu0 %v3983
        %4015 = vmatprep.subr.bf16.mxu0 0
        %4016 = vmatpush2.bf16.msra.mxu0 0
        %4017 = vmatprep.subr.bf16.mxu0 0
        %4018 = vmatpush2.bf16.msra.mxu0 0
        %4019 = vmatprep.subr.bf16.mxu0 0
        %4020 = vmatpush2.bf16.msra.mxu0 0
        %4021 = vmatprep.subr.bf16.mxu0 0
        %4022 = vmatpush2.bf16.msra.mxu0 0
        %4023 = vmatprep.subr.bf16.mxu0 0
        %4024 = vmatpush2.bf16.msra.mxu0 0
        %4025 = vmatprep.subr.bf16.mxu0 0
        %4026 = vmatpush2.bf16.msra.mxu0 0
        %4027 = vmatprep.subr.bf16.mxu0 0
        %4028 = vmatpush2.bf16.msra.mxu0 0
        %4029 = vmatprep.subr.bf16.mxu0 0
        %4030 = vmatpush2.bf16.msra.mxu0 0
        %4031 = vmatprep.mubr.bf16.mxu0 0
        %4032 = vmatmul.mubr.bf16.gmra.mxu0 %v3705
        %v4033 = vpop.f32.mrf.mxu0
        %v4034 = vadd.f32 0.0, %v4033
        %v4035 = vpop.f32.mrf.mxu0
        %v4036 = vpop.f32.mrf.mxu0
        %v4037 = vadd.f32 0.0, %v4036
        %v4038 = vpop.f32.mrf.mxu0
        %4039 = vmatprep.mubr.bf16.mxu0 0
        %4040 = vmatmul.mubr.bf16.gmra.mxu0 %v3706
        %v4041 = vpop.f32.mrf.mxu0
        %v4042 = vadd.f32 0.0, %v4041
        %v4043 = vpop.f32.mrf.mxu0
        %v4044 = vpop.f32.mrf.mxu0
        %v4045 = vadd.f32 0.0, %v4044
        %v4046 = vpop.f32.mrf.mxu0
        %4047 = vdwg.mxu0
        %v4048 = vrot.slane %v3806, 7
        %v4049 = vrot.slane %v3809, 7
        %v4050 = vrot.slane %v3814, 7
        %v4051 = vrot.slane %v3817, 7
        %v4052 = vsel %vm2821, %v4050, %v4051
        %v4053 = vsel %vm2821, %v4049, %v4050
        %v4054 = vsel %vm2821, %v4048, %v4049
        %v4055 = vsel %vm2821, %v4051, %v4048
        %v4056 = vsel %vm836, %v4055, 0.0
        %v4057 = vsel %vm837, %v4054, 0.0
        %v4058 = vsel %vm838, %v4053, 0.0
        %v4059 = vsel %vm839, %v4052, 0.0
        %v4060 = vrot.slane %v4034, 1
        %v4061 = vrot.slane %v4037, 1
        %v4062 = vrot.slane %v4042, 1
        %v4063 = vrot.slane %v4045, 1
        %v4064 = vsel %vm2834, %v4062, %v4063
        %v4065 = vsel %vm2834, %v4061, %v4062
        %v4066 = vsel %vm2834, %v4060, %v4061
        %v4067 = vsel %vm2834, %v4063, %v4060
        %v4068 = vsel %vm840, %v4066, 0.0
        %v4069 = vsel %vm841, %v4065, 0.0
        %v4070 = vsel %vm842, %v4064, 0.0
        %v4071 = vsel %vm843, %v4067, 0.0
        %v4072 = vadd.f32 %v4056, %v3920
        %v4073 = vadd.f32 %v4057, %v3923
        %v4074 = vadd.f32 %v4058, %v3928
        %v4075 = vadd.f32 %v4059, %v3931
        %v4076 = vadd.f32 %v4072, %v4068
        %v4077 = vadd.f32 %v4073, %v4069
        %v4078 = vadd.f32 %v4074, %v4070
        %v4079 = vadd.f32 %v4075, %v4071
        %v4080 = vpack.c.bf16 %v3694, %v3691
        %v4081 = vpack.c.bf16 %v3702, %v3699
        %v4082 = vld [vmem:[#allocation16] sm:$0xf]
        %v4083 = vld [vmem:[#allocation16 + $0x4] sm:$0xf]
        %v4084 = vld [vmem:[#allocation16 + $0x8] sm:$0xf]
        %v4085 = vld [vmem:[#allocation16 + $0xc] sm:$0xf]
        %v4086 = vld [vmem:[#allocation16 + $0x10] sm:$0xf]
        %v4087 = vld [vmem:[#allocation16 + $0x14] sm:$0xf]
        %v4088 = vld [vmem:[#allocation16 + $0x18] sm:$0xf]
        %v4089 = vld [vmem:[#allocation16 + $0x1c] sm:$0xf]
        %v4090 = vld [vmem:[#allocation16 + $0x20] sm:$0xf]
        %v4091 = vld [vmem:[#allocation16 + $0x24] sm:$0xf]
        %v4092 = vld [vmem:[#allocation16 + $0x28] sm:$0xf]
        %v4093 = vld [vmem:[#allocation16 + $0x2c] sm:$0xf]
        %v4094 = vld [vmem:[#allocation16 + $0x30] sm:$0xf]
        %v4095 = vld [vmem:[#allocation16 + $0x34] sm:$0xf]
        %v4096 = vld [vmem:[#allocation16 + $0x38] sm:$0xf]
        %v4097 = vld [vmem:[#allocation16 + $0x3c] sm:$0xf]
        %v4114 = vunpack.c.l.b16 %v4082
        %v4115 = vunpack.c.l.b16 %v4083
        %v4116 = vunpack.c.l.b16 %v4084
        %v4117 = vunpack.c.l.b16 %v4085
        %v4118 = vunpack.c.l.b16 %v4086
        %v4119 = vunpack.c.l.b16 %v4087
        %v4120 = vunpack.c.l.b16 %v4088
        %v4121 = vunpack.c.l.b16 %v4089
        %v4122 = vunpack.c.l.b16 %v4090
        %v4123 = vunpack.c.l.b16 %v4091
        %v4124 = vunpack.c.l.b16 %v4092
        %v4125 = vunpack.c.l.b16 %v4093
        %v4126 = vunpack.c.l.b16 %v4094
        %v4127 = vunpack.c.l.b16 %v4095
        %v4128 = vunpack.c.l.b16 %v4096
        %v4129 = vunpack.c.l.b16 %v4097
        %v4130 = vpack.c.b16 %v4115, %v4114
        %v4131 = vpack.c.b16 %v4117, %v4116
        %v4132 = vpack.c.b16 %v4119, %v4118
        %v4133 = vpack.c.b16 %v4121, %v4120
        %v4134 = vpack.c.b16 %v4123, %v4122
        %v4135 = vpack.c.b16 %v4125, %v4124
        %v4136 = vpack.c.b16 %v4127, %v4126
        %v4137 = vpack.c.b16 %v4129, %v4128
        %4146 = vmatprep.subr.bf16.mxu0 0
        %4147 = vmatpush1.bf16.msra.mxu0 %v4137
        %4148 = vmatprep.subr.bf16.mxu0 0
        %4149 = vmatpush1.bf16.msra.mxu0 %v4136
        %4150 = vmatprep.subr.bf16.mxu0 0
        %4151 = vmatpush1.bf16.msra.mxu0 %v4135
        %4152 = vmatprep.subr.bf16.mxu0 0
        %4153 = vmatpush1.bf16.msra.mxu0 %v4134
        %4154 = vmatprep.subr.bf16.mxu0 0
        %4155 = vmatpush1.bf16.msra.mxu0 %v4133
        %4156 = vmatprep.subr.bf16.mxu0 0
        %4157 = vmatpush1.bf16.msra.mxu0 %v4132
        %4158 = vmatprep.subr.bf16.mxu0 0
        %4159 = vmatpush1.bf16.msra.mxu0 %v4131
        %4160 = vmatprep.subr.bf16.mxu0 0
        %4161 = vmatpush1.bf16.msra.mxu0 %v4130
        %4162 = vmatprep.subr.bf16.mxu0 0
        %4163 = vmatpush2.bf16.msra.mxu0 0
        %4164 = vmatprep.subr.bf16.mxu0 0
        %4165 = vmatpush2.bf16.msra.mxu0 0
        %4166 = vmatprep.subr.bf16.mxu0 0
        %4167 = vmatpush2.bf16.msra.mxu0 0
        %4168 = vmatprep.subr.bf16.mxu0 0
        %4169 = vmatpush2.bf16.msra.mxu0 0
        %4170 = vmatprep.subr.bf16.mxu0 0
        %4171 = vmatpush2.bf16.msra.mxu0 0
        %4172 = vmatprep.subr.bf16.mxu0 0
        %4173 = vmatpush2.bf16.msra.mxu0 0
        %4174 = vmatprep.subr.bf16.mxu0 0
        %4175 = vmatpush2.bf16.msra.mxu0 0
        %4176 = vmatprep.subr.bf16.mxu0 0
        %4177 = vmatpush2.bf16.msra.mxu0 0
        %4178 = vmatprep.mubr.bf16.mxu0 0
        %4179 = vmatmul.mubr.bf16.gmra.mxu0 %v4080
        %v4180 = vpop.f32.mrf.mxu0
        %v4181 = vadd.f32 0.0, %v4180
        %v4182 = vpop.f32.mrf.mxu0
        %v4183 = vpop.f32.mrf.mxu0
        %v4184 = vadd.f32 0.0, %v4183
        %v4185 = vpop.f32.mrf.mxu0
        %4186 = vmatprep.mubr.bf16.mxu0 0
        %4187 = vmatmul.mubr.bf16.gmra.mxu0 %v4081
        %v4188 = vpop.f32.mrf.mxu0
        %v4189 = vadd.f32 0.0, %v4188
        %v4190 = vpop.f32.mrf.mxu0
        %v4191 = vpop.f32.mrf.mxu0
        %v4192 = vadd.f32 0.0, %v4191
        %v4193 = vpop.f32.mrf.mxu0
        %4194 = vdwg.mxu0
        %s4195 = scalar_lea.vmem [#allocation16], 64
        %v4196 = vld [vmem:[%s4195] sm:$0xf]
        %v4197 = vld [vmem:[%s4195 + $0x4] sm:$0xf]
        %v4198 = vld [vmem:[%s4195 + $0x8] sm:$0xf]
        %v4199 = vld [vmem:[%s4195 + $0xc] sm:$0xf]
        %v4200 = vld [vmem:[%s4195 + $0x10] sm:$0xf]
        %v4201 = vld [vmem:[%s4195 + $0x14] sm:$0xf]
        %v4202 = vld [vmem:[%s4195 + $0x18] sm:$0xf]
        %v4203 = vld [vmem:[%s4195 + $0x1c] sm:$0xf]
        %v4204 = vld [vmem:[%s4195 + $0x20] sm:$0xf]
        %v4205 = vld [vmem:[%s4195 + $0x24] sm:$0xf]
        %v4206 = vld [vmem:[%s4195 + $0x28] sm:$0xf]
        %v4207 = vld [vmem:[%s4195 + $0x2c] sm:$0xf]
        %v4208 = vld [vmem:[%s4195 + $0x30] sm:$0xf]
        %v4209 = vld [vmem:[%s4195 + $0x34] sm:$0xf]
        %v4210 = vld [vmem:[%s4195 + $0x38] sm:$0xf]
        %v4211 = vld [vmem:[%s4195 + $0x3c] sm:$0xf]
        %v4228 = vunpack.c.l.b16 %v4196
        %v4229 = vunpack.c.l.b16 %v4197
        %v4230 = vunpack.c.l.b16 %v4198
        %v4231 = vunpack.c.l.b16 %v4199
        %v4232 = vunpack.c.l.b16 %v4200
        %v4233 = vunpack.c.l.b16 %v4201
        %v4234 = vunpack.c.l.b16 %v4202
        %v4235 = vunpack.c.l.b16 %v4203
        %v4236 = vunpack.c.l.b16 %v4204
        %v4237 = vunpack.c.l.b16 %v4205
        %v4238 = vunpack.c.l.b16 %v4206
        %v4239 = vunpack.c.l.b16 %v4207
        %v4240 = vunpack.c.l.b16 %v4208
        %v4241 = vunpack.c.l.b16 %v4209
        %v4242 = vunpack.c.l.b16 %v4210
        %v4243 = vunpack.c.l.b16 %v4211
        %v4244 = vpack.c.b16 %v4229, %v4228
        %v4245 = vpack.c.b16 %v4231, %v4230
        %v4246 = vpack.c.b16 %v4233, %v4232
        %v4247 = vpack.c.b16 %v4235, %v4234
        %v4248 = vpack.c.b16 %v4237, %v4236
        %v4249 = vpack.c.b16 %v4239, %v4238
        %v4250 = vpack.c.b16 %v4241, %v4240
        %v4251 = vpack.c.b16 %v4243, %v4242
        %4260 = vmatprep.subr.bf16.mxu0 0
        %4261 = vmatpush1.bf16.msra.mxu0 %v4251
        %4262 = vmatprep.subr.bf16.mxu0 0
        %4263 = vmatpush1.bf16.msra.mxu0 %v4250
        %4264 = vmatprep.subr.bf16.mxu0 0
        %4265 = vmatpush1.bf16.msra.mxu0 %v4249
        %4266 = vmatprep.subr.bf16.mxu0 0
        %4267 = vmatpush1.bf16.msra.mxu0 %v4248
        %4268 = vmatprep.subr.bf16.mxu0 0
        %4269 = vmatpush1.bf16.msra.mxu0 %v4247
        %4270 = vmatprep.subr.bf16.mxu0 0
        %4271 = vmatpush1.bf16.msra.mxu0 %v4246
        %4272 = vmatprep.subr.bf16.mxu0 0
        %4273 = vmatpush1.bf16.msra.mxu0 %v4245
        %4274 = vmatprep.subr.bf16.mxu0 0
        %4275 = vmatpush1.bf16.msra.mxu0 %v4244
        %4276 = vmatprep.subr.bf16.mxu0 0
        %4277 = vmatpush2.bf16.msra.mxu0 0
        %4278 = vmatprep.subr.bf16.mxu0 0
        %4279 = vmatpush2.bf16.msra.mxu0 0
        %4280 = vmatprep.subr.bf16.mxu0 0
        %4281 = vmatpush2.bf16.msra.mxu0 0
        %4282 = vmatprep.subr.bf16.mxu0 0
        %4283 = vmatpush2.bf16.msra.mxu0 0
        %4284 = vmatprep.subr.bf16.mxu0 0
        %4285 = vmatpush2.bf16.msra.mxu0 0
        %4286 = vmatprep.subr.bf16.mxu0 0
        %4287 = vmatpush2.bf16.msra.mxu0 0
        %4288 = vmatprep.subr.bf16.mxu0 0
        %4289 = vmatpush2.bf16.msra.mxu0 0
        %4290 = vmatprep.subr.bf16.mxu0 0
        %4291 = vmatpush2.bf16.msra.mxu0 0
        %4292 = vmatprep.mubr.bf16.mxu0 0
        %4293 = vmatmul.mubr.bf16.gmra.mxu0 %v4080
        %v4294 = vpop.f32.mrf.mxu0
        %v4295 = vadd.f32 0.0, %v4294
        %v4296 = vpop.f32.mrf.mxu0
        %v4297 = vpop.f32.mrf.mxu0
        %v4298 = vadd.f32 0.0, %v4297
        %v4299 = vpop.f32.mrf.mxu0
        %4300 = vmatprep.mubr.bf16.mxu0 0
        %4301 = vmatmul.mubr.bf16.gmra.mxu0 %v4081
        %v4302 = vpop.f32.mrf.mxu0
        %v4303 = vadd.f32 0.0, %v4302
        %v4304 = vpop.f32.mrf.mxu0
        %v4305 = vpop.f32.mrf.mxu0
        %v4306 = vadd.f32 0.0, %v4305
        %v4307 = vpop.f32.mrf.mxu0
        %4308 = vdwg.mxu0
        %s4309 = scalar_lea.vmem [#allocation16], 128
        %v4310 = vld [vmem:[%s4309] sm:$0xf]
        %v4311 = vld [vmem:[%s4309 + $0x4] sm:$0xf]
        %v4312 = vld [vmem:[%s4309 + $0x8] sm:$0xf]
        %v4313 = vld [vmem:[%s4309 + $0xc] sm:$0xf]
        %v4314 = vld [vmem:[%s4309 + $0x10] sm:$0xf]
        %v4315 = vld [vmem:[%s4309 + $0x14] sm:$0xf]
        %v4316 = vld [vmem:[%s4309 + $0x18] sm:$0xf]
        %v4317 = vld [vmem:[%s4309 + $0x1c] sm:$0xf]
        %v4318 = vld [vmem:[%s4309 + $0x20] sm:$0xf]
        %v4319 = vld [vmem:[%s4309 + $0x24] sm:$0xf]
        %v4320 = vld [vmem:[%s4309 + $0x28] sm:$0xf]
        %v4321 = vld [vmem:[%s4309 + $0x2c] sm:$0xf]
        %v4322 = vld [vmem:[%s4309 + $0x30] sm:$0xf]
        %v4323 = vld [vmem:[%s4309 + $0x34] sm:$0xf]
        %v4324 = vld [vmem:[%s4309 + $0x38] sm:$0xf]
        %v4325 = vld [vmem:[%s4309 + $0x3c] sm:$0xf]
        %v4342 = vunpack.c.l.b16 %v4310
        %v4343 = vunpack.c.l.b16 %v4311
        %v4344 = vunpack.c.l.b16 %v4312
        %v4345 = vunpack.c.l.b16 %v4313
        %v4346 = vunpack.c.l.b16 %v4314
        %v4347 = vunpack.c.l.b16 %v4315
        %v4348 = vunpack.c.l.b16 %v4316
        %v4349 = vunpack.c.l.b16 %v4317
        %v4350 = vunpack.c.l.b16 %v4318
        %v4351 = vunpack.c.l.b16 %v4319
        %v4352 = vunpack.c.l.b16 %v4320
        %v4353 = vunpack.c.l.b16 %v4321
        %v4354 = vunpack.c.l.b16 %v4322
        %v4355 = vunpack.c.l.b16 %v4323
        %v4356 = vunpack.c.l.b16 %v4324
        %v4357 = vunpack.c.l.b16 %v4325
        %v4358 = vpack.c.b16 %v4343, %v4342
        %v4359 = vpack.c.b16 %v4345, %v4344
        %v4360 = vpack.c.b16 %v4347, %v4346
        %v4361 = vpack.c.b16 %v4349, %v4348
        %v4362 = vpack.c.b16 %v4351, %v4350
        %v4363 = vpack.c.b16 %v4353, %v4352
        %v4364 = vpack.c.b16 %v4355, %v4354
        %v4365 = vpack.c.b16 %v4357, %v4356
        %4374 = vmatprep.subr.bf16.mxu0 0
        %4375 = vmatpush1.bf16.msra.mxu0 %v4365
        %4376 = vmatprep.subr.bf16.mxu0 0
        %4377 = vmatpush1.bf16.msra.mxu0 %v4364
        %4378 = vmatprep.subr.bf16.mxu0 0
        %4379 = vmatpush1.bf16.msra.mxu0 %v4363
        %4380 = vmatprep.subr.bf16.mxu0 0
        %4381 = vmatpush1.bf16.msra.mxu0 %v4362
        %4382 = vmatprep.subr.bf16.mxu0 0
        %4383 = vmatpush1.bf16.msra.mxu0 %v4361
        %4384 = vmatprep.subr.bf16.mxu0 0
        %4385 = vmatpush1.bf16.msra.mxu0 %v4360
        %4386 = vmatprep.subr.bf16.mxu0 0
        %4387 = vmatpush1.bf16.msra.mxu0 %v4359
        %4388 = vmatprep.subr.bf16.mxu0 0
        %4389 = vmatpush1.bf16.msra.mxu0 %v4358
        %4390 = vmatprep.subr.bf16.mxu0 0
        %4391 = vmatpush2.bf16.msra.mxu0 0
        %4392 = vmatprep.subr.bf16.mxu0 0
        %4393 = vmatpush2.bf16.msra.mxu0 0
        %4394 = vmatprep.subr.bf16.mxu0 0
        %4395 = vmatpush2.bf16.msra.mxu0 0
        %4396 = vmatprep.subr.bf16.mxu0 0
        %4397 = vmatpush2.bf16.msra.mxu0 0
        %4398 = vmatprep.subr.bf16.mxu0 0
        %4399 = vmatpush2.bf16.msra.mxu0 0
        %4400 = vmatprep.subr.bf16.mxu0 0
        %4401 = vmatpush2.bf16.msra.mxu0 0
        %4402 = vmatprep.subr.bf16.mxu0 0
        %4403 = vmatpush2.bf16.msra.mxu0 0
        %4404 = vmatprep.subr.bf16.mxu0 0
        %4405 = vmatpush2.bf16.msra.mxu0 0
        %4406 = vmatprep.mubr.bf16.mxu0 0
        %4407 = vmatmul.mubr.bf16.gmra.mxu0 %v4080
        %v4408 = vpop.f32.mrf.mxu0
        %v4409 = vadd.f32 0.0, %v4408
        %v4410 = vpop.f32.mrf.mxu0
        %v4411 = vpop.f32.mrf.mxu0
        %v4412 = vadd.f32 0.0, %v4411
        %v4413 = vpop.f32.mrf.mxu0
        %4414 = vmatprep.mubr.bf16.mxu0 0
        %4415 = vmatmul.mubr.bf16.gmra.mxu0 %v4081
        %v4416 = vpop.f32.mrf.mxu0
        %v4417 = vadd.f32 0.0, %v4416
        %v4418 = vpop.f32.mrf.mxu0
        %v4419 = vpop.f32.mrf.mxu0
        %v4420 = vadd.f32 0.0, %v4419
        %v4421 = vpop.f32.mrf.mxu0
        %4422 = vdwg.mxu0
        %v4423 = vrot.slane %v4181, 7
        %v4424 = vrot.slane %v4184, 7
        %v4425 = vrot.slane %v4189, 7
        %v4426 = vrot.slane %v4192, 7
        %v4427 = vsel %vm2821, %v4425, %v4426
        %v4428 = vsel %vm2821, %v4424, %v4425
        %v4429 = vsel %vm2821, %v4423, %v4424
        %v4430 = vsel %vm2821, %v4426, %v4423
        %v4431 = vsel %vm836, %v4430, 0.0
        %v4432 = vsel %vm837, %v4429, 0.0
        %v4433 = vsel %vm838, %v4428, 0.0
        %v4434 = vsel %vm839, %v4427, 0.0
        %v4435 = vrot.slane %v4409, 1
        %v4436 = vrot.slane %v4412, 1
        %v4437 = vrot.slane %v4417, 1
        %v4438 = vrot.slane %v4420, 1
        %v4439 = vsel %vm2834, %v4437, %v4438
        %v4440 = vsel %vm2834, %v4436, %v4437
        %v4441 = vsel %vm2834, %v4435, %v4436
        %v4442 = vsel %vm2834, %v4438, %v4435
        %v4443 = vsel %vm840, %v4441, 0.0
        %v4444 = vsel %vm841, %v4440, 0.0
        %v4445 = vsel %vm842, %v4439, 0.0
        %v4446 = vsel %vm843, %v4442, 0.0
        %v4447 = vadd.f32 %v4431, %v4295
        %v4448 = vadd.f32 %v4432, %v4298
        %v4449 = vadd.f32 %v4433, %v4303
        %v4450 = vadd.f32 %v4434, %v4306
        %v4451 = vadd.f32 %v4447, %v4443
        %v4452 = vadd.f32 %v4448, %v4444
        %v4453 = vadd.f32 %v4449, %v4445
        %v4454 = vadd.f32 %v4450, %v4446
        %v4455 = vadd.f32 %v4076, %v4451
        %v4456 = vadd.f32 %v4077, %v4452
        %v4457 = vadd.f32 %v4078, %v4453
        %v4458 = vadd.f32 %v4079, %v4454
        %v4460 = vlaneseq
        %v4461 = vshrl.u32 %v4460, 7
        %v4462 = vsub.s32 0, %v4461
        %v4463 = vrot.slane %v780, %v4462
        %v4465 = vadd.f32 %v4455, %v4463
        %v4466 = vadd.f32 %v4456, %v4463
        %v4467 = vadd.f32 %v4457, %v4463
        %v4468 = vadd.f32 %v4458, %v4463
        %v4469 = vadd.f32 %v2470, %v4465
        %v4470 = vadd.f32 %v2471, %v4466
        %v4471 = vadd.f32 %v2472, %v4467
        %v4472 = vadd.f32 %v2473, %v4468
        %4473 = vadd.xlane.f32.xlu0 %v4469
        %v4474 = vpop.xlane.xlu0 %4473
        %4475 = vadd.xlane.f32.xlu0 %v4470
        %v4476 = vpop.xlane.xlu0 %4475
        %4477 = vadd.xlane.f32.xlu0 %v4471
        %v4478 = vpop.xlane.xlu0 %4477
        %4479 = vadd.xlane.f32.xlu0 %v4472
        %v4480 = vpop.xlane.xlu0 %4479
        %v4481 = vmul.f32 %v4474, %v2417
        %v4482 = vmul.f32 %v4476, %v2417
        %v4483 = vmul.f32 %v4478, %v2417
        %v4484 = vmul.f32 %v4480, %v2417
        %v4485 = vsub.f32 %v4469, %v4481
        %v4486 = vsub.f32 %v4470, %v4482
        %v4487 = vsub.f32 %v4471, %v4483
        %v4488 = vsub.f32 %v4472, %v4484
        %v4489 = vmul.f32 %v4485, %v4485
        %v4490 = vmul.f32 %v4486, %v4486
        %v4491 = vmul.f32 %v4487, %v4487
        %v4492 = vmul.f32 %v4488, %v4488
        %4493 = vadd.xlane.f32.xlu0 %v4489
        %v4494 = vpop.xlane.xlu0 %4493
        %4495 = vadd.xlane.f32.xlu0 %v4490
        %v4496 = vpop.xlane.xlu0 %4495
        %4497 = vadd.xlane.f32.xlu0 %v4491
        %v4498 = vpop.xlane.xlu0 %4497
        %4499 = vadd.xlane.f32.xlu0 %v4492
        %v4500 = vpop.xlane.xlu0 %4499
        %v4501 = vmul.f32 %v4494, %v2417
        %v4502 = vmul.f32 %v4496, %v2417
        %v4503 = vmul.f32 %v4498, %v2417
        %v4504 = vmul.f32 %v4500, %v2417
        %v4505 = vadd.f32 %v4501, 1e-05
        %v4506 = vadd.f32 %v4502, 1e-05
        %v4507 = vadd.f32 %v4503, 1e-05
        %v4508 = vadd.f32 %v4504, 1e-05
        %v4509 = vrsqrt.pop %v4505
        %v4510 = vrsqrt.pop %v4506
        %v4511 = vrsqrt.pop %v4507
        %v4512 = vrsqrt.pop %v4508
        %v4513 = vmul.f32 %v4485, %v4509
        %v4514 = vmul.f32 %v4486, %v4510
        %v4515 = vmul.f32 %v4487, %v4511
        %v4516 = vmul.f32 %v4488, %v4512
        %v4518 = vlaneseq
        %v4519 = vshrl.u32 %v4518, 7
        %v4520 = vsub.s32 0, %v4519
        %v4521 = vrot.slane %v781, %v4520
        %v4523 = vmul.f32 %v4513, %v4521
        %v4524 = vmul.f32 %v4514, %v4521
        %v4525 = vmul.f32 %v4515, %v4521
        %v4526 = vmul.f32 %v4516, %v4521
        %v4528 = vlaneseq
        %v4529 = vshrl.u32 %v4528, 7
        %v4530 = vsub.s32 0, %v4529
        %v4531 = vrot.slane %v782, %v4530
        %v4533 = vadd.f32 %v4523, %v4531
        %v4534 = vadd.f32 %v4524, %v4531
        %v4535 = vadd.f32 %v4525, %v4531
        %v4536 = vadd.f32 %v4526, %v4531
        %4537 = vst [vmem:[%s764] sm:$0xff] %v4533
        %4538 = vst [vmem:[%s764 + $0x8] sm:$0xff] %v4534
        %4539 = vst [vmem:[%s764 + $0x10] sm:$0xff] %v4535
        %4540 = vst [vmem:[%s764 + $0x18] sm:$0xff] %v4536
        %s4541 = sand.u32 %s474, 1
        %s4542 = scalar_lea.sflag [#allocation4], %s4541
        %s4543 = sand.u32 %s474, 1
        %s4544 = smul.addr %s4543, 32
        %s4545 = scalar_lea.vmem [#allocation17], %s4544
        // Predicated region
        $region137: #{ham_forward_pallas.1} parent=99 // pred_check
          %p4546 = pneg %p484
        $region138: #{ham_forward_pallas.1} parent=99 // pred_check_branch
          %4548 = sbr.rel (%p4546) target = $region140
        $region139: #{ham_forward_pallas.1} parent=99 // pred_region
          %s4549 = smul.u32 2, %s41
          %s4551 = ssub.s32 512, 512
          %4552 = vsyncadd %s4542, %s4551
          %s4553 = smul.addr %s4549, 2
          %s4554 = smul.addr %s4553, 128
          %s4555 = scalar_lea.hbm %s20, %s4554
          %s4556 = sshll.u32 %s4545, 4
          %s4557 = int_to_ptr.vmem [resolvable:$true] %s4556
          %4562 = dma.vmem_to_hbm [thread:$0]  %s4557, 512, %s4555, %s4542, 128, 128, 8
        $region140: #{ham_forward_pallas.1} parent=99 // pred_fallthru
          _
      $region100: #{ham_forward_pallas.1} parent=5 // pred_fallthru
        _
      %p4563 = scmp.le.s32.totalorder 2, %s36
      // Predicated region
      $region141: #{ham_forward_pallas.1} parent=5 // pred_check
        %p4564 = pneg %p4563
      $region142: #{ham_forward_pallas.1} parent=5 // pred_check_branch
        %4566 = sbr.rel (%p4564) target = $region144
      $region143: #{ham_forward_pallas.1} parent=5 // pred_region
        %s4567 = ssub.s32 %s36, 2
        // Predicated region
        $region145: #{ham_forward_pallas.1} parent=143 // pred_check
          %p4568 = pneg %p490
        $region146: #{ham_forward_pallas.1} parent=143 // pred_check_branch
          %4570 = sbr.rel (%p4568) target = $region148
        $region147: #{ham_forward_pallas.1} parent=143 // pred_region
          %s4571 = sand.u32 %s475, 1
          %s4572 = scalar_lea.sflag [#allocation4], %s4571
          %s4573 = sand.u32 %s475, 1
          %s4574 = smul.addr %s4573, 32
          %s4575 = scalar_lea.vmem [#allocation17], %s4574
          %4576 = dma.done %s4572, 512
        $region148: #{ham_forward_pallas.1} parent=143 // pred_fallthru
          _
      $region144: #{ham_forward_pallas.1} parent=5 // pred_fallthru
        _
    $region6: #{ham_forward_pallas.1} parent=1 // loop_footer
      %s40 = sadd.s32 1, %s36
    $region7: #{ham_forward_pallas.1} parent=1 // loop_footer_branch
      %35 = sbr.rel target = $region3
    $region8: #{ham_forward_pallas.1} parent=1 // loop_exit
      _
    %4577 = vsyncpa [#allocation3], 1
    %s4578 = scalar_lea.sflag [#allocation3], 1
    %4579 = vsyncpa %s4578, 1
    %4580 = vsyncpa [#allocation6], 1
    %4581 = vsyncpa [#allocation9], 1
    %4582 = vsyncpa [#allocation12], 1
    %4583 = vsyncpa [#allocation15], 1
    %4584 = vsyncpa [#allocation4], 1
    %s4585 = scalar_lea.sflag [#allocation4], 1
    %4586 = vsyncpa %s4585, 1

</llo_original>
